<compile_context>
chip_gen: v6e
topology: v6e:2x2x1
jax: 0.10.0
libtpu: 0.0.40
codegen_flags: <defaults>
</compile_context>

<pallas_src>
import numpy as np
import jax
import jax.numpy as jnp
from jax import lax
from jax.experimental import pallas as pl
from jax.experimental.pallas import tpu as pltpu

# ---------------- configuration ----------------------------------------------
B = 2                            # batch -> grid axis ("parallel" for v7x 2 TCs)
H, W = 16, 16
HW = H * W                       # 256 -> lane dim for full-resolution layers
CIN_X = 6                        # input channels; +1 map channel -> 7
CIN = CIN_X + 1
CIN_P = 8                        # padded so the hom matmul K dim is 8-aligned
C_HOM = 10
C_E1 = 80
C_E12 = 35
C_E2 = 2
C_HOM_P = 16                     # channel counts padded to multiples of 8
C_E12_P = 40
C_E2_P = 8
Hh, Wh = H // 2, W // 2
HWP = Hh * Wh                    # 64 -> lane dim after the 2x2 maxpool
FC1_IN = C_E2 * HWP              # 128  (original module: 76500)
FC1_OUT = 150
FC2_OUT = 8
LRELU = 0.01
EPS = 1e-5
BF16 = jnp.bfloat16
F32 = jnp.float32


# ---------------- prepare_map (scaled-down analog of the 340x450 sweep) ------
def prepare_map(h, w):
    x = y = 0
    arr = np.zeros((h, w), dtype=np.float64)
    counter = 1
    for _ in range(h + w):                 # original: range(790) = 340 + 450
        tmp_x, tmp_y = x, y
        while tmp_x >= 0 and tmp_y < h:
            arr[tmp_y][tmp_x] = counter / 700.0
            counter += 1
            tmp_x -= 1
            tmp_y += 1
        if x < w - 1:
            x += 1
        else:
            y += 1
    return arr.astype(np.float32)


def make_pool_select():
    """(HW, HWP) 0/1 matrix selecting the 2x2-window anchors (even row/col)."""
    s = np.zeros((HW, HWP), dtype=np.float32)
    for i in range(Hh):
        for j in range(Wh):
            s[(2 * i) * W + 2 * j, i * Wh + j] = 1.0
    return s


def make_border_masks(h, w):
    """(9, h*w) 0/1 masks: tap (dy,dx) valid at destination (r,c) iff the
    source (r+dy, c+dx) is in bounds (zero-padded 'same' 3x3 conv)."""
    m = np.zeros((9, h * w), dtype=np.float32)
    t = 0
    for dy in (-1, 0, 1):
        for dx in (-1, 0, 1):
            for r in range(h):
                if 0 <= r + dy < h:
                    for c in range(w):
                        if 0 <= c + dx < w:
                            m[t, r * w + c] = 1.0
            t += 1
    return m


# ---------------- in-kernel helpers -------------------------------------------
def _lrelu(y):
    # LeakyReLU(0.01) == max(y, 0.01*y): 2 VPU ops, no compare+select.
    return jnp.maximum(y, LRELU * y)


def _conv3x3_taps(h_f32, w_ref, shift_ref, mask_ref, w_sp):
    """3x3 'same' conv as 9 accumulating per-tap matmuls.

    h_f32:     (cin_pad, h*w) f32 activations, flat index p = r*w_sp + c.
    w_ref:     (9, cout_pad, cin_pad) bf16 taps, tap order (ky, kx).
    shift_ref: (cout_pad, 1) f32 folded BN shift (+conv bias); pads are zero.
    mask_ref:  (9, h*w) bf16 0/1 border masks (precomputed host-side).
    Returns (cout_pad, h*w) f32 pre-activation.
    """
    hb = h_f32.astype(BF16)                        # single bf16 cast per layer
    masks = mask_ref[...]                          # (9, hw) bf16
    cout = w_ref.shape[1]
    hw = hb.shape[1]
    acc = jnp.zeros((cout, hw), dtype=F32)
    t = 0
    for dy in (-1, 0, 1):
        for dx in (-1, 0, 1):
            off = dy * w_sp + dx
            shifted = hb if off == 0 else jnp.roll(hb, -off, axis=1)
            tap = shifted * masks[t:t + 1, :]      # zero out-of-bounds taps
            acc = acc + jnp.dot(w_ref[t], tap, preferred_element_type=F32)
            t += 1
    return acc + shift_ref[...]


# ---------------- the single fused kernel -------------------------------------
def fused_forward_kernel(x_ref, homw_ref, homb_ref,
                         w1_ref, s1_ref, w12_ref, s12_ref,
                         m256_ref, m64_ref, sel_ref,
                         w2_ref, s2_ref,
                         fc1w_ref, fc1b_ref, fc2w_ref, fc2b_ref,
                         o_ref):
    # hom_conv: 1x1, 7(+1 zero pad) -> 10 (padded to 16); lanes = HW = 256
    x = x_ref[0].astype(BF16)                                       # (8, 256)
    h = jnp.dot(homw_ref[...], x, preferred_element_type=F32)       # (16, 256)
    h = h + homb_ref[...]

    # encode1: 3x3, 10 -> 80 (+ folded BN + LeakyReLU), 9 per-tap matmuls
    h = _lrelu(_conv3x3_taps(h, w1_ref, s1_ref, m256_ref, W))       # (80, 256)

    # encode1_2: 3x3, 80 -> 35 (padded to 40)
    h = _lrelu(_conv3x3_taps(h, w12_ref, s12_ref, m256_ref, W))     # (40, 256)

    # MaxPool2d(2): 2x2 window max via lane rolls, then compact the 64 window
    # anchors (even row, even col) with a 0/1 selection matmul on the idle MXU.
    # Roll wrap-around is harmless: sel only reads even-row/even-col anchors.
    hmax = jnp.maximum(h, jnp.roll(h, -1, axis=1))                  # cols p, p+1
    hmax = jnp.maximum(hmax, jnp.roll(hmax, -W, axis=1))            # rows r, r+1
    pooled = jnp.dot(hmax.astype(BF16), sel_ref[...],
                     preferred_element_type=F32)                    # (40, 64)

    # encode2: 3x3, 35 -> 2 (padded to 8) on the 8x8 grid
    h = _lrelu(_conv3x3_taps(pooled, w2_ref, s2_ref, m64_ref, Wh))  # (8, 64)

    # flatten (NCHW order -> index c*64 + q), fc1 + LeakyReLU + fc2.
    # fc1 is split over the two real channels to avoid a (2,64)->(1,128) relayout.
    z = (jnp.dot(h[0:1, :].astype(BF16), fc1w_ref[0:HWP, :],
                 preferred_element_type=F32) +
         jnp.dot(h[1:2, :].astype(BF16), fc1w_ref[HWP:2 * HWP, :],
                 preferred_element_type=F32) + fc1b_ref[...])       # (1, 150)
    z = _lrelu(z).astype(BF16)
    out = jnp.dot(z, fc2w_ref[...], preferred_element_type=F32) + fc2b_ref[...]
    o_ref[...] = out.reshape(1, 1, FC2_OUT)


# ---------------- wrapper ------------------------------------------------------
def _const_spec(a):
    nd = a.ndim
    return pl.BlockSpec(a.shape, lambda i, nd=nd: (0,) * nd)


@jax.jit
def forward_pallas(x_nchw, conv_map, kp):
    b = x_nchw.shape[0]
    # Input prep: map channel first, then the 6 data channels, then 1 zero pad.
    m = jnp.broadcast_to(conv_map[None, None], (b, 1, H, W))
    x = jnp.concatenate([m, x_nchw], axis=1)                       # (B, 7, H, W)
    x = jnp.pad(x, ((0, 0), (0, CIN_P - CIN), (0, 0), (0, 0)))     # (B, 8, H, W)
    x = x.reshape(b, CIN_P, HW)

    weights = (kp["hom_w"], kp["hom_b"],
               kp["e1_w"], kp["e1_shift"], kp["e12_w"], kp["e12_shift"],
               kp["m256"], kp["m64"], kp["sel"],
               kp["e2_w"], kp["e2_shift"],
               kp["fc1_w"], kp["fc1_b"], kp["fc2_w"], kp["fc2_b"])

    out = pl.pallas_call(
        fused_forward_kernel,
        grid=(b,),
        in_specs=[pl.BlockSpec((1, CIN_P, HW), lambda i: (i, 0, 0))]
                 + [_const_spec(a) for a in weights],
        out_specs=pl.BlockSpec((1, 1, FC2_OUT), lambda i: (i, 0, 0)),
        out_shape=jax.ShapeDtypeStruct((b, 1, FC2_OUT), F32),
        compiler_params=pltpu.CompilerParams(
            dimension_semantics=("parallel",)),
    )(x, *weights)
    return out.reshape(b, FC2_OUT)


# ---------------- parameter construction (deterministic) ----------------------
def init_params(key):
    ks = jax.random.split(key, 32)
    it = iter(range(32))

    def nrm(shape, scale=0.1):
        return (scale * jax.random.normal(ks[next(it)], shape)).astype(F32)

    def bn(c):
        gamma = (1.0 + 0.1 * jax.random.normal(ks[next(it)], (c,))).astype(F32)
        beta = nrm((c,))
        mean = nrm((c,))
        var = (0.5 + jnp.abs(jax.random.normal(ks[next(it)], (c,)))).astype(F32)
        return gamma, beta, mean, var

    p = {}
    p["hom_w"] = nrm((CIN, C_HOM))            # (in, out) for the 1x1 conv
    p["hom_b"] = nrm((C_HOM,))
    p["e1_w"] = nrm((3, 3, C_HOM, C_E1))      # HWIO
    p["e1_b"] = nrm((C_E1,))
    p["bn1"] = bn(C_E1)
    p["e12_w"] = nrm((3, 3, C_E1, C_E12))
    p["e12_b"] = nrm((C_E12,))
    p["bn12"] = bn(C_E12)
    p["e2_w"] = nrm((3, 3, C_E12, C_E2))
    p["e2_b"] = nrm((C_E2,))
    p["bn2"] = bn(C_E2)
    p["fc1_w"] = nrm((FC1_IN, FC1_OUT))
    p["fc1_b"] = nrm((FC1_OUT,))
    p["fc2_w"] = nrm((FC1_OUT, FC2_OUT))
    p["fc2_b"] = nrm((FC2_OUT,))
    return p


def prep_params(p):
    """Fold eval-mode BN into the conv weights, cast matmul operands to bf16,
    and build (a) per-tap (9, Cout_pad, Cin_pad) kernel weights, (b) OIHW ref
    weights.  All padded rows / K columns / shift entries are exactly zero."""
    def fold(conv_b, bn):
        gamma, beta, mean, var = bn
        scale = gamma / jnp.sqrt(var + EPS)
        shift = (conv_b - mean) * scale + beta
        return scale, shift

    def folded_oihw(w_hwio, scale):
        w = jnp.transpose(w_hwio, (3, 2, 0, 1)) * scale[:, None, None, None]
        return w.astype(BF16)                                    # (co, ci, 3, 3)

    s1, t1 = fold(p["e1_b"], p["bn1"])
    s12, t12 = fold(p["e12_b"], p["bn12"])
    s2, t2 = fold(p["e2_b"], p["bn2"])

    hom_oi = jnp.transpose(p["hom_w"]).astype(BF16)              # (10, 7)
    w1_oihw = folded_oihw(p["e1_w"], s1)                         # (80, 10, 3, 3)
    w12_oihw = folded_oihw(p["e12_w"], s12)                      # (35, 80, 3, 3)
    w2_oihw = folded_oihw(p["e2_w"], s2)                         # (2, 35, 3, 3)
    fc1_w = p["fc1_w"].astype(BF16)
    fc2_w = p["fc2_w"].astype(BF16)

    ref = {"hom_w": hom_oi, "hom_b": p["hom_b"],
           "e1_w": w1_oihw, "e1_shift": t1,
           "e12_w": w12_oihw, "e12_shift": t12,
           "e2_w": w2_oihw, "e2_shift": t2,
           "fc1_w": fc1_w, "fc1_b": p["fc1_b"],
           "fc2_w": fc2_w, "fc2_b": p["fc2_b"]}

    def to_tap_layout(w_oihw, ci_pad, co_pad):
        # (co, ci, 3, 3) -> (9, co_pad, ci_pad), tap order (ky, kx), zero pads
        co, ci = w_oihw.shape[:2]
        w = jnp.transpose(w_oihw, (2, 3, 0, 1))                  # (ky, kx, co, ci)
        w = jnp.pad(w, ((0, 0), (0, 0), (0, co_pad - co), (0, ci_pad - ci)))
        return w.reshape(9, co_pad, ci_pad)

    def pad_col(v, n):
        # Padded shift entries MUST stay exactly zero (padded output rows stay
        # zero through lrelu and hit only zero weight columns downstream).
        return jnp.pad(v, (0, n - v.shape[0])).reshape(n, 1)

    kern = {
        "hom_w": jnp.pad(hom_oi, ((0, C_HOM_P - C_HOM), (0, CIN_P - CIN))),  # (16, 8)
        "hom_b": pad_col(p["hom_b"], C_HOM_P),
        "e1_w": to_tap_layout(w1_oihw, C_HOM_P, C_E1),           # (9, 80, 16)
        "e1_shift": t1.reshape(C_E1, 1),
        "e12_w": to_tap_layout(w12_oihw, C_E1, C_E12_P),         # (9, 40, 80)
        "e12_shift": pad_col(t12, C_E12_P),
        "m256": jnp.asarray(make_border_masks(H, W), dtype=BF16),    # (9, 256)
        "m64": jnp.asarray(make_border_masks(Hh, Wh), dtype=BF16),   # (9, 64)
        "sel": jnp.asarray(make_pool_select(), dtype=BF16),          # (256, 64)
        "e2_w": to_tap_layout(w2_oihw, C_E12_P, C_E2_P),         # (9, 8, 40)
        "e2_shift": pad_col(t2, C_E2_P),
        "fc1_w": fc1_w, "fc1_b": p["fc1_b"].reshape(1, FC1_OUT),
        "fc2_w": fc2_w, "fc2_b": p["fc2_b"].reshape(1, FC2_OUT),
    }
    return kern, ref


# ---------------- pure-JAX NCHW reference (same bf16 operands) -----------------
@jax.jit
def forward_ref(x_nchw, conv_map, rp):
    b = x_nchw.shape[0]
    m = jnp.broadcast_to(conv_map[None, None], (b, 1, H, W))
    x = jnp.concatenate([m, x_nchw], axis=1)                     # (B, 7, H, W)

    def conv(a, w_oihw, pad):
        return lax.conv_general_dilated(
            a.astype(BF16), w_oihw, (1, 1), ((pad, pad), (pad, pad)),
            dimension_numbers=("NCHW", "OIHW", "NCHW"),
            preferred_element_type=F32)

    def lrelu(y):
        return jnp.maximum(y, LRELU * y)

    h = conv(x, rp["hom_w"].reshape(C_HOM, CIN, 1, 1), 0) \
        + rp["hom_b"].reshape(1, C_HOM, 1, 1)
    h = lrelu(conv(h, rp["e1_w"], 1) + rp["e1_shift"].reshape(1, C_E1, 1, 1))
    h = lrelu(conv(h, rp["e12_w"], 1) + rp["e12_shift"].reshape(1, C_E12, 1, 1))
    h = lax.reduce_window(h, -jnp.inf, lax.max, (1, 1, 2, 2), (1, 1, 2, 2), "VALID")
    h = lrelu(conv(h, rp["e2_w"], 1) + rp["e2_shift"].reshape(1, C_E2, 1, 1))
    flat = h.reshape(b, FC1_IN).astype(BF16)
    z = jnp.dot(flat, rp["fc1_w"], preferred_element_type=F32) + rp["fc1_b"]
    z = lrelu(z).astype(BF16)
    return jnp.dot(z, rp["fc2_w"], preferred_element_type=F32) + rp["fc2_b"]


# ---------------- main ---------------------------------------------------------
if __name__ == "__main__":
    key = jax.random.PRNGKey(0)
    k_x, k_p = jax.random.split(key)

    x_nchw = jax.random.normal(k_x, (B, CIN_X, H, W), dtype=F32)
    conv_map = jnp.asarray(prepare_map(H, W))
    kern_params, ref_params = prep_params(init_params(k_p))

    out = jax.block_until_ready(forward_pallas(x_nchw, conv_map, kern_params))
    ref = jax.block_until_ready(forward_ref(x_nchw, conv_map, ref_params))

    # Both sides use identical bf16 operands with f32 accumulation; differences
    # come only from f32 accumulation-order roundoff (per-tap partial sums vs.
    # lax.conv's internal order) plus rare bf16 rounding-boundary flips on
    # intermediate activations.  Tolerance stays well below one bf16 ulp of the
    # output magnitude.
    np.testing.assert_allclose(np.asarray(out), np.asarray(ref),
                               rtol=5e-3, atol=5e-3)
    assert out.shape == (B, FC2_OUT)
    print("KERNEL_OK")
</pallas_src>

<mosaic_0001>
module attributes {stable_mosaic.version = 11 : i64} {
  func.func @fused_forward_kernel(%arg0: i32, %arg1: memref<1x8x256xf32, #tpu.memory_space<vmem>>, %arg2: memref<16x8xbf16, #tpu.memory_space<vmem>>, %arg3: memref<16x1xf32, #tpu.memory_space<vmem>>, %arg4: memref<9x80x16xbf16, #tpu.memory_space<vmem>>, %arg5: memref<80x1xf32, #tpu.memory_space<vmem>>, %arg6: memref<9x40x80xbf16, #tpu.memory_space<vmem>>, %arg7: memref<40x1xf32, #tpu.memory_space<vmem>>, %arg8: memref<9x256xbf16, #tpu.memory_space<vmem>>, %arg9: memref<9x64xbf16, #tpu.memory_space<vmem>>, %arg10: memref<256x64xbf16, #tpu.memory_space<vmem>>, %arg11: memref<9x8x40xbf16, #tpu.memory_space<vmem>>, %arg12: memref<8x1xf32, #tpu.memory_space<vmem>>, %arg13: memref<128x150xbf16, #tpu.memory_space<vmem>>, %arg14: memref<1x150xf32, #tpu.memory_space<vmem>>, %arg15: memref<150x8xbf16, #tpu.memory_space<vmem>>, %arg16: memref<1x8xf32, #tpu.memory_space<vmem>>, %arg17: memref<1x1x8xf32, #tpu.memory_space<vmem>>) attributes {dimension_semantics = [#tpu.dimension_semantics<parallel>], iteration_bounds = array<i64: 2>, scalar_prefetch = 0 : i64, scratch_operands = 0 : i64, tpu.core_type = #tpu.core_type<tc>, window_params = [{transform_indices = @transform_0, window_bounds = array<i64: 1, 8, 256>}, {pipeline_mode = #tpu.pipeline_mode<synchronous>, transform_indices = @transform_1, window_bounds = array<i64: 16, 8>}, {pipeline_mode = #tpu.pipeline_mode<synchronous>, transform_indices = @transform_2, window_bounds = array<i64: 16, 1>}, {pipeline_mode = #tpu.pipeline_mode<synchronous>, transform_indices = @transform_3, window_bounds = array<i64: 9, 80, 16>}, {pipeline_mode = #tpu.pipeline_mode<synchronous>, transform_indices = @transform_4, window_bounds = array<i64: 80, 1>}, {pipeline_mode = #tpu.pipeline_mode<synchronous>, transform_indices = @transform_5, window_bounds = array<i64: 9, 40, 80>}, {pipeline_mode = #tpu.pipeline_mode<synchronous>, transform_indices = @transform_6, window_bounds = array<i64: 40, 1>}, {pipeline_mode = #tpu.pipeline_mode<synchronous>, transform_indices = @transform_7, window_bounds = array<i64: 9, 256>}, {pipeline_mode = #tpu.pipeline_mode<synchronous>, transform_indices = @transform_8, window_bounds = array<i64: 9, 64>}, {pipeline_mode = #tpu.pipeline_mode<synchronous>, transform_indices = @transform_9, window_bounds = array<i64: 256, 64>}, {pipeline_mode = #tpu.pipeline_mode<synchronous>, transform_indices = @transform_10, window_bounds = array<i64: 9, 8, 40>}, {pipeline_mode = #tpu.pipeline_mode<synchronous>, transform_indices = @transform_11, window_bounds = array<i64: 8, 1>}, {pipeline_mode = #tpu.pipeline_mode<synchronous>, transform_indices = @transform_12, window_bounds = array<i64: 128, 150>}, {pipeline_mode = #tpu.pipeline_mode<synchronous>, transform_indices = @transform_13, window_bounds = array<i64: 1, 150>}, {pipeline_mode = #tpu.pipeline_mode<synchronous>, transform_indices = @transform_14, window_bounds = array<i64: 150, 8>}, {pipeline_mode = #tpu.pipeline_mode<synchronous>, transform_indices = @transform_15, window_bounds = array<i64: 1, 8>}, {transform_indices = @transform_16, window_bounds = array<i64: 1, 1, 8>}]} {
    %c0 = arith.constant 0 : index
    %c0_0 = arith.constant 0 : index
    %c0_1 = arith.constant 0 : index
    %0 = vector.load %arg1[%c0, %c0_0, %c0_1] : memref<1x8x256xf32, #tpu.memory_space<vmem>>, vector<1x8x256xf32>
    %1 = vector.shape_cast %0 : vector<1x8x256xf32> to vector<8x256xf32>
    %2 = arith.truncf %1 : vector<8x256xf32> to vector<8x256xbf16>
    %c0_2 = arith.constant 0 : index
    %c0_3 = arith.constant 0 : index
    %3 = vector.load %arg2[%c0_2, %c0_3] : memref<16x8xbf16, #tpu.memory_space<vmem>>, vector<16x8xbf16>
    %cst = arith.constant dense<0.000000e+00> : vector<16x256xf32>
    %4 = tpu.matmul %3, %2, %cst {dimension_numbers = #tpu.dot_dimension_numbers<[1], [0], [0], [1], [0, 0, 1, 1], [], []>} : vector<16x8xbf16>, vector<8x256xbf16>, vector<16x256xf32> -> vector<16x256xf32>
    %c0_4 = arith.constant 0 : index
    %c0_5 = arith.constant 0 : index
    %5 = vector.load %arg3[%c0_4, %c0_5] : memref<16x1xf32, #tpu.memory_space<vmem>>, vector<16x1xf32>
    %6 = vector.broadcast %5 : vector<16x1xf32> to vector<16x256xf32>
    %7 = arith.addf %4, %6 : vector<16x256xf32>
    %8 = arith.truncf %7 : vector<16x256xf32> to vector<16x256xbf16>
    %c0_6 = arith.constant 0 : index
    %c0_7 = arith.constant 0 : index
    %9 = vector.load %arg8[%c0_6, %c0_7] : memref<9x256xbf16, #tpu.memory_space<vmem>>, vector<9x256xbf16>
    %cst_8 = arith.constant 0.000000e+00 : f32
    %10 = vector.broadcast %cst_8 : f32 to vector<80x256xf32>
    %11 = vector.extract_strided_slice %8 {offsets = [0, 239], sizes = [16, 17], strides = [1, 1]} : vector<16x256xbf16> to vector<16x17xbf16>
    %12 = vector.extract_strided_slice %8 {offsets = [0, 0], sizes = [16, 239], strides = [1, 1]} : vector<16x256xbf16> to vector<16x239xbf16>
    %13 = tpu.concatenate %11, %12 in 1 : vector<16x17xbf16>, vector<16x239xbf16> -> vector<16x256xbf16>
    %14 = vector.extract_strided_slice %9 {offsets = [0, 0], sizes = [1, 256], strides = [1, 1]} : vector<9x256xbf16> to vector<1x256xbf16>
    %15 = vector.broadcast %14 : vector<1x256xbf16> to vector<16x256xbf16>
    %16 = arith.mulf %13, %15 : vector<16x256xbf16>
    %c0_9 = arith.constant 0 : index
    %c0_10 = arith.constant 0 : index
    %c0_11 = arith.constant 0 : index
    %17 = vector.load %arg4[%c0_9, %c0_10, %c0_11] : memref<9x80x16xbf16, #tpu.memory_space<vmem>>, vector<1x80x16xbf16>
    %18 = vector.shape_cast %17 : vector<1x80x16xbf16> to vector<80x16xbf16>
    %cst_12 = arith.constant dense<0.000000e+00> : vector<80x256xf32>
    %19 = tpu.matmul %18, %16, %cst_12 {dimension_numbers = #tpu.dot_dimension_numbers<[1], [0], [0], [1], [0, 0, 1, 1], [], []>} : vector<80x16xbf16>, vector<16x256xbf16>, vector<80x256xf32> -> vector<80x256xf32>
    %20 = arith.addf %10, %19 : vector<80x256xf32>
    %21 = vector.extract_strided_slice %8 {offsets = [0, 240], sizes = [16, 16], strides = [1, 1]} : vector<16x256xbf16> to vector<16x16xbf16>
    %22 = vector.extract_strided_slice %8 {offsets = [0, 0], sizes = [16, 240], strides = [1, 1]} : vector<16x256xbf16> to vector<16x240xbf16>
    %23 = tpu.concatenate %21, %22 in 1 : vector<16x16xbf16>, vector<16x240xbf16> -> vector<16x256xbf16>
    %24 = vector.extract_strided_slice %9 {offsets = [1, 0], sizes = [1, 256], strides = [1, 1]} : vector<9x256xbf16> to vector<1x256xbf16>
    %25 = vector.broadcast %24 : vector<1x256xbf16> to vector<16x256xbf16>
    %26 = arith.mulf %23, %25 : vector<16x256xbf16>
    %c1 = arith.constant 1 : index
    %c0_13 = arith.constant 0 : index
    %c0_14 = arith.constant 0 : index
    %27 = vector.load %arg4[%c1, %c0_13, %c0_14] : memref<9x80x16xbf16, #tpu.memory_space<vmem>>, vector<1x80x16xbf16>
    %28 = vector.shape_cast %27 : vector<1x80x16xbf16> to vector<80x16xbf16>
    %cst_15 = arith.constant dense<0.000000e+00> : vector<80x256xf32>
    %29 = tpu.matmul %28, %26, %cst_15 {dimension_numbers = #tpu.dot_dimension_numbers<[1], [0], [0], [1], [0, 0, 1, 1], [], []>} : vector<80x16xbf16>, vector<16x256xbf16>, vector<80x256xf32> -> vector<80x256xf32>
    %30 = arith.addf %20, %29 : vector<80x256xf32>
    %31 = vector.extract_strided_slice %8 {offsets = [0, 241], sizes = [16, 15], strides = [1, 1]} : vector<16x256xbf16> to vector<16x15xbf16>
    %32 = vector.extract_strided_slice %8 {offsets = [0, 0], sizes = [16, 241], strides = [1, 1]} : vector<16x256xbf16> to vector<16x241xbf16>
    %33 = tpu.concatenate %31, %32 in 1 : vector<16x15xbf16>, vector<16x241xbf16> -> vector<16x256xbf16>
    %34 = vector.extract_strided_slice %9 {offsets = [2, 0], sizes = [1, 256], strides = [1, 1]} : vector<9x256xbf16> to vector<1x256xbf16>
    %35 = vector.broadcast %34 : vector<1x256xbf16> to vector<16x256xbf16>
    %36 = arith.mulf %33, %35 : vector<16x256xbf16>
    %c2 = arith.constant 2 : index
    %c0_16 = arith.constant 0 : index
    %c0_17 = arith.constant 0 : index
    %37 = vector.load %arg4[%c2, %c0_16, %c0_17] : memref<9x80x16xbf16, #tpu.memory_space<vmem>>, vector<1x80x16xbf16>
    %38 = vector.shape_cast %37 : vector<1x80x16xbf16> to vector<80x16xbf16>
    %cst_18 = arith.constant dense<0.000000e+00> : vector<80x256xf32>
    %39 = tpu.matmul %38, %36, %cst_18 {dimension_numbers = #tpu.dot_dimension_numbers<[1], [0], [0], [1], [0, 0, 1, 1], [], []>} : vector<80x16xbf16>, vector<16x256xbf16>, vector<80x256xf32> -> vector<80x256xf32>
    %40 = arith.addf %30, %39 : vector<80x256xf32>
    %41 = vector.extract_strided_slice %8 {offsets = [0, 255], sizes = [16, 1], strides = [1, 1]} : vector<16x256xbf16> to vector<16x1xbf16>
    %42 = vector.extract_strided_slice %8 {offsets = [0, 0], sizes = [16, 255], strides = [1, 1]} : vector<16x256xbf16> to vector<16x255xbf16>
    %43 = tpu.concatenate %41, %42 in 1 : vector<16x1xbf16>, vector<16x255xbf16> -> vector<16x256xbf16>
    %44 = vector.extract_strided_slice %9 {offsets = [3, 0], sizes = [1, 256], strides = [1, 1]} : vector<9x256xbf16> to vector<1x256xbf16>
    %45 = vector.broadcast %44 : vector<1x256xbf16> to vector<16x256xbf16>
    %46 = arith.mulf %43, %45 : vector<16x256xbf16>
    %c3 = arith.constant 3 : index
    %c0_19 = arith.constant 0 : index
    %c0_20 = arith.constant 0 : index
    %47 = vector.load %arg4[%c3, %c0_19, %c0_20] : memref<9x80x16xbf16, #tpu.memory_space<vmem>>, vector<1x80x16xbf16>
    %48 = vector.shape_cast %47 : vector<1x80x16xbf16> to vector<80x16xbf16>
    %cst_21 = arith.constant dense<0.000000e+00> : vector<80x256xf32>
    %49 = tpu.matmul %48, %46, %cst_21 {dimension_numbers = #tpu.dot_dimension_numbers<[1], [0], [0], [1], [0, 0, 1, 1], [], []>} : vector<80x16xbf16>, vector<16x256xbf16>, vector<80x256xf32> -> vector<80x256xf32>
    %50 = arith.addf %40, %49 : vector<80x256xf32>
    %51 = vector.extract_strided_slice %9 {offsets = [4, 0], sizes = [1, 256], strides = [1, 1]} : vector<9x256xbf16> to vector<1x256xbf16>
    %52 = vector.broadcast %51 : vector<1x256xbf16> to vector<16x256xbf16>
    %53 = arith.mulf %8, %52 : vector<16x256xbf16>
    %c4 = arith.constant 4 : index
    %c0_22 = arith.constant 0 : index
    %c0_23 = arith.constant 0 : index
    %54 = vector.load %arg4[%c4, %c0_22, %c0_23] : memref<9x80x16xbf16, #tpu.memory_space<vmem>>, vector<1x80x16xbf16>
    %55 = vector.shape_cast %54 : vector<1x80x16xbf16> to vector<80x16xbf16>
    %cst_24 = arith.constant dense<0.000000e+00> : vector<80x256xf32>
    %56 = tpu.matmul %55, %53, %cst_24 {dimension_numbers = #tpu.dot_dimension_numbers<[1], [0], [0], [1], [0, 0, 1, 1], [], []>} : vector<80x16xbf16>, vector<16x256xbf16>, vector<80x256xf32> -> vector<80x256xf32>
    %57 = arith.addf %50, %56 : vector<80x256xf32>
    %58 = vector.extract_strided_slice %8 {offsets = [0, 1], sizes = [16, 255], strides = [1, 1]} : vector<16x256xbf16> to vector<16x255xbf16>
    %59 = vector.extract_strided_slice %8 {offsets = [0, 0], sizes = [16, 1], strides = [1, 1]} : vector<16x256xbf16> to vector<16x1xbf16>
    %60 = tpu.concatenate %58, %59 in 1 : vector<16x255xbf16>, vector<16x1xbf16> -> vector<16x256xbf16>
    %61 = vector.extract_strided_slice %9 {offsets = [5, 0], sizes = [1, 256], strides = [1, 1]} : vector<9x256xbf16> to vector<1x256xbf16>
    %62 = vector.broadcast %61 : vector<1x256xbf16> to vector<16x256xbf16>
    %63 = arith.mulf %60, %62 : vector<16x256xbf16>
    %c5 = arith.constant 5 : index
    %c0_25 = arith.constant 0 : index
    %c0_26 = arith.constant 0 : index
    %64 = vector.load %arg4[%c5, %c0_25, %c0_26] : memref<9x80x16xbf16, #tpu.memory_space<vmem>>, vector<1x80x16xbf16>
    %65 = vector.shape_cast %64 : vector<1x80x16xbf16> to vector<80x16xbf16>
    %cst_27 = arith.constant dense<0.000000e+00> : vector<80x256xf32>
    %66 = tpu.matmul %65, %63, %cst_27 {dimension_numbers = #tpu.dot_dimension_numbers<[1], [0], [0], [1], [0, 0, 1, 1], [], []>} : vector<80x16xbf16>, vector<16x256xbf16>, vector<80x256xf32> -> vector<80x256xf32>
    %67 = arith.addf %57, %66 : vector<80x256xf32>
    %68 = vector.extract_strided_slice %8 {offsets = [0, 15], sizes = [16, 241], strides = [1, 1]} : vector<16x256xbf16> to vector<16x241xbf16>
    %69 = vector.extract_strided_slice %8 {offsets = [0, 0], sizes = [16, 15], strides = [1, 1]} : vector<16x256xbf16> to vector<16x15xbf16>
    %70 = tpu.concatenate %68, %69 in 1 : vector<16x241xbf16>, vector<16x15xbf16> -> vector<16x256xbf16>
    %71 = vector.extract_strided_slice %9 {offsets = [6, 0], sizes = [1, 256], strides = [1, 1]} : vector<9x256xbf16> to vector<1x256xbf16>
    %72 = vector.broadcast %71 : vector<1x256xbf16> to vector<16x256xbf16>
    %73 = arith.mulf %70, %72 : vector<16x256xbf16>
    %c6 = arith.constant 6 : index
    %c0_28 = arith.constant 0 : index
    %c0_29 = arith.constant 0 : index
    %74 = vector.load %arg4[%c6, %c0_28, %c0_29] : memref<9x80x16xbf16, #tpu.memory_space<vmem>>, vector<1x80x16xbf16>
    %75 = vector.shape_cast %74 : vector<1x80x16xbf16> to vector<80x16xbf16>
    %cst_30 = arith.constant dense<0.000000e+00> : vector<80x256xf32>
    %76 = tpu.matmul %75, %73, %cst_30 {dimension_numbers = #tpu.dot_dimension_numbers<[1], [0], [0], [1], [0, 0, 1, 1], [], []>} : vector<80x16xbf16>, vector<16x256xbf16>, vector<80x256xf32> -> vector<80x256xf32>
    %77 = arith.addf %67, %76 : vector<80x256xf32>
    %78 = vector.extract_strided_slice %8 {offsets = [0, 16], sizes = [16, 240], strides = [1, 1]} : vector<16x256xbf16> to vector<16x240xbf16>
    %79 = vector.extract_strided_slice %8 {offsets = [0, 0], sizes = [16, 16], strides = [1, 1]} : vector<16x256xbf16> to vector<16x16xbf16>
    %80 = tpu.concatenate %78, %79 in 1 : vector<16x240xbf16>, vector<16x16xbf16> -> vector<16x256xbf16>
    %81 = vector.extract_strided_slice %9 {offsets = [7, 0], sizes = [1, 256], strides = [1, 1]} : vector<9x256xbf16> to vector<1x256xbf16>
    %82 = vector.broadcast %81 : vector<1x256xbf16> to vector<16x256xbf16>
    %83 = arith.mulf %80, %82 : vector<16x256xbf16>
    %c7 = arith.constant 7 : index
    %c0_31 = arith.constant 0 : index
    %c0_32 = arith.constant 0 : index
    %84 = vector.load %arg4[%c7, %c0_31, %c0_32] : memref<9x80x16xbf16, #tpu.memory_space<vmem>>, vector<1x80x16xbf16>
    %85 = vector.shape_cast %84 : vector<1x80x16xbf16> to vector<80x16xbf16>
    %cst_33 = arith.constant dense<0.000000e+00> : vector<80x256xf32>
    %86 = tpu.matmul %85, %83, %cst_33 {dimension_numbers = #tpu.dot_dimension_numbers<[1], [0], [0], [1], [0, 0, 1, 1], [], []>} : vector<80x16xbf16>, vector<16x256xbf16>, vector<80x256xf32> -> vector<80x256xf32>
    %87 = arith.addf %77, %86 : vector<80x256xf32>
    %88 = vector.extract_strided_slice %8 {offsets = [0, 17], sizes = [16, 239], strides = [1, 1]} : vector<16x256xbf16> to vector<16x239xbf16>
    %89 = vector.extract_strided_slice %8 {offsets = [0, 0], sizes = [16, 17], strides = [1, 1]} : vector<16x256xbf16> to vector<16x17xbf16>
    %90 = tpu.concatenate %88, %89 in 1 : vector<16x239xbf16>, vector<16x17xbf16> -> vector<16x256xbf16>
    %91 = vector.extract_strided_slice %9 {offsets = [8, 0], sizes = [1, 256], strides = [1, 1]} : vector<9x256xbf16> to vector<1x256xbf16>
    %92 = vector.broadcast %91 : vector<1x256xbf16> to vector<16x256xbf16>
    %93 = arith.mulf %90, %92 : vector<16x256xbf16>
    %c8 = arith.constant 8 : index
    %c0_34 = arith.constant 0 : index
    %c0_35 = arith.constant 0 : index
    %94 = vector.load %arg4[%c8, %c0_34, %c0_35] : memref<9x80x16xbf16, #tpu.memory_space<vmem>>, vector<1x80x16xbf16>
    %95 = vector.shape_cast %94 : vector<1x80x16xbf16> to vector<80x16xbf16>
    %cst_36 = arith.constant dense<0.000000e+00> : vector<80x256xf32>
    %96 = tpu.matmul %95, %93, %cst_36 {dimension_numbers = #tpu.dot_dimension_numbers<[1], [0], [0], [1], [0, 0, 1, 1], [], []>} : vector<80x16xbf16>, vector<16x256xbf16>, vector<80x256xf32> -> vector<80x256xf32>
    %97 = arith.addf %87, %96 : vector<80x256xf32>
    %c0_37 = arith.constant 0 : index
    %c0_38 = arith.constant 0 : index
    %98 = vector.load %arg5[%c0_37, %c0_38] : memref<80x1xf32, #tpu.memory_space<vmem>>, vector<80x1xf32>
    %99 = vector.broadcast %98 : vector<80x1xf32> to vector<80x256xf32>
    %100 = arith.addf %97, %99 : vector<80x256xf32>
    %cst_39 = arith.constant 0.00999999977 : f32
    %101 = vector.broadcast %cst_39 : f32 to vector<80x256xf32>
    %102 = arith.mulf %101, %100 : vector<80x256xf32>
    %103 = arith.maximumf %100, %102 : vector<80x256xf32>
    %104 = arith.truncf %103 : vector<80x256xf32> to vector<80x256xbf16>
    %c0_40 = arith.constant 0 : index
    %c0_41 = arith.constant 0 : index
    %105 = vector.load %arg8[%c0_40, %c0_41] : memref<9x256xbf16, #tpu.memory_space<vmem>>, vector<9x256xbf16>
    %cst_42 = arith.constant 0.000000e+00 : f32
    %106 = vector.broadcast %cst_42 : f32 to vector<40x256xf32>
    %107 = vector.extract_strided_slice %104 {offsets = [0, 239], sizes = [80, 17], strides = [1, 1]} : vector<80x256xbf16> to vector<80x17xbf16>
    %108 = vector.extract_strided_slice %104 {offsets = [0, 0], sizes = [80, 239], strides = [1, 1]} : vector<80x256xbf16> to vector<80x239xbf16>
    %109 = tpu.concatenate %107, %108 in 1 : vector<80x17xbf16>, vector<80x239xbf16> -> vector<80x256xbf16>
    %110 = vector.extract_strided_slice %105 {offsets = [0, 0], sizes = [1, 256], strides = [1, 1]} : vector<9x256xbf16> to vector<1x256xbf16>
    %111 = vector.broadcast %110 : vector<1x256xbf16> to vector<80x256xbf16>
    %112 = arith.mulf %109, %111 : vector<80x256xbf16>
    %c0_43 = arith.constant 0 : index
    %c0_44 = arith.constant 0 : index
    %c0_45 = arith.constant 0 : index
    %113 = vector.load %arg6[%c0_43, %c0_44, %c0_45] : memref<9x40x80xbf16, #tpu.memory_space<vmem>>, vector<1x40x80xbf16>
    %114 = vector.shape_cast %113 : vector<1x40x80xbf16> to vector<40x80xbf16>
    %cst_46 = arith.constant dense<0.000000e+00> : vector<40x256xf32>
    %115 = tpu.matmul %114, %112, %cst_46 {dimension_numbers = #tpu.dot_dimension_numbers<[1], [0], [0], [1], [0, 0, 1, 1], [], []>} : vector<40x80xbf16>, vector<80x256xbf16>, vector<40x256xf32> -> vector<40x256xf32>
    %116 = arith.addf %106, %115 : vector<40x256xf32>
    %117 = vector.extract_strided_slice %104 {offsets = [0, 240], sizes = [80, 16], strides = [1, 1]} : vector<80x256xbf16> to vector<80x16xbf16>
    %118 = vector.extract_strided_slice %104 {offsets = [0, 0], sizes = [80, 240], strides = [1, 1]} : vector<80x256xbf16> to vector<80x240xbf16>
    %119 = tpu.concatenate %117, %118 in 1 : vector<80x16xbf16>, vector<80x240xbf16> -> vector<80x256xbf16>
    %120 = vector.extract_strided_slice %105 {offsets = [1, 0], sizes = [1, 256], strides = [1, 1]} : vector<9x256xbf16> to vector<1x256xbf16>
    %121 = vector.broadcast %120 : vector<1x256xbf16> to vector<80x256xbf16>
    %122 = arith.mulf %119, %121 : vector<80x256xbf16>
    %c1_47 = arith.constant 1 : index
    %c0_48 = arith.constant 0 : index
    %c0_49 = arith.constant 0 : index
    %123 = vector.load %arg6[%c1_47, %c0_48, %c0_49] : memref<9x40x80xbf16, #tpu.memory_space<vmem>>, vector<1x40x80xbf16>
    %124 = vector.shape_cast %123 : vector<1x40x80xbf16> to vector<40x80xbf16>
    %cst_50 = arith.constant dense<0.000000e+00> : vector<40x256xf32>
    %125 = tpu.matmul %124, %122, %cst_50 {dimension_numbers = #tpu.dot_dimension_numbers<[1], [0], [0], [1], [0, 0, 1, 1], [], []>} : vector<40x80xbf16>, vector<80x256xbf16>, vector<40x256xf32> -> vector<40x256xf32>
    %126 = arith.addf %116, %125 : vector<40x256xf32>
    %127 = vector.extract_strided_slice %104 {offsets = [0, 241], sizes = [80, 15], strides = [1, 1]} : vector<80x256xbf16> to vector<80x15xbf16>
    %128 = vector.extract_strided_slice %104 {offsets = [0, 0], sizes = [80, 241], strides = [1, 1]} : vector<80x256xbf16> to vector<80x241xbf16>
    %129 = tpu.concatenate %127, %128 in 1 : vector<80x15xbf16>, vector<80x241xbf16> -> vector<80x256xbf16>
    %130 = vector.extract_strided_slice %105 {offsets = [2, 0], sizes = [1, 256], strides = [1, 1]} : vector<9x256xbf16> to vector<1x256xbf16>
    %131 = vector.broadcast %130 : vector<1x256xbf16> to vector<80x256xbf16>
    %132 = arith.mulf %129, %131 : vector<80x256xbf16>
    %c2_51 = arith.constant 2 : index
    %c0_52 = arith.constant 0 : index
    %c0_53 = arith.constant 0 : index
    %133 = vector.load %arg6[%c2_51, %c0_52, %c0_53] : memref<9x40x80xbf16, #tpu.memory_space<vmem>>, vector<1x40x80xbf16>
    %134 = vector.shape_cast %133 : vector<1x40x80xbf16> to vector<40x80xbf16>
    %cst_54 = arith.constant dense<0.000000e+00> : vector<40x256xf32>
    %135 = tpu.matmul %134, %132, %cst_54 {dimension_numbers = #tpu.dot_dimension_numbers<[1], [0], [0], [1], [0, 0, 1, 1], [], []>} : vector<40x80xbf16>, vector<80x256xbf16>, vector<40x256xf32> -> vector<40x256xf32>
    %136 = arith.addf %126, %135 : vector<40x256xf32>
    %137 = vector.extract_strided_slice %104 {offsets = [0, 255], sizes = [80, 1], strides = [1, 1]} : vector<80x256xbf16> to vector<80x1xbf16>
    %138 = vector.extract_strided_slice %104 {offsets = [0, 0], sizes = [80, 255], strides = [1, 1]} : vector<80x256xbf16> to vector<80x255xbf16>
    %139 = tpu.concatenate %137, %138 in 1 : vector<80x1xbf16>, vector<80x255xbf16> -> vector<80x256xbf16>
    %140 = vector.extract_strided_slice %105 {offsets = [3, 0], sizes = [1, 256], strides = [1, 1]} : vector<9x256xbf16> to vector<1x256xbf16>
    %141 = vector.broadcast %140 : vector<1x256xbf16> to vector<80x256xbf16>
    %142 = arith.mulf %139, %141 : vector<80x256xbf16>
    %c3_55 = arith.constant 3 : index
    %c0_56 = arith.constant 0 : index
    %c0_57 = arith.constant 0 : index
    %143 = vector.load %arg6[%c3_55, %c0_56, %c0_57] : memref<9x40x80xbf16, #tpu.memory_space<vmem>>, vector<1x40x80xbf16>
    %144 = vector.shape_cast %143 : vector<1x40x80xbf16> to vector<40x80xbf16>
    %cst_58 = arith.constant dense<0.000000e+00> : vector<40x256xf32>
    %145 = tpu.matmul %144, %142, %cst_58 {dimension_numbers = #tpu.dot_dimension_numbers<[1], [0], [0], [1], [0, 0, 1, 1], [], []>} : vector<40x80xbf16>, vector<80x256xbf16>, vector<40x256xf32> -> vector<40x256xf32>
    %146 = arith.addf %136, %145 : vector<40x256xf32>
    %147 = vector.extract_strided_slice %105 {offsets = [4, 0], sizes = [1, 256], strides = [1, 1]} : vector<9x256xbf16> to vector<1x256xbf16>
    %148 = vector.broadcast %147 : vector<1x256xbf16> to vector<80x256xbf16>
    %149 = arith.mulf %104, %148 : vector<80x256xbf16>
    %c4_59 = arith.constant 4 : index
    %c0_60 = arith.constant 0 : index
    %c0_61 = arith.constant 0 : index
    %150 = vector.load %arg6[%c4_59, %c0_60, %c0_61] : memref<9x40x80xbf16, #tpu.memory_space<vmem>>, vector<1x40x80xbf16>
    %151 = vector.shape_cast %150 : vector<1x40x80xbf16> to vector<40x80xbf16>
    %cst_62 = arith.constant dense<0.000000e+00> : vector<40x256xf32>
    %152 = tpu.matmul %151, %149, %cst_62 {dimension_numbers = #tpu.dot_dimension_numbers<[1], [0], [0], [1], [0, 0, 1, 1], [], []>} : vector<40x80xbf16>, vector<80x256xbf16>, vector<40x256xf32> -> vector<40x256xf32>
    %153 = arith.addf %146, %152 : vector<40x256xf32>
    %154 = vector.extract_strided_slice %104 {offsets = [0, 1], sizes = [80, 255], strides = [1, 1]} : vector<80x256xbf16> to vector<80x255xbf16>
    %155 = vector.extract_strided_slice %104 {offsets = [0, 0], sizes = [80, 1], strides = [1, 1]} : vector<80x256xbf16> to vector<80x1xbf16>
    %156 = tpu.concatenate %154, %155 in 1 : vector<80x255xbf16>, vector<80x1xbf16> -> vector<80x256xbf16>
    %157 = vector.extract_strided_slice %105 {offsets = [5, 0], sizes = [1, 256], strides = [1, 1]} : vector<9x256xbf16> to vector<1x256xbf16>
    %158 = vector.broadcast %157 : vector<1x256xbf16> to vector<80x256xbf16>
    %159 = arith.mulf %156, %158 : vector<80x256xbf16>
    %c5_63 = arith.constant 5 : index
    %c0_64 = arith.constant 0 : index
    %c0_65 = arith.constant 0 : index
    %160 = vector.load %arg6[%c5_63, %c0_64, %c0_65] : memref<9x40x80xbf16, #tpu.memory_space<vmem>>, vector<1x40x80xbf16>
    %161 = vector.shape_cast %160 : vector<1x40x80xbf16> to vector<40x80xbf16>
    %cst_66 = arith.constant dense<0.000000e+00> : vector<40x256xf32>
    %162 = tpu.matmul %161, %159, %cst_66 {dimension_numbers = #tpu.dot_dimension_numbers<[1], [0], [0], [1], [0, 0, 1, 1], [], []>} : vector<40x80xbf16>, vector<80x256xbf16>, vector<40x256xf32> -> vector<40x256xf32>
    %163 = arith.addf %153, %162 : vector<40x256xf32>
    %164 = vector.extract_strided_slice %104 {offsets = [0, 15], sizes = [80, 241], strides = [1, 1]} : vector<80x256xbf16> to vector<80x241xbf16>
    %165 = vector.extract_strided_slice %104 {offsets = [0, 0], sizes = [80, 15], strides = [1, 1]} : vector<80x256xbf16> to vector<80x15xbf16>
    %166 = tpu.concatenate %164, %165 in 1 : vector<80x241xbf16>, vector<80x15xbf16> -> vector<80x256xbf16>
    %167 = vector.extract_strided_slice %105 {offsets = [6, 0], sizes = [1, 256], strides = [1, 1]} : vector<9x256xbf16> to vector<1x256xbf16>
    %168 = vector.broadcast %167 : vector<1x256xbf16> to vector<80x256xbf16>
    %169 = arith.mulf %166, %168 : vector<80x256xbf16>
    %c6_67 = arith.constant 6 : index
    %c0_68 = arith.constant 0 : index
    %c0_69 = arith.constant 0 : index
    %170 = vector.load %arg6[%c6_67, %c0_68, %c0_69] : memref<9x40x80xbf16, #tpu.memory_space<vmem>>, vector<1x40x80xbf16>
    %171 = vector.shape_cast %170 : vector<1x40x80xbf16> to vector<40x80xbf16>
    %cst_70 = arith.constant dense<0.000000e+00> : vector<40x256xf32>
    %172 = tpu.matmul %171, %169, %cst_70 {dimension_numbers = #tpu.dot_dimension_numbers<[1], [0], [0], [1], [0, 0, 1, 1], [], []>} : vector<40x80xbf16>, vector<80x256xbf16>, vector<40x256xf32> -> vector<40x256xf32>
    %173 = arith.addf %163, %172 : vector<40x256xf32>
    %174 = vector.extract_strided_slice %104 {offsets = [0, 16], sizes = [80, 240], strides = [1, 1]} : vector<80x256xbf16> to vector<80x240xbf16>
    %175 = vector.extract_strided_slice %104 {offsets = [0, 0], sizes = [80, 16], strides = [1, 1]} : vector<80x256xbf16> to vector<80x16xbf16>
    %176 = tpu.concatenate %174, %175 in 1 : vector<80x240xbf16>, vector<80x16xbf16> -> vector<80x256xbf16>
    %177 = vector.extract_strided_slice %105 {offsets = [7, 0], sizes = [1, 256], strides = [1, 1]} : vector<9x256xbf16> to vector<1x256xbf16>
    %178 = vector.broadcast %177 : vector<1x256xbf16> to vector<80x256xbf16>
    %179 = arith.mulf %176, %178 : vector<80x256xbf16>
    %c7_71 = arith.constant 7 : index
    %c0_72 = arith.constant 0 : index
    %c0_73 = arith.constant 0 : index
    %180 = vector.load %arg6[%c7_71, %c0_72, %c0_73] : memref<9x40x80xbf16, #tpu.memory_space<vmem>>, vector<1x40x80xbf16>
    %181 = vector.shape_cast %180 : vector<1x40x80xbf16> to vector<40x80xbf16>
    %cst_74 = arith.constant dense<0.000000e+00> : vector<40x256xf32>
    %182 = tpu.matmul %181, %179, %cst_74 {dimension_numbers = #tpu.dot_dimension_numbers<[1], [0], [0], [1], [0, 0, 1, 1], [], []>} : vector<40x80xbf16>, vector<80x256xbf16>, vector<40x256xf32> -> vector<40x256xf32>
    %183 = arith.addf %173, %182 : vector<40x256xf32>
    %184 = vector.extract_strided_slice %104 {offsets = [0, 17], sizes = [80, 239], strides = [1, 1]} : vector<80x256xbf16> to vector<80x239xbf16>
    %185 = vector.extract_strided_slice %104 {offsets = [0, 0], sizes = [80, 17], strides = [1, 1]} : vector<80x256xbf16> to vector<80x17xbf16>
    %186 = tpu.concatenate %184, %185 in 1 : vector<80x239xbf16>, vector<80x17xbf16> -> vector<80x256xbf16>
    %187 = vector.extract_strided_slice %105 {offsets = [8, 0], sizes = [1, 256], strides = [1, 1]} : vector<9x256xbf16> to vector<1x256xbf16>
    %188 = vector.broadcast %187 : vector<1x256xbf16> to vector<80x256xbf16>
    %189 = arith.mulf %186, %188 : vector<80x256xbf16>
    %c8_75 = arith.constant 8 : index
    %c0_76 = arith.constant 0 : index
    %c0_77 = arith.constant 0 : index
    %190 = vector.load %arg6[%c8_75, %c0_76, %c0_77] : memref<9x40x80xbf16, #tpu.memory_space<vmem>>, vector<1x40x80xbf16>
    %191 = vector.shape_cast %190 : vector<1x40x80xbf16> to vector<40x80xbf16>
    %cst_78 = arith.constant dense<0.000000e+00> : vector<40x256xf32>
    %192 = tpu.matmul %191, %189, %cst_78 {dimension_numbers = #tpu.dot_dimension_numbers<[1], [0], [0], [1], [0, 0, 1, 1], [], []>} : vector<40x80xbf16>, vector<80x256xbf16>, vector<40x256xf32> -> vector<40x256xf32>
    %193 = arith.addf %183, %192 : vector<40x256xf32>
    %c0_79 = arith.constant 0 : index
    %c0_80 = arith.constant 0 : index
    %194 = vector.load %arg7[%c0_79, %c0_80] : memref<40x1xf32, #tpu.memory_space<vmem>>, vector<40x1xf32>
    %195 = vector.broadcast %194 : vector<40x1xf32> to vector<40x256xf32>
    %196 = arith.addf %193, %195 : vector<40x256xf32>
    %cst_81 = arith.constant 0.00999999977 : f32
    %197 = vector.broadcast %cst_81 : f32 to vector<40x256xf32>
    %198 = arith.mulf %197, %196 : vector<40x256xf32>
    %199 = arith.maximumf %196, %198 : vector<40x256xf32>
    %200 = vector.extract_strided_slice %199 {offsets = [0, 1], sizes = [40, 255], strides = [1, 1]} : vector<40x256xf32> to vector<40x255xf32>
    %201 = vector.extract_strided_slice %199 {offsets = [0, 0], sizes = [40, 1], strides = [1, 1]} : vector<40x256xf32> to vector<40x1xf32>
    %202 = tpu.concatenate %200, %201 in 1 : vector<40x255xf32>, vector<40x1xf32> -> vector<40x256xf32>
    %203 = arith.maximumf %199, %202 : vector<40x256xf32>
    %204 = vector.extract_strided_slice %203 {offsets = [0, 16], sizes = [40, 240], strides = [1, 1]} : vector<40x256xf32> to vector<40x240xf32>
    %205 = vector.extract_strided_slice %203 {offsets = [0, 0], sizes = [40, 16], strides = [1, 1]} : vector<40x256xf32> to vector<40x16xf32>
    %206 = tpu.concatenate %204, %205 in 1 : vector<40x240xf32>, vector<40x16xf32> -> vector<40x256xf32>
    %207 = arith.maximumf %203, %206 : vector<40x256xf32>
    %208 = arith.truncf %207 : vector<40x256xf32> to vector<40x256xbf16>
    %c0_82 = arith.constant 0 : index
    %c0_83 = arith.constant 0 : index
    %209 = vector.load %arg10[%c0_82, %c0_83] : memref<256x64xbf16, #tpu.memory_space<vmem>>, vector<256x64xbf16>
    %cst_84 = arith.constant dense<0.000000e+00> : vector<40x64xf32>
    %210 = tpu.matmul %208, %209, %cst_84 {dimension_numbers = #tpu.dot_dimension_numbers<[1], [0], [0], [1], [0, 0, 1, 1], [], []>} : vector<40x256xbf16>, vector<256x64xbf16>, vector<40x64xf32> -> vector<40x64xf32>
    %211 = arith.truncf %210 : vector<40x64xf32> to vector<40x64xbf16>
    %c0_85 = arith.constant 0 : index
    %c0_86 = arith.constant 0 : index
    %212 = vector.load %arg9[%c0_85, %c0_86] : memref<9x64xbf16, #tpu.memory_space<vmem>>, vector<9x64xbf16>
    %cst_87 = arith.constant 0.000000e+00 : f32
    %213 = vector.broadcast %cst_87 : f32 to vector<8x64xf32>
    %214 = vector.extract_strided_slice %211 {offsets = [0, 55], sizes = [40, 9], strides = [1, 1]} : vector<40x64xbf16> to vector<40x9xbf16>
    %215 = vector.extract_strided_slice %211 {offsets = [0, 0], sizes = [40, 55], strides = [1, 1]} : vector<40x64xbf16> to vector<40x55xbf16>
    %216 = tpu.concatenate %214, %215 in 1 : vector<40x9xbf16>, vector<40x55xbf16> -> vector<40x64xbf16>
    %217 = vector.extract_strided_slice %212 {offsets = [0, 0], sizes = [1, 64], strides = [1, 1]} : vector<9x64xbf16> to vector<1x64xbf16>
    %218 = vector.broadcast %217 : vector<1x64xbf16> to vector<40x64xbf16>
    %219 = arith.mulf %216, %218 : vector<40x64xbf16>
    %c0_88 = arith.constant 0 : index
    %c0_89 = arith.constant 0 : index
    %c0_90 = arith.constant 0 : index
    %220 = vector.load %arg11[%c0_88, %c0_89, %c0_90] : memref<9x8x40xbf16, #tpu.memory_space<vmem>>, vector<1x8x40xbf16>
    %221 = vector.shape_cast %220 : vector<1x8x40xbf16> to vector<8x40xbf16>
    %cst_91 = arith.constant dense<0.000000e+00> : vector<8x64xf32>
    %222 = tpu.matmul %221, %219, %cst_91 {dimension_numbers = #tpu.dot_dimension_numbers<[1], [0], [0], [1], [0, 0, 1, 1], [], []>} : vector<8x40xbf16>, vector<40x64xbf16>, vector<8x64xf32> -> vector<8x64xf32>
    %223 = arith.addf %213, %222 : vector<8x64xf32>
    %224 = vector.extract_strided_slice %211 {offsets = [0, 56], sizes = [40, 8], strides = [1, 1]} : vector<40x64xbf16> to vector<40x8xbf16>
    %225 = vector.extract_strided_slice %211 {offsets = [0, 0], sizes = [40, 56], strides = [1, 1]} : vector<40x64xbf16> to vector<40x56xbf16>
    %226 = tpu.concatenate %224, %225 in 1 : vector<40x8xbf16>, vector<40x56xbf16> -> vector<40x64xbf16>
    %227 = vector.extract_strided_slice %212 {offsets = [1, 0], sizes = [1, 64], strides = [1, 1]} : vector<9x64xbf16> to vector<1x64xbf16>
    %228 = vector.broadcast %227 : vector<1x64xbf16> to vector<40x64xbf16>
    %229 = arith.mulf %226, %228 : vector<40x64xbf16>
    %c1_92 = arith.constant 1 : index
    %c0_93 = arith.constant 0 : index
    %c0_94 = arith.constant 0 : index
    %230 = vector.load %arg11[%c1_92, %c0_93, %c0_94] : memref<9x8x40xbf16, #tpu.memory_space<vmem>>, vector<1x8x40xbf16>
    %231 = vector.shape_cast %230 : vector<1x8x40xbf16> to vector<8x40xbf16>
    %cst_95 = arith.constant dense<0.000000e+00> : vector<8x64xf32>
    %232 = tpu.matmul %231, %229, %cst_95 {dimension_numbers = #tpu.dot_dimension_numbers<[1], [0], [0], [1], [0, 0, 1, 1], [], []>} : vector<8x40xbf16>, vector<40x64xbf16>, vector<8x64xf32> -> vector<8x64xf32>
    %233 = arith.addf %223, %232 : vector<8x64xf32>
    %234 = vector.extract_strided_slice %211 {offsets = [0, 57], sizes = [40, 7], strides = [1, 1]} : vector<40x64xbf16> to vector<40x7xbf16>
    %235 = vector.extract_strided_slice %211 {offsets = [0, 0], sizes = [40, 57], strides = [1, 1]} : vector<40x64xbf16> to vector<40x57xbf16>
    %236 = tpu.concatenate %234, %235 in 1 : vector<40x7xbf16>, vector<40x57xbf16> -> vector<40x64xbf16>
    %237 = vector.extract_strided_slice %212 {offsets = [2, 0], sizes = [1, 64], strides = [1, 1]} : vector<9x64xbf16> to vector<1x64xbf16>
    %238 = vector.broadcast %237 : vector<1x64xbf16> to vector<40x64xbf16>
    %239 = arith.mulf %236, %238 : vector<40x64xbf16>
    %c2_96 = arith.constant 2 : index
    %c0_97 = arith.constant 0 : index
    %c0_98 = arith.constant 0 : index
    %240 = vector.load %arg11[%c2_96, %c0_97, %c0_98] : memref<9x8x40xbf16, #tpu.memory_space<vmem>>, vector<1x8x40xbf16>
    %241 = vector.shape_cast %240 : vector<1x8x40xbf16> to vector<8x40xbf16>
    %cst_99 = arith.constant dense<0.000000e+00> : vector<8x64xf32>
    %242 = tpu.matmul %241, %239, %cst_99 {dimension_numbers = #tpu.dot_dimension_numbers<[1], [0], [0], [1], [0, 0, 1, 1], [], []>} : vector<8x40xbf16>, vector<40x64xbf16>, vector<8x64xf32> -> vector<8x64xf32>
    %243 = arith.addf %233, %242 : vector<8x64xf32>
    %244 = vector.extract_strided_slice %211 {offsets = [0, 63], sizes = [40, 1], strides = [1, 1]} : vector<40x64xbf16> to vector<40x1xbf16>
    %245 = vector.extract_strided_slice %211 {offsets = [0, 0], sizes = [40, 63], strides = [1, 1]} : vector<40x64xbf16> to vector<40x63xbf16>
    %246 = tpu.concatenate %244, %245 in 1 : vector<40x1xbf16>, vector<40x63xbf16> -> vector<40x64xbf16>
    %247 = vector.extract_strided_slice %212 {offsets = [3, 0], sizes = [1, 64], strides = [1, 1]} : vector<9x64xbf16> to vector<1x64xbf16>
    %248 = vector.broadcast %247 : vector<1x64xbf16> to vector<40x64xbf16>
    %249 = arith.mulf %246, %248 : vector<40x64xbf16>
    %c3_100 = arith.constant 3 : index
    %c0_101 = arith.constant 0 : index
    %c0_102 = arith.constant 0 : index
    %250 = vector.load %arg11[%c3_100, %c0_101, %c0_102] : memref<9x8x40xbf16, #tpu.memory_space<vmem>>, vector<1x8x40xbf16>
    %251 = vector.shape_cast %250 : vector<1x8x40xbf16> to vector<8x40xbf16>
    %cst_103 = arith.constant dense<0.000000e+00> : vector<8x64xf32>
    %252 = tpu.matmul %251, %249, %cst_103 {dimension_numbers = #tpu.dot_dimension_numbers<[1], [0], [0], [1], [0, 0, 1, 1], [], []>} : vector<8x40xbf16>, vector<40x64xbf16>, vector<8x64xf32> -> vector<8x64xf32>
    %253 = arith.addf %243, %252 : vector<8x64xf32>
    %254 = vector.extract_strided_slice %212 {offsets = [4, 0], sizes = [1, 64], strides = [1, 1]} : vector<9x64xbf16> to vector<1x64xbf16>
    %255 = vector.broadcast %254 : vector<1x64xbf16> to vector<40x64xbf16>
    %256 = arith.mulf %211, %255 : vector<40x64xbf16>
    %c4_104 = arith.constant 4 : index
    %c0_105 = arith.constant 0 : index
    %c0_106 = arith.constant 0 : index
    %257 = vector.load %arg11[%c4_104, %c0_105, %c0_106] : memref<9x8x40xbf16, #tpu.memory_space<vmem>>, vector<1x8x40xbf16>
    %258 = vector.shape_cast %257 : vector<1x8x40xbf16> to vector<8x40xbf16>
    %cst_107 = arith.constant dense<0.000000e+00> : vector<8x64xf32>
    %259 = tpu.matmul %258, %256, %cst_107 {dimension_numbers = #tpu.dot_dimension_numbers<[1], [0], [0], [1], [0, 0, 1, 1], [], []>} : vector<8x40xbf16>, vector<40x64xbf16>, vector<8x64xf32> -> vector<8x64xf32>
    %260 = arith.addf %253, %259 : vector<8x64xf32>
    %261 = vector.extract_strided_slice %211 {offsets = [0, 1], sizes = [40, 63], strides = [1, 1]} : vector<40x64xbf16> to vector<40x63xbf16>
    %262 = vector.extract_strided_slice %211 {offsets = [0, 0], sizes = [40, 1], strides = [1, 1]} : vector<40x64xbf16> to vector<40x1xbf16>
    %263 = tpu.concatenate %261, %262 in 1 : vector<40x63xbf16>, vector<40x1xbf16> -> vector<40x64xbf16>
    %264 = vector.extract_strided_slice %212 {offsets = [5, 0], sizes = [1, 64], strides = [1, 1]} : vector<9x64xbf16> to vector<1x64xbf16>
    %265 = vector.broadcast %264 : vector<1x64xbf16> to vector<40x64xbf16>
    %266 = arith.mulf %263, %265 : vector<40x64xbf16>
    %c5_108 = arith.constant 5 : index
    %c0_109 = arith.constant 0 : index
    %c0_110 = arith.constant 0 : index
    %267 = vector.load %arg11[%c5_108, %c0_109, %c0_110] : memref<9x8x40xbf16, #tpu.memory_space<vmem>>, vector<1x8x40xbf16>
    %268 = vector.shape_cast %267 : vector<1x8x40xbf16> to vector<8x40xbf16>
    %cst_111 = arith.constant dense<0.000000e+00> : vector<8x64xf32>
    %269 = tpu.matmul %268, %266, %cst_111 {dimension_numbers = #tpu.dot_dimension_numbers<[1], [0], [0], [1], [0, 0, 1, 1], [], []>} : vector<8x40xbf16>, vector<40x64xbf16>, vector<8x64xf32> -> vector<8x64xf32>
    %270 = arith.addf %260, %269 : vector<8x64xf32>
    %271 = vector.extract_strided_slice %211 {offsets = [0, 7], sizes = [40, 57], strides = [1, 1]} : vector<40x64xbf16> to vector<40x57xbf16>
    %272 = vector.extract_strided_slice %211 {offsets = [0, 0], sizes = [40, 7], strides = [1, 1]} : vector<40x64xbf16> to vector<40x7xbf16>
    %273 = tpu.concatenate %271, %272 in 1 : vector<40x57xbf16>, vector<40x7xbf16> -> vector<40x64xbf16>
    %274 = vector.extract_strided_slice %212 {offsets = [6, 0], sizes = [1, 64], strides = [1, 1]} : vector<9x64xbf16> to vector<1x64xbf16>
    %275 = vector.broadcast %274 : vector<1x64xbf16> to vector<40x64xbf16>
    %276 = arith.mulf %273, %275 : vector<40x64xbf16>
    %c6_112 = arith.constant 6 : index
    %c0_113 = arith.constant 0 : index
    %c0_114 = arith.constant 0 : index
    %277 = vector.load %arg11[%c6_112, %c0_113, %c0_114] : memref<9x8x40xbf16, #tpu.memory_space<vmem>>, vector<1x8x40xbf16>
    %278 = vector.shape_cast %277 : vector<1x8x40xbf16> to vector<8x40xbf16>
    %cst_115 = arith.constant dense<0.000000e+00> : vector<8x64xf32>
    %279 = tpu.matmul %278, %276, %cst_115 {dimension_numbers = #tpu.dot_dimension_numbers<[1], [0], [0], [1], [0, 0, 1, 1], [], []>} : vector<8x40xbf16>, vector<40x64xbf16>, vector<8x64xf32> -> vector<8x64xf32>
    %280 = arith.addf %270, %279 : vector<8x64xf32>
    %281 = vector.extract_strided_slice %211 {offsets = [0, 8], sizes = [40, 56], strides = [1, 1]} : vector<40x64xbf16> to vector<40x56xbf16>
    %282 = vector.extract_strided_slice %211 {offsets = [0, 0], sizes = [40, 8], strides = [1, 1]} : vector<40x64xbf16> to vector<40x8xbf16>
    %283 = tpu.concatenate %281, %282 in 1 : vector<40x56xbf16>, vector<40x8xbf16> -> vector<40x64xbf16>
    %284 = vector.extract_strided_slice %212 {offsets = [7, 0], sizes = [1, 64], strides = [1, 1]} : vector<9x64xbf16> to vector<1x64xbf16>
    %285 = vector.broadcast %284 : vector<1x64xbf16> to vector<40x64xbf16>
    %286 = arith.mulf %283, %285 : vector<40x64xbf16>
    %c7_116 = arith.constant 7 : index
    %c0_117 = arith.constant 0 : index
    %c0_118 = arith.constant 0 : index
    %287 = vector.load %arg11[%c7_116, %c0_117, %c0_118] : memref<9x8x40xbf16, #tpu.memory_space<vmem>>, vector<1x8x40xbf16>
    %288 = vector.shape_cast %287 : vector<1x8x40xbf16> to vector<8x40xbf16>
    %cst_119 = arith.constant dense<0.000000e+00> : vector<8x64xf32>
    %289 = tpu.matmul %288, %286, %cst_119 {dimension_numbers = #tpu.dot_dimension_numbers<[1], [0], [0], [1], [0, 0, 1, 1], [], []>} : vector<8x40xbf16>, vector<40x64xbf16>, vector<8x64xf32> -> vector<8x64xf32>
    %290 = arith.addf %280, %289 : vector<8x64xf32>
    %291 = vector.extract_strided_slice %211 {offsets = [0, 9], sizes = [40, 55], strides = [1, 1]} : vector<40x64xbf16> to vector<40x55xbf16>
    %292 = vector.extract_strided_slice %211 {offsets = [0, 0], sizes = [40, 9], strides = [1, 1]} : vector<40x64xbf16> to vector<40x9xbf16>
    %293 = tpu.concatenate %291, %292 in 1 : vector<40x55xbf16>, vector<40x9xbf16> -> vector<40x64xbf16>
    %294 = vector.extract_strided_slice %212 {offsets = [8, 0], sizes = [1, 64], strides = [1, 1]} : vector<9x64xbf16> to vector<1x64xbf16>
    %295 = vector.broadcast %294 : vector<1x64xbf16> to vector<40x64xbf16>
    %296 = arith.mulf %293, %295 : vector<40x64xbf16>
    %c8_120 = arith.constant 8 : index
    %c0_121 = arith.constant 0 : index
    %c0_122 = arith.constant 0 : index
    %297 = vector.load %arg11[%c8_120, %c0_121, %c0_122] : memref<9x8x40xbf16, #tpu.memory_space<vmem>>, vector<1x8x40xbf16>
    %298 = vector.shape_cast %297 : vector<1x8x40xbf16> to vector<8x40xbf16>
    %cst_123 = arith.constant dense<0.000000e+00> : vector<8x64xf32>
    %299 = tpu.matmul %298, %296, %cst_123 {dimension_numbers = #tpu.dot_dimension_numbers<[1], [0], [0], [1], [0, 0, 1, 1], [], []>} : vector<8x40xbf16>, vector<40x64xbf16>, vector<8x64xf32> -> vector<8x64xf32>
    %300 = arith.addf %290, %299 : vector<8x64xf32>
    %c0_124 = arith.constant 0 : index
    %c0_125 = arith.constant 0 : index
    %301 = vector.load %arg12[%c0_124, %c0_125] : memref<8x1xf32, #tpu.memory_space<vmem>>, vector<8x1xf32>
    %302 = vector.broadcast %301 : vector<8x1xf32> to vector<8x64xf32>
    %303 = arith.addf %300, %302 : vector<8x64xf32>
    %cst_126 = arith.constant 0.00999999977 : f32
    %304 = vector.broadcast %cst_126 : f32 to vector<8x64xf32>
    %305 = arith.mulf %304, %303 : vector<8x64xf32>
    %306 = arith.maximumf %303, %305 : vector<8x64xf32>
    %307 = vector.extract_strided_slice %306 {offsets = [0, 0], sizes = [1, 64], strides = [1, 1]} : vector<8x64xf32> to vector<1x64xf32>
    %308 = arith.truncf %307 : vector<1x64xf32> to vector<1x64xbf16>
    %c0_127 = arith.constant 0 : index
    %c0_128 = arith.constant 0 : index
    %309 = vector.load %arg13[%c0_127, %c0_128] : memref<128x150xbf16, #tpu.memory_space<vmem>>, vector<64x150xbf16>
    %cst_129 = arith.constant dense<0.000000e+00> : vector<1x150xf32>
    %310 = tpu.matmul %308, %309, %cst_129 {dimension_numbers = #tpu.dot_dimension_numbers<[1], [0], [0], [1], [0, 0, 1, 1], [], []>} : vector<1x64xbf16>, vector<64x150xbf16>, vector<1x150xf32> -> vector<1x150xf32>
    %311 = vector.extract_strided_slice %306 {offsets = [1, 0], sizes = [1, 64], strides = [1, 1]} : vector<8x64xf32> to vector<1x64xf32>
    %312 = arith.truncf %311 : vector<1x64xf32> to vector<1x64xbf16>
    %c64 = arith.constant 64 : index
    %c0_130 = arith.constant 0 : index
    %313 = vector.load %arg13[%c64, %c0_130] : memref<128x150xbf16, #tpu.memory_space<vmem>>, vector<64x150xbf16>
    %cst_131 = arith.constant dense<0.000000e+00> : vector<1x150xf32>
    %314 = tpu.matmul %312, %313, %cst_131 {dimension_numbers = #tpu.dot_dimension_numbers<[1], [0], [0], [1], [0, 0, 1, 1], [], []>} : vector<1x64xbf16>, vector<64x150xbf16>, vector<1x150xf32> -> vector<1x150xf32>
    %315 = arith.addf %310, %314 : vector<1x150xf32>
    %c0_132 = arith.constant 0 : index
    %c0_133 = arith.constant 0 : index
    %316 = vector.load %arg14[%c0_132, %c0_133] : memref<1x150xf32, #tpu.memory_space<vmem>>, vector<1x150xf32>
    %317 = arith.addf %315, %316 : vector<1x150xf32>
    %cst_134 = arith.constant 0.00999999977 : f32
    %318 = vector.broadcast %cst_134 : f32 to vector<1x150xf32>
    %319 = arith.mulf %318, %317 : vector<1x150xf32>
    %320 = arith.maximumf %317, %319 : vector<1x150xf32>
    %321 = arith.truncf %320 : vector<1x150xf32> to vector<1x150xbf16>
    %c0_135 = arith.constant 0 : index
    %c0_136 = arith.constant 0 : index
    %322 = vector.load %arg15[%c0_135, %c0_136] : memref<150x8xbf16, #tpu.memory_space<vmem>>, vector<150x8xbf16>
    %cst_137 = arith.constant dense<0.000000e+00> : vector<1x8xf32>
    %323 = tpu.matmul %321, %322, %cst_137 {dimension_numbers = #tpu.dot_dimension_numbers<[1], [0], [0], [1], [0, 0, 1, 1], [], []>} : vector<1x150xbf16>, vector<150x8xbf16>, vector<1x8xf32> -> vector<1x8xf32>
    %c0_138 = arith.constant 0 : index
    %c0_139 = arith.constant 0 : index
    %324 = vector.load %arg16[%c0_138, %c0_139] : memref<1x8xf32, #tpu.memory_space<vmem>>, vector<1x8xf32>
    %325 = arith.addf %323, %324 : vector<1x8xf32>
    %326 = vector.shape_cast %325 : vector<1x8xf32> to vector<1x1x8xf32>
    %c0_140 = arith.constant 0 : index
    %c0_141 = arith.constant 0 : index
    %c0_142 = arith.constant 0 : index
    %327 = vector.load %arg17[%c0_140, %c0_141, %c0_142] : memref<1x1x8xf32, #tpu.memory_space<vmem>>, vector<1x1x8xf32>
    tpu.vector_store %arg17[%c0_140, %c0_141, %c0_142], %326 {strides = array<i32>} : memref<1x1x8xf32, #tpu.memory_space<vmem>>, vector<1x1x8xf32>,
    return
  }
  func.func @transform_0(%arg0: i32) -> (i32, i32, i32) {
    %c0_i32 = arith.constant 0 : i32
    %c0_i32_0 = arith.constant 0 : i32
    %c0_i32_1 = arith.constant 0 : i32
    return %arg0, %c0_i32, %c0_i32_0 : i32, i32, i32
  }
  func.func @transform_1(%arg0: i32) -> (i32, i32) {
    %c0_i32 = arith.constant 0 : i32
    %c0_i32_0 = arith.constant 0 : i32
    %c0_i32_1 = arith.constant 0 : i32
    return %c0_i32, %c0_i32_0 : i32, i32
  }
  func.func @transform_2(%arg0: i32) -> (i32, i32) {
    %c0_i32 = arith.constant 0 : i32
    %c0_i32_0 = arith.constant 0 : i32
    %c0_i32_1 = arith.constant 0 : i32
    return %c0_i32, %c0_i32_0 : i32, i32
  }
  func.func @transform_3(%arg0: i32) -> (i32, i32, i32) {
    %c0_i32 = arith.constant 0 : i32
    %c0_i32_0 = arith.constant 0 : i32
    %c0_i32_1 = arith.constant 0 : i32
    %c0_i32_2 = arith.constant 0 : i32
    return %c0_i32, %c0_i32_0, %c0_i32_1 : i32, i32, i32
  }
  func.func @transform_4(%arg0: i32) -> (i32, i32) {
    %c0_i32 = arith.constant 0 : i32
    %c0_i32_0 = arith.constant 0 : i32
    %c0_i32_1 = arith.constant 0 : i32
    return %c0_i32, %c0_i32_0 : i32, i32
  }
  func.func @transform_5(%arg0: i32) -> (i32, i32, i32) {
    %c0_i32 = arith.constant 0 : i32
    %c0_i32_0 = arith.constant 0 : i32
    %c0_i32_1 = arith.constant 0 : i32
    %c0_i32_2 = arith.constant 0 : i32
    return %c0_i32, %c0_i32_0, %c0_i32_1 : i32, i32, i32
  }
  func.func @transform_6(%arg0: i32) -> (i32, i32) {
    %c0_i32 = arith.constant 0 : i32
    %c0_i32_0 = arith.constant 0 : i32
    %c0_i32_1 = arith.constant 0 : i32
    return %c0_i32, %c0_i32_0 : i32, i32
  }
  func.func @transform_7(%arg0: i32) -> (i32, i32) {
    %c0_i32 = arith.constant 0 : i32
    %c0_i32_0 = arith.constant 0 : i32
    %c0_i32_1 = arith.constant 0 : i32
    return %c0_i32, %c0_i32_0 : i32, i32
  }
  func.func @transform_8(%arg0: i32) -> (i32, i32) {
    %c0_i32 = arith.constant 0 : i32
    %c0_i32_0 = arith.constant 0 : i32
    %c0_i32_1 = arith.constant 0 : i32
    return %c0_i32, %c0_i32_0 : i32, i32
  }
  func.func @transform_9(%arg0: i32) -> (i32, i32) {
    %c0_i32 = arith.constant 0 : i32
    %c0_i32_0 = arith.constant 0 : i32
    %c0_i32_1 = arith.constant 0 : i32
    return %c0_i32, %c0_i32_0 : i32, i32
  }
  func.func @transform_10(%arg0: i32) -> (i32, i32, i32) {
    %c0_i32 = arith.constant 0 : i32
    %c0_i32_0 = arith.constant 0 : i32
    %c0_i32_1 = arith.constant 0 : i32
    %c0_i32_2 = arith.constant 0 : i32
    return %c0_i32, %c0_i32_0, %c0_i32_1 : i32, i32, i32
  }
  func.func @transform_11(%arg0: i32) -> (i32, i32) {
    %c0_i32 = arith.constant 0 : i32
    %c0_i32_0 = arith.constant 0 : i32
    %c0_i32_1 = arith.constant 0 : i32
    return %c0_i32, %c0_i32_0 : i32, i32
  }
  func.func @transform_12(%arg0: i32) -> (i32, i32) {
    %c0_i32 = arith.constant 0 : i32
    %c0_i32_0 = arith.constant 0 : i32
    %c0_i32_1 = arith.constant 0 : i32
    return %c0_i32, %c0_i32_0 : i32, i32
  }
  func.func @transform_13(%arg0: i32) -> (i32, i32) {
    %c0_i32 = arith.constant 0 : i32
    %c0_i32_0 = arith.constant 0 : i32
    %c0_i32_1 = arith.constant 0 : i32
    return %c0_i32, %c0_i32_0 : i32, i32
  }
  func.func @transform_14(%arg0: i32) -> (i32, i32) {
    %c0_i32 = arith.constant 0 : i32
    %c0_i32_0 = arith.constant 0 : i32
    %c0_i32_1 = arith.constant 0 : i32
    return %c0_i32, %c0_i32_0 : i32, i32
  }
  func.func @transform_15(%arg0: i32) -> (i32, i32) {
    %c0_i32 = arith.constant 0 : i32
    %c0_i32_0 = arith.constant 0 : i32
    %c0_i32_1 = arith.constant 0 : i32
    return %c0_i32, %c0_i32_0 : i32, i32
  }
  func.func @transform_16(%arg0: i32) -> (i32, i32, i32) {
    %c0_i32 = arith.constant 0 : i32
    %c0_i32_0 = arith.constant 0 : i32
    %c0_i32_1 = arith.constant 0 : i32
    return %arg0, %c0_i32, %c0_i32_0 : i32, i32, i32
  }
}

</mosaic_0001>

<llo_original>
// kernel: forward_pallas.1
$region0: #{forward_pallas.1}
  #allocation0 [shape = 'u32[]', space=smem, size = 0x4, offset = 0x4, fixed_abs, tag = 'smem constant byte address 0x4 - core index']
  #allocation1 [shape = 'u32[144,128]{1,0:T(1,128)}', space=vmem, size = 0x12000, scoped, tag = 'internal scratch']
  %s0 = inlined_call_operand.vmem [shape: f32[2,8,256], index: 0, kind: input, shape index: {}]
  %s1 = inlined_call_operand.vmem [shape: bf16[16,8], index: 1, kind: input, shape index: {}]
  %s2 = inlined_call_operand.vmem [shape: f32[16,1], index: 2, kind: input, shape index: {}]
  %s3 = inlined_call_operand.vmem [shape: bf16[9,80,16], index: 3, kind: input, shape index: {}]
  %s4 = inlined_call_operand.vmem [shape: f32[80,1], index: 4, kind: input, shape index: {}]
  %s5 = inlined_call_operand.vmem [shape: bf16[9,40,80], index: 5, kind: input, shape index: {}]
  %s6 = inlined_call_operand.vmem [shape: f32[40,1], index: 6, kind: input, shape index: {}]
  %s7 = inlined_call_operand.vmem [shape: bf16[9,256], index: 7, kind: input, shape index: {}]
  %s8 = inlined_call_operand.vmem [shape: bf16[9,64], index: 8, kind: input, shape index: {}]
  %s9 = inlined_call_operand.vmem [shape: bf16[256,64], index: 9, kind: input, shape index: {}]
  %s10 = inlined_call_operand.vmem [shape: bf16[9,8,40], index: 10, kind: input, shape index: {}]
  %s11 = inlined_call_operand.vmem [shape: f32[8,1], index: 11, kind: input, shape index: {}]
  %s12 = inlined_call_operand.vmem [shape: bf16[128,150], index: 12, kind: input, shape index: {}]
  %s13 = inlined_call_operand.vmem [shape: f32[1,150], index: 13, kind: input, shape index: {}]
  %s14 = inlined_call_operand.vmem [shape: bf16[150,8], index: 14, kind: input, shape index: {}]
  %s15 = inlined_call_operand.vmem [shape: f32[1,8], index: 15, kind: input, shape index: {}]
  %s16 = inlined_call_operand.hbm [shape: f32[2,1,8], index: 16, kind: output, shape index: {}]
  %s17 = sld [smem:[#allocation0]]
  $region97: #{forward_pallas.1} parent=0
    _
  %s19 = ssub.s32 1, %s17
  %s20 = scalar_select 0, %s19, %s17
  $region1: #{forward_pallas.1} parent=0
    #allocation2 [shape = 'u8[1024]{0}', space=vmem, size = 0x400, scoped, tag = 'output window, operand 0']
    #allocation3 [shape = 's32[2]{0}', space=sflag, size = 0x8, scoped, tag = 'scoped memory for forward_pallas.1']
    %21 = vsyncpa [#allocation3], 0
    %s22 = scalar_lea.sflag [#allocation3], 1
    %23 = vsyncpa %s22, 0
    loop: start=0, step=1, limit=4
    $region2: #{forward_pallas.1} parent=1 // loop_pre_header
      _
    $region3: #{forward_pallas.1} parent=1 // loop_header
      %s25 = sphi 0, %s29
      %p26 = scmp.ge.s32.totalorder %s25, 4
      %s35 = sphi 0, %s37
      %s38 = sphi 0, %s35
      %s39 = sphi 0, %s38
      %s55 = sphi 0, %s39
      %s59 = sphi 0, %s59
      %s61 = sphi 0, %s59
      %s62 = sphi 0, %s61
      %s76 = sphi 0, %s62
      %s80 = sphi 0, %s80
      %s82 = sphi 0, %s80
      %s83 = sphi 0, %s82
      %s97 = sphi 0, %s83
      %s101 = sphi 0, %s101
      %s103 = sphi 0, %s101
      %s104 = sphi 0, %s103
      %s118 = sphi 0, %s104
      %s122 = sphi 0, %s122
      %s124 = sphi 0, %s122
      %s125 = sphi 0, %s124
      %s139 = sphi 0, %s125
      %s143 = sphi 0, %s143
      %s145 = sphi 0, %s143
      %s146 = sphi 0, %s145
      %s160 = sphi 0, %s146
      %s164 = sphi 0, %s164
      %s166 = sphi 0, %s164
      %s167 = sphi 0, %s166
      %s181 = sphi 0, %s167
      %s185 = sphi 0, %s185
      %s187 = sphi 0, %s185
      %s188 = sphi 0, %s187
      %s202 = sphi 0, %s188
      %s206 = sphi 0, %s206
      %s208 = sphi 0, %s206
      %s209 = sphi 0, %s208
      %s223 = sphi 0, %s209
      %s227 = sphi 0, %s227
      %s229 = sphi 0, %s227
      %s230 = sphi 0, %s229
      %s244 = sphi 0, %s230
      %s248 = sphi 0, %s248
      %s250 = sphi 0, %s248
      %s251 = sphi 0, %s250
      %s265 = sphi 0, %s251
      %s269 = sphi 0, %s269
      %s271 = sphi 0, %s269
      %s272 = sphi 0, %s271
      %s286 = sphi 0, %s272
      %s290 = sphi 0, %s290
      %s292 = sphi 0, %s290
      %s293 = sphi 0, %s292
      %s307 = sphi 0, %s293
      %s311 = sphi 0, %s311
      %s313 = sphi 0, %s311
      %s314 = sphi 0, %s313
      %s328 = sphi 0, %s314
      %s332 = sphi 0, %s332
      %s334 = sphi 0, %s332
      %s335 = sphi 0, %s334
      %s349 = sphi 0, %s335
      %s353 = sphi 0, %s353
      %s355 = sphi 0, %s353
      %s356 = sphi 0, %s355
      %s370 = sphi 0, %s356
      %s376 = sphi 0, %s378
      %s379 = sphi 0, %s376
      %s380 = sphi 0, %s379
      %s396 = sphi 0, %s380
    $region4: #{forward_pallas.1} parent=1 // loop_header_branch
      %28 = sbr.rel (%p26) target = $region8
    $region5: #{forward_pallas.1} parent=1 // loop_body
      %s30 = ssub.s32 %s25, 1
      %s31 = ssub.s32 %s25, 2
      %s32 = sadd.s32 %s25, 1
      %s33 = ssub.s32 %s25, %s32
      %p34 = scmp.eq.s32.totalorder %s33, 0
      %s36 = sadd.s32 %s35, 1
      %s37 = scalar_select %p34, %s35, %s36
      %p40 = pneg %p34
      %p41 = scmp.eq.s32.totalorder %s25, 1
      %p42 = por %p40, %p41
      %p43 = scmp.ne.s32.totalorder %s35, %s38
      %p44 = scmp.eq.s32.totalorder %s25, 0
      %p45 = por %p43, %p44
      %p46 = scmp.ne.s32.totalorder %s35, %s38
      %p47 = scmp.eq.s32.totalorder %s30, 1
      %p48 = por %p46, %p47
      %p49 = scmp.ne.s32.totalorder %s38, %s39
      %p50 = scmp.eq.s32.totalorder %s30, 0
      %p51 = por %p49, %p50
      %p52 = scmp.ne.s32.totalorder %s38, %s39
      %p53 = scmp.eq.s32.totalorder %s31, 1
      %p54 = por %p52, %p53
      %p56 = scmp.ne.s32.totalorder %s39, %s55
      %p57 = scmp.eq.s32.totalorder %s31, 0
      %p58 = por %p56, %p57
      %s60 = sadd.s32 %s59, 1
      %p63 = scmp.eq.s32.totalorder %s25, 1
      %p64 = scmp.ne.s32.totalorder %s59, %s61
      %p65 = scmp.eq.s32.totalorder %s25, 0
      %p66 = por %p64, %p65
      %p67 = scmp.ne.s32.totalorder %s59, %s61
      %p68 = scmp.eq.s32.totalorder %s30, 1
      %p69 = por %p67, %p68
      %p70 = scmp.ne.s32.totalorder %s61, %s62
      %p71 = scmp.eq.s32.totalorder %s30, 0
      %p72 = por %p70, %p71
      %p73 = scmp.ne.s32.totalorder %s61, %s62
      %p74 = scmp.eq.s32.totalorder %s31, 1
      %p75 = por %p73, %p74
      %p77 = scmp.ne.s32.totalorder %s62, %s76
      %p78 = scmp.eq.s32.totalorder %s31, 0
      %p79 = por %p77, %p78
      %s81 = sadd.s32 %s80, 1
      %p84 = scmp.eq.s32.totalorder %s25, 1
      %p85 = scmp.ne.s32.totalorder %s80, %s82
      %p86 = scmp.eq.s32.totalorder %s25, 0
      %p87 = por %p85, %p86
      %p88 = scmp.ne.s32.totalorder %s80, %s82
      %p89 = scmp.eq.s32.totalorder %s30, 1
      %p90 = por %p88, %p89
      %p91 = scmp.ne.s32.totalorder %s82, %s83
      %p92 = scmp.eq.s32.totalorder %s30, 0
      %p93 = por %p91, %p92
      %p94 = scmp.ne.s32.totalorder %s82, %s83
      %p95 = scmp.eq.s32.totalorder %s31, 1
      %p96 = por %p94, %p95
      %p98 = scmp.ne.s32.totalorder %s83, %s97
      %p99 = scmp.eq.s32.totalorder %s31, 0
      %p100 = por %p98, %p99
      %s102 = sadd.s32 %s101, 1
      %p105 = scmp.eq.s32.totalorder %s25, 1
      %p106 = scmp.ne.s32.totalorder %s101, %s103
      %p107 = scmp.eq.s32.totalorder %s25, 0
      %p108 = por %p106, %p107
      %p109 = scmp.ne.s32.totalorder %s101, %s103
      %p110 = scmp.eq.s32.totalorder %s30, 1
      %p111 = por %p109, %p110
      %p112 = scmp.ne.s32.totalorder %s103, %s104
      %p113 = scmp.eq.s32.totalorder %s30, 0
      %p114 = por %p112, %p113
      %p115 = scmp.ne.s32.totalorder %s103, %s104
      %p116 = scmp.eq.s32.totalorder %s31, 1
      %p117 = por %p115, %p116
      %p119 = scmp.ne.s32.totalorder %s104, %s118
      %p120 = scmp.eq.s32.totalorder %s31, 0
      %p121 = por %p119, %p120
      %s123 = sadd.s32 %s122, 1
      %p126 = scmp.eq.s32.totalorder %s25, 1
      %p127 = scmp.ne.s32.totalorder %s122, %s124
      %p128 = scmp.eq.s32.totalorder %s25, 0
      %p129 = por %p127, %p128
      %p130 = scmp.ne.s32.totalorder %s122, %s124
      %p131 = scmp.eq.s32.totalorder %s30, 1
      %p132 = por %p130, %p131
      %p133 = scmp.ne.s32.totalorder %s124, %s125
      %p134 = scmp.eq.s32.totalorder %s30, 0
      %p135 = por %p133, %p134
      %p136 = scmp.ne.s32.totalorder %s124, %s125
      %p137 = scmp.eq.s32.totalorder %s31, 1
      %p138 = por %p136, %p137
      %p140 = scmp.ne.s32.totalorder %s125, %s139
      %p141 = scmp.eq.s32.totalorder %s31, 0
      %p142 = por %p140, %p141
      %s144 = sadd.s32 %s143, 1
      %p147 = scmp.eq.s32.totalorder %s25, 1
      %p148 = scmp.ne.s32.totalorder %s143, %s145
      %p149 = scmp.eq.s32.totalorder %s25, 0
      %p150 = por %p148, %p149
      %p151 = scmp.ne.s32.totalorder %s143, %s145
      %p152 = scmp.eq.s32.totalorder %s30, 1
      %p153 = por %p151, %p152
      %p154 = scmp.ne.s32.totalorder %s145, %s146
      %p155 = scmp.eq.s32.totalorder %s30, 0
      %p156 = por %p154, %p155
      %p157 = scmp.ne.s32.totalorder %s145, %s146
      %p158 = scmp.eq.s32.totalorder %s31, 1
      %p159 = por %p157, %p158
      %p161 = scmp.ne.s32.totalorder %s146, %s160
      %p162 = scmp.eq.s32.totalorder %s31, 0
      %p163 = por %p161, %p162
      %s165 = sadd.s32 %s164, 1
      %p168 = scmp.eq.s32.totalorder %s25, 1
      %p169 = scmp.ne.s32.totalorder %s164, %s166
      %p170 = scmp.eq.s32.totalorder %s25, 0
      %p171 = por %p169, %p170
      %p172 = scmp.ne.s32.totalorder %s164, %s166
      %p173 = scmp.eq.s32.totalorder %s30, 1
      %p174 = por %p172, %p173
      %p175 = scmp.ne.s32.totalorder %s166, %s167
      %p176 = scmp.eq.s32.totalorder %s30, 0
      %p177 = por %p175, %p176
      %p178 = scmp.ne.s32.totalorder %s166, %s167
      %p179 = scmp.eq.s32.totalorder %s31, 1
      %p180 = por %p178, %p179
      %p182 = scmp.ne.s32.totalorder %s167, %s181
      %p183 = scmp.eq.s32.totalorder %s31, 0
      %p184 = por %p182, %p183
      %s186 = sadd.s32 %s185, 1
      %p189 = scmp.eq.s32.totalorder %s25, 1
      %p190 = scmp.ne.s32.totalorder %s185, %s187
      %p191 = scmp.eq.s32.totalorder %s25, 0
      %p192 = por %p190, %p191
      %p193 = scmp.ne.s32.totalorder %s185, %s187
      %p194 = scmp.eq.s32.totalorder %s30, 1
      %p195 = por %p193, %p194
      %p196 = scmp.ne.s32.totalorder %s187, %s188
      %p197 = scmp.eq.s32.totalorder %s30, 0
      %p198 = por %p196, %p197
      %p199 = scmp.ne.s32.totalorder %s187, %s188
      %p200 = scmp.eq.s32.totalorder %s31, 1
      %p201 = por %p199, %p200
      %p203 = scmp.ne.s32.totalorder %s188, %s202
      %p204 = scmp.eq.s32.totalorder %s31, 0
      %p205 = por %p203, %p204
      %s207 = sadd.s32 %s206, 1
      %p210 = scmp.eq.s32.totalorder %s25, 1
      %p211 = scmp.ne.s32.totalorder %s206, %s208
      %p212 = scmp.eq.s32.totalorder %s25, 0
      %p213 = por %p211, %p212
      %p214 = scmp.ne.s32.totalorder %s206, %s208
      %p215 = scmp.eq.s32.totalorder %s30, 1
      %p216 = por %p214, %p215
      %p217 = scmp.ne.s32.totalorder %s208, %s209
      %p218 = scmp.eq.s32.totalorder %s30, 0
      %p219 = por %p217, %p218
      %p220 = scmp.ne.s32.totalorder %s208, %s209
      %p221 = scmp.eq.s32.totalorder %s31, 1
      %p222 = por %p220, %p221
      %p224 = scmp.ne.s32.totalorder %s209, %s223
      %p225 = scmp.eq.s32.totalorder %s31, 0
      %p226 = por %p224, %p225
      %s228 = sadd.s32 %s227, 1
      %p231 = scmp.eq.s32.totalorder %s25, 1
      %p232 = scmp.ne.s32.totalorder %s227, %s229
      %p233 = scmp.eq.s32.totalorder %s25, 0
      %p234 = por %p232, %p233
      %p235 = scmp.ne.s32.totalorder %s227, %s229
      %p236 = scmp.eq.s32.totalorder %s30, 1
      %p237 = por %p235, %p236
      %p238 = scmp.ne.s32.totalorder %s229, %s230
      %p239 = scmp.eq.s32.totalorder %s30, 0
      %p240 = por %p238, %p239
      %p241 = scmp.ne.s32.totalorder %s229, %s230
      %p242 = scmp.eq.s32.totalorder %s31, 1
      %p243 = por %p241, %p242
      %p245 = scmp.ne.s32.totalorder %s230, %s244
      %p246 = scmp.eq.s32.totalorder %s31, 0
      %p247 = por %p245, %p246
      %s249 = sadd.s32 %s248, 1
      %p252 = scmp.eq.s32.totalorder %s25, 1
      %p253 = scmp.ne.s32.totalorder %s248, %s250
      %p254 = scmp.eq.s32.totalorder %s25, 0
      %p255 = por %p253, %p254
      %p256 = scmp.ne.s32.totalorder %s248, %s250
      %p257 = scmp.eq.s32.totalorder %s30, 1
      %p258 = por %p256, %p257
      %p259 = scmp.ne.s32.totalorder %s250, %s251
      %p260 = scmp.eq.s32.totalorder %s30, 0
      %p261 = por %p259, %p260
      %p262 = scmp.ne.s32.totalorder %s250, %s251
      %p263 = scmp.eq.s32.totalorder %s31, 1
      %p264 = por %p262, %p263
      %p266 = scmp.ne.s32.totalorder %s251, %s265
      %p267 = scmp.eq.s32.totalorder %s31, 0
      %p268 = por %p266, %p267
      %s270 = sadd.s32 %s269, 1
      %p273 = scmp.eq.s32.totalorder %s25, 1
      %p274 = scmp.ne.s32.totalorder %s269, %s271
      %p275 = scmp.eq.s32.totalorder %s25, 0
      %p276 = por %p274, %p275
      %p277 = scmp.ne.s32.totalorder %s269, %s271
      %p278 = scmp.eq.s32.totalorder %s30, 1
      %p279 = por %p277, %p278
      %p280 = scmp.ne.s32.totalorder %s271, %s272
      %p281 = scmp.eq.s32.totalorder %s30, 0
      %p282 = por %p280, %p281
      %p283 = scmp.ne.s32.totalorder %s271, %s272
      %p284 = scmp.eq.s32.totalorder %s31, 1
      %p285 = por %p283, %p284
      %p287 = scmp.ne.s32.totalorder %s272, %s286
      %p288 = scmp.eq.s32.totalorder %s31, 0
      %p289 = por %p287, %p288
      %s291 = sadd.s32 %s290, 1
      %p294 = scmp.eq.s32.totalorder %s25, 1
      %p295 = scmp.ne.s32.totalorder %s290, %s292
      %p296 = scmp.eq.s32.totalorder %s25, 0
      %p297 = por %p295, %p296
      %p298 = scmp.ne.s32.totalorder %s290, %s292
      %p299 = scmp.eq.s32.totalorder %s30, 1
      %p300 = por %p298, %p299
      %p301 = scmp.ne.s32.totalorder %s292, %s293
      %p302 = scmp.eq.s32.totalorder %s30, 0
      %p303 = por %p301, %p302
      %p304 = scmp.ne.s32.totalorder %s292, %s293
      %p305 = scmp.eq.s32.totalorder %s31, 1
      %p306 = por %p304, %p305
      %p308 = scmp.ne.s32.totalorder %s293, %s307
      %p309 = scmp.eq.s32.totalorder %s31, 0
      %p310 = por %p308, %p309
      %s312 = sadd.s32 %s311, 1
      %p315 = scmp.eq.s32.totalorder %s25, 1
      %p316 = scmp.ne.s32.totalorder %s311, %s313
      %p317 = scmp.eq.s32.totalorder %s25, 0
      %p318 = por %p316, %p317
      %p319 = scmp.ne.s32.totalorder %s311, %s313
      %p320 = scmp.eq.s32.totalorder %s30, 1
      %p321 = por %p319, %p320
      %p322 = scmp.ne.s32.totalorder %s313, %s314
      %p323 = scmp.eq.s32.totalorder %s30, 0
      %p324 = por %p322, %p323
      %p325 = scmp.ne.s32.totalorder %s313, %s314
      %p326 = scmp.eq.s32.totalorder %s31, 1
      %p327 = por %p325, %p326
      %p329 = scmp.ne.s32.totalorder %s314, %s328
      %p330 = scmp.eq.s32.totalorder %s31, 0
      %p331 = por %p329, %p330
      %s333 = sadd.s32 %s332, 1
      %p336 = scmp.eq.s32.totalorder %s25, 1
      %p337 = scmp.ne.s32.totalorder %s332, %s334
      %p338 = scmp.eq.s32.totalorder %s25, 0
      %p339 = por %p337, %p338
      %p340 = scmp.ne.s32.totalorder %s332, %s334
      %p341 = scmp.eq.s32.totalorder %s30, 1
      %p342 = por %p340, %p341
      %p343 = scmp.ne.s32.totalorder %s334, %s335
      %p344 = scmp.eq.s32.totalorder %s30, 0
      %p345 = por %p343, %p344
      %p346 = scmp.ne.s32.totalorder %s334, %s335
      %p347 = scmp.eq.s32.totalorder %s31, 1
      %p348 = por %p346, %p347
      %p350 = scmp.ne.s32.totalorder %s335, %s349
      %p351 = scmp.eq.s32.totalorder %s31, 0
      %p352 = por %p350, %p351
      %s354 = sadd.s32 %s353, 1
      %p357 = scmp.eq.s32.totalorder %s25, 1
      %p358 = scmp.ne.s32.totalorder %s353, %s355
      %p359 = scmp.eq.s32.totalorder %s25, 0
      %p360 = por %p358, %p359
      %p361 = scmp.ne.s32.totalorder %s353, %s355
      %p362 = scmp.eq.s32.totalorder %s30, 1
      %p363 = por %p361, %p362
      %p364 = scmp.ne.s32.totalorder %s355, %s356
      %p365 = scmp.eq.s32.totalorder %s30, 0
      %p366 = por %p364, %p365
      %p367 = scmp.ne.s32.totalorder %s355, %s356
      %p368 = scmp.eq.s32.totalorder %s31, 1
      %p369 = por %p367, %p368
      %p371 = scmp.ne.s32.totalorder %s356, %s370
      %p372 = scmp.eq.s32.totalorder %s31, 0
      %p373 = por %p371, %p372
      %s374 = ssub.s32 %s25, %s32
      %p375 = scmp.eq.s32.totalorder %s374, 0
      %s377 = sadd.s32 %s376, 1
      %s378 = scalar_select %p375, %s376, %s377
      %p381 = pneg %p375
      %p382 = scmp.eq.s32.totalorder %s25, 1
      %p383 = por %p381, %p382
      %p384 = scmp.ne.s32.totalorder %s376, %s379
      %p385 = scmp.eq.s32.totalorder %s25, 0
      %p386 = por %p384, %p385
      %p387 = scmp.ne.s32.totalorder %s376, %s379
      %p388 = scmp.eq.s32.totalorder %s30, 1
      %p389 = por %p387, %p388
      %p390 = scmp.ne.s32.totalorder %s379, %s380
      %p391 = scmp.eq.s32.totalorder %s30, 0
      %p392 = por %p390, %p391
      %p393 = scmp.ne.s32.totalorder %s379, %s380
      %p394 = scmp.eq.s32.totalorder %s31, 1
      %p395 = por %p393, %p394
      %p397 = scmp.ne.s32.totalorder %s380, %s396
      %p398 = scmp.eq.s32.totalorder %s31, 0
      %p399 = por %p397, %p398
      %p400 = scmp.le.s32.totalorder 1, %s25
      %p401 = scmp.lt.s32.totalorder %s25, 3
      %p402 = pnand %p400, %p401
      %p403 = pneg %p402
      // Predicated region
      $region9: #{forward_pallas.1} parent=5 // pred_check
        _
      $region10: #{forward_pallas.1} parent=5 // pred_check_branch
        %405 = sbr.rel (%p402) target = $region12
      $region11: #{forward_pallas.1} parent=5 // pred_region
        %s406 = ssub.s32 %s25, 1
        // Predicated region
        $region13: #{forward_pallas.1} parent=11 // pred_check
          %p407 = pneg %p72
        $region14: #{forward_pallas.1} parent=11 // pred_check_branch
          %409 = sbr.rel (%p407) target = $region16
        $region15: #{forward_pallas.1} parent=11 // pred_region
          _
        $region16: #{forward_pallas.1} parent=11 // pred_fallthru
          _
        // Predicated region
        $region17: #{forward_pallas.1} parent=11 // pred_check
          %p410 = pneg %p93
        $region18: #{forward_pallas.1} parent=11 // pred_check_branch
          %412 = sbr.rel (%p410) target = $region20
        $region19: #{forward_pallas.1} parent=11 // pred_region
          _
        $region20: #{forward_pallas.1} parent=11 // pred_fallthru
          _
        // Predicated region
        $region21: #{forward_pallas.1} parent=11 // pred_check
          %p413 = pneg %p114
        $region22: #{forward_pallas.1} parent=11 // pred_check_branch
          %415 = sbr.rel (%p413) target = $region24
        $region23: #{forward_pallas.1} parent=11 // pred_region
          _
        $region24: #{forward_pallas.1} parent=11 // pred_fallthru
          _
        // Predicated region
        $region25: #{forward_pallas.1} parent=11 // pred_check
          %p416 = pneg %p135
        $region26: #{forward_pallas.1} parent=11 // pred_check_branch
          %418 = sbr.rel (%p416) target = $region28
        $region27: #{forward_pallas.1} parent=11 // pred_region
          _
        $region28: #{forward_pallas.1} parent=11 // pred_fallthru
          _
        // Predicated region
        $region29: #{forward_pallas.1} parent=11 // pred_check
          %p419 = pneg %p156
        $region30: #{forward_pallas.1} parent=11 // pred_check_branch
          %421 = sbr.rel (%p419) target = $region32
        $region31: #{forward_pallas.1} parent=11 // pred_region
          _
        $region32: #{forward_pallas.1} parent=11 // pred_fallthru
          _
        // Predicated region
        $region33: #{forward_pallas.1} parent=11 // pred_check
          %p422 = pneg %p177
        $region34: #{forward_pallas.1} parent=11 // pred_check_branch
          %424 = sbr.rel (%p422) target = $region36
        $region35: #{forward_pallas.1} parent=11 // pred_region
          _
        $region36: #{forward_pallas.1} parent=11 // pred_fallthru
          _
        // Predicated region
        $region37: #{forward_pallas.1} parent=11 // pred_check
          %p425 = pneg %p198
        $region38: #{forward_pallas.1} parent=11 // pred_check_branch
          %427 = sbr.rel (%p425) target = $region40
        $region39: #{forward_pallas.1} parent=11 // pred_region
          _
        $region40: #{forward_pallas.1} parent=11 // pred_fallthru
          _
        // Predicated region
        $region41: #{forward_pallas.1} parent=11 // pred_check
          %p428 = pneg %p219
        $region42: #{forward_pallas.1} parent=11 // pred_check_branch
          %430 = sbr.rel (%p428) target = $region44
        $region43: #{forward_pallas.1} parent=11 // pred_region
          _
        $region44: #{forward_pallas.1} parent=11 // pred_fallthru
          _
        // Predicated region
        $region45: #{forward_pallas.1} parent=11 // pred_check
          %p431 = pneg %p240
        $region46: #{forward_pallas.1} parent=11 // pred_check_branch
          %433 = sbr.rel (%p431) target = $region48
        $region47: #{forward_pallas.1} parent=11 // pred_region
          _
        $region48: #{forward_pallas.1} parent=11 // pred_fallthru
          _
        // Predicated region
        $region49: #{forward_pallas.1} parent=11 // pred_check
          %p434 = pneg %p261
        $region50: #{forward_pallas.1} parent=11 // pred_check_branch
          %436 = sbr.rel (%p434) target = $region52
        $region51: #{forward_pallas.1} parent=11 // pred_region
          _
        $region52: #{forward_pallas.1} parent=11 // pred_fallthru
          _
        // Predicated region
        $region53: #{forward_pallas.1} parent=11 // pred_check
          %p437 = pneg %p282
        $region54: #{forward_pallas.1} parent=11 // pred_check_branch
          %439 = sbr.rel (%p437) target = $region56
        $region55: #{forward_pallas.1} parent=11 // pred_region
          _
        $region56: #{forward_pallas.1} parent=11 // pred_fallthru
          _
        // Predicated region
        $region57: #{forward_pallas.1} parent=11 // pred_check
          %p440 = pneg %p303
        $region58: #{forward_pallas.1} parent=11 // pred_check_branch
          %442 = sbr.rel (%p440) target = $region60
        $region59: #{forward_pallas.1} parent=11 // pred_region
          _
        $region60: #{forward_pallas.1} parent=11 // pred_fallthru
          _
        // Predicated region
        $region61: #{forward_pallas.1} parent=11 // pred_check
          %p443 = pneg %p324
        $region62: #{forward_pallas.1} parent=11 // pred_check_branch
          %445 = sbr.rel (%p443) target = $region64
        $region63: #{forward_pallas.1} parent=11 // pred_region
          _
        $region64: #{forward_pallas.1} parent=11 // pred_fallthru
          _
        // Predicated region
        $region65: #{forward_pallas.1} parent=11 // pred_check
          %p446 = pneg %p345
        $region66: #{forward_pallas.1} parent=11 // pred_check_branch
          %448 = sbr.rel (%p446) target = $region68
        $region67: #{forward_pallas.1} parent=11 // pred_region
          _
        $region68: #{forward_pallas.1} parent=11 // pred_fallthru
          _
        // Predicated region
        $region69: #{forward_pallas.1} parent=11 // pred_check
          %p449 = pneg %p366
        $region70: #{forward_pallas.1} parent=11 // pred_check_branch
          %451 = sbr.rel (%p449) target = $region72
        $region71: #{forward_pallas.1} parent=11 // pred_region
          _
        $region72: #{forward_pallas.1} parent=11 // pred_fallthru
          _
      $region12: #{forward_pallas.1} parent=5 // pred_fallthru
        _
      %p452 = scmp.lt.s32.totalorder %s25, 2
      // Predicated region
      $region73: #{forward_pallas.1} parent=5 // pred_check
        %p453 = pneg %p452
      $region74: #{forward_pallas.1} parent=5 // pred_check_branch
        %455 = sbr.rel (%p453) target = $region76
      $region75: #{forward_pallas.1} parent=5 // pred_region
        // Predicated region
        $region77: #{forward_pallas.1} parent=75 // pred_check
          %p456 = pneg %p45
        $region78: #{forward_pallas.1} parent=75 // pred_check_branch
          %458 = sbr.rel (%p456) target = $region80
        $region79: #{forward_pallas.1} parent=75 // pred_region
          %p459 = scmp.lt.s32.totalorder %s25, 1
          %s460 = scalar_select %p459, %s25, 1
          %s461 = smul.addr %s460, 2
          %s462 = smul.addr %s461, 8
          %s463 = scalar_lea.vmem %s0, %s462
        $region80: #{forward_pallas.1} parent=75 // pred_fallthru
          _
      $region76: #{forward_pallas.1} parent=5 // pred_fallthru
        _
      %p464 = scmp.le.s32.totalorder 1, %s25
      %p465 = scmp.lt.s32.totalorder %s25, 3
      %p466 = pnand %p464, %p465
      %p467 = pneg %p466
      // Predicated region
      $region81: #{forward_pallas.1} parent=5 // pred_check
        _
      $region82: #{forward_pallas.1} parent=5 // pred_check_branch
        %469 = sbr.rel (%p466) target = $region84
      $region83: #{forward_pallas.1} parent=5 // pred_region
        %s470 = ssub.s32 %s25, 1
        %p471 = scmp.lt.s32.totalorder %s30, 1
        %s472 = scalar_select %p471, %s30, 1
        %s473 = smul.addr %s472, 2
        %s474 = smul.addr %s473, 8
        %s475 = scalar_lea.vmem %s0, %s474
        %p476 = pneg %p51
        %p477 = pneg %p48
        %p478 = pneg %p72
        %p479 = pneg %p69
        %p480 = pneg %p93
        %p481 = pneg %p90
        %p482 = pneg %p114
        %p483 = pneg %p111
        %p484 = pneg %p135
        %p485 = pneg %p132
        %p486 = pneg %p156
        %p487 = pneg %p153
        %p488 = pneg %p177
        %p489 = pneg %p174
        %p490 = pneg %p198
        %p491 = pneg %p195
        %p492 = pneg %p219
        %p493 = pneg %p216
        %p494 = pneg %p240
        %p495 = pneg %p237
        %p496 = pneg %p261
        %p497 = pneg %p258
        %p498 = pneg %p282
        %p499 = pneg %p279
        %p500 = pneg %p303
        %p501 = pneg %p300
        %p502 = pneg %p324
        %p503 = pneg %p321
        %p504 = pneg %p345
        %p505 = pneg %p342
        %p506 = pneg %p366
        %p507 = pneg %p363
        %p508 = pneg %p392
        %p509 = pneg %p389
        %s510 = sand.u32 %s379, 1
        %s511 = scalar_lea.sflag [#allocation3], %s510
        %s512 = sand.u32 %s379, 1
        %s513 = scalar_lea.vmem [#allocation2], %s512
        %p514 = scmp.lt.s32.totalorder %s30, 1
        %s515 = scalar_select %p514, %s30, 1
        %s516 = smul.addr %s515, 2
        %s517 = smul.addr %s516, 8
        %s518 = scalar_lea.vmem %s0, %s517
        %v520 = vld [vmem:[%s518] sm:$0xff]
        %v521 = vld [vmem:[%s518 + $0x8] sm:$0xff]
        %v522 = vpack.c.bf16 %v520, %v520
        %v523 = vpack.c.bf16 %v521, %v521
        %v524 = vld [vmem:[%s1] sm:$0xf]
        %v525 = vld [vmem:[%s1 + $0x4] sm:$0xf]
        %v526 = vld [vmem:[%s2] sm:$0xff]
        %v527 = vld [vmem:[%s2 + $0x8] sm:$0xff]
        %529 = vset.pattern.permute.xlu0 0
        %530 = vperm.xlu0 %529, %v526
        %v531 = vpop.permute.xlu0 %530
        %534 = vset.pattern.permute.xlu0 0
        %535 = vperm.xlu0 %534, %v527
        %v536 = vpop.permute.xlu0 %535
        %v540 = vunpack.c.l.b16 %v524
        %v541 = vunpack.c.l.b16 %v525
        %v542 = vpack.c.b16 %v541, %v540
        %vm543 = vcmask 64512
        %v545 = vsel %vm543, %v542, 0
        %vm547 = vcmask 1043456
        %v549 = vsel %vm547, %v522, 0
        %v552 = vsel %vm547, %v523, 0
        %554 = vmatprep.subr.bf16.mxu0 0
        %555 = vmatpush1.bf16.msra.mxu0 0
        %556 = vmatprep.subr.bf16.mxu0 0
        %557 = vmatpush1.bf16.msra.mxu0 0
        %558 = vmatprep.subr.bf16.mxu0 0
        %559 = vmatpush1.bf16.msra.mxu0 0
        %560 = vmatprep.subr.bf16.mxu0 0
        %561 = vmatpush1.bf16.msra.mxu0 0
        %562 = vmatprep.subr.bf16.mxu0 0
        %563 = vmatpush1.bf16.msra.mxu0 0
        %564 = vmatprep.subr.bf16.mxu0 0
        %565 = vmatpush1.bf16.msra.mxu0 0
        %566 = vmatprep.subr.bf16.mxu0 0
        %567 = vmatpush1.bf16.msra.mxu0 0
        %568 = vmatprep.subr.bf16.mxu0 %v552
        %569 = vmatpush1.bf16.msra.mxu0 %v549
        %570 = vmatprep.subr.bf16.mxu0 0
        %571 = vmatpush2.bf16.msra.mxu0 0
        %572 = vmatprep.subr.bf16.mxu0 0
        %573 = vmatpush2.bf16.msra.mxu0 0
        %574 = vmatprep.subr.bf16.mxu0 0
        %575 = vmatpush2.bf16.msra.mxu0 0
        %576 = vmatprep.subr.bf16.mxu0 0
        %577 = vmatpush2.bf16.msra.mxu0 0
        %578 = vmatprep.subr.bf16.mxu0 0
        %579 = vmatpush2.bf16.msra.mxu0 0
        %580 = vmatprep.subr.bf16.mxu0 0
        %581 = vmatpush2.bf16.msra.mxu0 0
        %582 = vmatprep.subr.bf16.mxu0 0
        %583 = vmatpush2.bf16.msra.mxu0 0
        %584 = vmatprep.subr.bf16.mxu0 0
        %585 = vmatpush2.bf16.msra.mxu0 0
        %586 = vmatprep.mubr.bf16.mxu0 0
        %587 = vmatmul.mubr.bf16.gmra.mxu0 %v545
        %v588 = vpop.f32.mrf.mxu0
        %v589 = vadd.f32 %v531, %v588
        %v590 = vpop.f32.mrf.mxu0
        %v591 = vadd.f32 %v531, %v590
        %v592 = vpop.f32.mrf.mxu0
        %v593 = vadd.f32 %v536, %v592
        %v594 = vpop.f32.mrf.mxu0
        %v595 = vadd.f32 %v536, %v594
        %596 = vdwg.mxu0
        %v597 = vpack.c.bf16 %v593, %v589
        %v598 = vpack.c.bf16 %v595, %v591
        %v599 = vld [vmem:[%s7] sm:$0xff]
        %v600 = vld [vmem:[%s7 + $0x8] sm:$0x11]
        %602 = vrot.lane.b32.xlu0 %v598, 17
        %v603 = vpop.permute.xlu0 %602
        %605 = vrot.lane.b32.xlu0 %v597, 17
        %v606 = vpop.permute.xlu0 %605
        %vm607 = vcmask 138240
        %v608 = vsel %vm607, %v606, %v603
        %vm610 = vcmask 138240
        %v613 = vsel %vm610, %v603, %v606
        %v616 = vunpack.c.l.b16 %v599
        %v617 = vunpack.c.h.b16 %v599
        %v618 = vpack.c.b16 %v616, %v616
        %v619 = vpack.c.b16 %v617, %v617
        %v621 = vpack.i.b16 %v618, %v618
        %v623 = vlaneseq
        %v624 = vshrl.u32 %v623, 7
        %v625 = vsub.s32 0, %v624
        %v626 = vrot.slane %v621, %v625
        %v628 = vpack.i.b16 %v619, %v619
        %v630 = vlaneseq
        %v631 = vshrl.u32 %v630, 7
        %v632 = vsub.s32 0, %v631
        %v633 = vrot.slane %v628, %v632
        %v634 = vmul.bf16 %v613, %v626
        %v635 = vmul.bf16 %v608, %v633
        %v636 = vld [vmem:[%s3] sm:$0xf]
        %v637 = vld [vmem:[%s3 + $0x4] sm:$0xf]
        %v638 = vld [vmem:[%s3 + $0x8] sm:$0xf]
        %v639 = vld [vmem:[%s3 + $0xc] sm:$0xf]
        %v640 = vld [vmem:[%s3 + $0x10] sm:$0xf]
        %v641 = vld [vmem:[%s3 + $0x14] sm:$0xf]
        %v642 = vld [vmem:[%s3 + $0x18] sm:$0xf]
        %v643 = vld [vmem:[%s3 + $0x1c] sm:$0xf]
        %v644 = vld [vmem:[%s3 + $0x20] sm:$0xf]
        %v645 = vld [vmem:[%s3 + $0x24] sm:$0xf]
        %646 = vrot.lane.b32.xlu0 %v598, 16
        %v647 = vpop.permute.xlu0 %646
        %648 = vrot.lane.b32.xlu0 %v597, 16
        %v649 = vpop.permute.xlu0 %648
        %vm650 = vcmask 130048
        %v651 = vsel %vm650, %v649, %v647
        %vm653 = vcmask 130048
        %v656 = vsel %vm653, %v647, %v649
        %v658 = vshrl.u32 %v618, 16
        %v659 = vpack.i.b16 %v658, %v658
        %v661 = vlaneseq
        %v662 = vshrl.u32 %v661, 7
        %v663 = vsub.s32 0, %v662
        %v664 = vrot.slane %v659, %v663
        %v665 = vshrl.u32 %v619, 16
        %v666 = vpack.i.b16 %v665, %v665
        %v668 = vlaneseq
        %v669 = vshrl.u32 %v668, 7
        %v670 = vsub.s32 0, %v669
        %v671 = vrot.slane %v666, %v670
        %v672 = vmul.bf16 %v656, %v664
        %v673 = vmul.bf16 %v651, %v671
        %s674 = scalar_lea.vmem %s3, 40
        %v675 = vld [vmem:[%s674] sm:$0xf]
        %v676 = vld [vmem:[%s674 + $0x4] sm:$0xf]
        %v677 = vld [vmem:[%s674 + $0x8] sm:$0xf]
        %v678 = vld [vmem:[%s674 + $0xc] sm:$0xf]
        %v679 = vld [vmem:[%s674 + $0x10] sm:$0xf]
        %v680 = vld [vmem:[%s674 + $0x14] sm:$0xf]
        %v681 = vld [vmem:[%s674 + $0x18] sm:$0xf]
        %v682 = vld [vmem:[%s674 + $0x1c] sm:$0xf]
        %v683 = vld [vmem:[%s674 + $0x20] sm:$0xf]
        %v684 = vld [vmem:[%s674 + $0x24] sm:$0xf]
        %v695 = vunpack.c.l.b16 %v675
        %v696 = vunpack.c.l.b16 %v676
        %v697 = vunpack.c.l.b16 %v677
        %v698 = vunpack.c.l.b16 %v678
        %v699 = vunpack.c.l.b16 %v679
        %v700 = vunpack.c.l.b16 %v680
        %v701 = vunpack.c.l.b16 %v681
        %v702 = vunpack.c.l.b16 %v682
        %v703 = vunpack.c.l.b16 %v683
        %v704 = vunpack.c.l.b16 %v684
        %v705 = vpack.c.b16 %v696, %v695
        %v706 = vpack.c.b16 %v698, %v697
        %v707 = vpack.c.b16 %v700, %v699
        %v708 = vpack.c.b16 %v702, %v701
        %v709 = vpack.c.b16 %v704, %v703
        %v711 = vsel %vm653, %v705, 0
        %v714 = vsel %vm653, %v706, 0
        %v717 = vsel %vm653, %v707, 0
        %v720 = vsel %vm653, %v708, 0
        %v723 = vsel %vm653, %v709, 0
        %725 = vmatprep.subr.bf16.mxu0 0
        %726 = vmatpush1.bf16.msra.mxu0 0
        %727 = vmatprep.subr.bf16.mxu0 0
        %728 = vmatpush1.bf16.msra.mxu0 0
        %729 = vmatprep.subr.bf16.mxu0 0
        %730 = vmatpush1.bf16.msra.mxu0 0
        %731 = vmatprep.subr.bf16.mxu0 0
        %732 = vmatpush1.bf16.msra.mxu0 0
        %733 = vmatprep.subr.bf16.mxu0 0
        %734 = vmatpush1.bf16.msra.mxu0 0
        %735 = vmatprep.subr.bf16.mxu0 0
        %736 = vmatpush1.bf16.msra.mxu0 0
        %737 = vmatprep.subr.bf16.mxu0 0
        %738 = vmatpush1.bf16.msra.mxu0 0
        %739 = vmatprep.subr.bf16.mxu0 %v673
        %740 = vmatpush1.bf16.msra.mxu0 %v672
        %741 = vmatprep.subr.bf16.mxu0 0
        %742 = vmatpush2.bf16.msra.mxu0 0
        %743 = vmatprep.subr.bf16.mxu0 0
        %744 = vmatpush2.bf16.msra.mxu0 0
        %745 = vmatprep.subr.bf16.mxu0 0
        %746 = vmatpush2.bf16.msra.mxu0 0
        %747 = vmatprep.subr.bf16.mxu0 0
        %748 = vmatpush2.bf16.msra.mxu0 0
        %749 = vmatprep.subr.bf16.mxu0 0
        %750 = vmatpush2.bf16.msra.mxu0 0
        %751 = vmatprep.subr.bf16.mxu0 0
        %752 = vmatpush2.bf16.msra.mxu0 0
        %753 = vmatprep.subr.bf16.mxu0 0
        %754 = vmatpush2.bf16.msra.mxu0 0
        %755 = vmatprep.subr.bf16.mxu0 0
        %756 = vmatpush2.bf16.msra.mxu0 0
        %757 = vmatprep.mubr.bf16.mxu0 0
        %758 = vmatmul.mubr.bf16.gmra.mxu0 %v711
        %v759 = vpop.f32.mrf.mxu0
        %v760 = vadd.f32 0.0, %v759
        %v761 = vpop.f32.mrf.mxu0
        %v762 = vadd.f32 0.0, %v761
        %v763 = vpop.f32.mrf.mxu0
        %v764 = vadd.f32 0.0, %v763
        %v765 = vpop.f32.mrf.mxu0
        %v766 = vadd.f32 0.0, %v765
        %767 = vmatprep.mubr.bf16.mxu0 0
        %768 = vmatmul.mubr.bf16.gmra.mxu0 %v714
        %v769 = vpop.f32.mrf.mxu0
        %v770 = vadd.f32 0.0, %v769
        %v771 = vpop.f32.mrf.mxu0
        %v772 = vadd.f32 0.0, %v771
        %v773 = vpop.f32.mrf.mxu0
        %v774 = vadd.f32 0.0, %v773
        %v775 = vpop.f32.mrf.mxu0
        %v776 = vadd.f32 0.0, %v775
        %777 = vmatprep.mubr.bf16.mxu0 0
        %778 = vmatmul.mubr.bf16.gmra.mxu0 %v717
        %v779 = vpop.f32.mrf.mxu0
        %v780 = vadd.f32 0.0, %v779
        %v781 = vpop.f32.mrf.mxu0
        %v782 = vadd.f32 0.0, %v781
        %v783 = vpop.f32.mrf.mxu0
        %v784 = vadd.f32 0.0, %v783
        %v785 = vpop.f32.mrf.mxu0
        %v786 = vadd.f32 0.0, %v785
        %787 = vmatprep.mubr.bf16.mxu0 0
        %788 = vmatmul.mubr.bf16.gmra.mxu0 %v720
        %v789 = vpop.f32.mrf.mxu0
        %v790 = vadd.f32 0.0, %v789
        %v791 = vpop.f32.mrf.mxu0
        %v792 = vadd.f32 0.0, %v791
        %v793 = vpop.f32.mrf.mxu0
        %v794 = vadd.f32 0.0, %v793
        %v795 = vpop.f32.mrf.mxu0
        %v796 = vadd.f32 0.0, %v795
        %797 = vmatprep.mubr.bf16.mxu0 0
        %798 = vmatmul.mubr.bf16.gmra.mxu0 %v723
        %v799 = vpop.f32.mrf.mxu0
        %v800 = vadd.f32 0.0, %v799
        %v801 = vpop.f32.mrf.mxu0
        %v802 = vadd.f32 0.0, %v801
        %v803 = vpop.f32.mrf.mxu0
        %v804 = vadd.f32 0.0, %v803
        %v805 = vpop.f32.mrf.mxu0
        %v806 = vadd.f32 0.0, %v805
        %807 = vdwg.mxu0
        %v818 = vunpack.c.l.b16 %v636
        %v819 = vunpack.c.l.b16 %v637
        %v820 = vunpack.c.l.b16 %v638
        %v821 = vunpack.c.l.b16 %v639
        %v822 = vunpack.c.l.b16 %v640
        %v823 = vunpack.c.l.b16 %v641
        %v824 = vunpack.c.l.b16 %v642
        %v825 = vunpack.c.l.b16 %v643
        %v826 = vunpack.c.l.b16 %v644
        %v827 = vunpack.c.l.b16 %v645
        %v828 = vpack.c.b16 %v819, %v818
        %v829 = vpack.c.b16 %v821, %v820
        %v830 = vpack.c.b16 %v823, %v822
        %v831 = vpack.c.b16 %v825, %v824
        %v832 = vpack.c.b16 %v827, %v826
        %v834 = vsel %vm653, %v828, 0
        %v837 = vsel %vm653, %v829, 0
        %v840 = vsel %vm653, %v830, 0
        %v843 = vsel %vm653, %v831, 0
        %v846 = vsel %vm653, %v832, 0
        %848 = vmatprep.subr.bf16.mxu0 0
        %849 = vmatpush1.bf16.msra.mxu0 0
        %850 = vmatprep.subr.bf16.mxu0 0
        %851 = vmatpush1.bf16.msra.mxu0 0
        %852 = vmatprep.subr.bf16.mxu0 0
        %853 = vmatpush1.bf16.msra.mxu0 0
        %854 = vmatprep.subr.bf16.mxu0 0
        %855 = vmatpush1.bf16.msra.mxu0 0
        %856 = vmatprep.subr.bf16.mxu0 0
        %857 = vmatpush1.bf16.msra.mxu0 0
        %858 = vmatprep.subr.bf16.mxu0 0
        %859 = vmatpush1.bf16.msra.mxu0 0
        %860 = vmatprep.subr.bf16.mxu0 0
        %861 = vmatpush1.bf16.msra.mxu0 0
        %862 = vmatprep.subr.bf16.mxu0 %v635
        %863 = vmatpush1.bf16.msra.mxu0 %v634
        %864 = vmatprep.subr.bf16.mxu0 0
        %865 = vmatpush2.bf16.msra.mxu0 0
        %866 = vmatprep.subr.bf16.mxu0 0
        %867 = vmatpush2.bf16.msra.mxu0 0
        %868 = vmatprep.subr.bf16.mxu0 0
        %869 = vmatpush2.bf16.msra.mxu0 0
        %870 = vmatprep.subr.bf16.mxu0 0
        %871 = vmatpush2.bf16.msra.mxu0 0
        %872 = vmatprep.subr.bf16.mxu0 0
        %873 = vmatpush2.bf16.msra.mxu0 0
        %874 = vmatprep.subr.bf16.mxu0 0
        %875 = vmatpush2.bf16.msra.mxu0 0
        %876 = vmatprep.subr.bf16.mxu0 0
        %877 = vmatpush2.bf16.msra.mxu0 0
        %878 = vmatprep.subr.bf16.mxu0 0
        %879 = vmatpush2.bf16.msra.mxu0 0
        %880 = vmatprep.mubr.bf16.mxu0 0
        %881 = vmatmul.mubr.bf16.gmra.mxu0 %v834
        %v882 = vpop.f32.mrf.mxu0
        %v883 = vadd.f32 %v760, %v882
        %v884 = vpop.f32.mrf.mxu0
        %v885 = vadd.f32 %v762, %v884
        %v886 = vpop.f32.mrf.mxu0
        %v887 = vadd.f32 %v764, %v886
        %v888 = vpop.f32.mrf.mxu0
        %v889 = vadd.f32 %v766, %v888
        %890 = vmatprep.mubr.bf16.mxu0 0
        %891 = vmatmul.mubr.bf16.gmra.mxu0 %v837
        %v892 = vpop.f32.mrf.mxu0
        %v893 = vadd.f32 %v770, %v892
        %v894 = vpop.f32.mrf.mxu0
        %v895 = vadd.f32 %v772, %v894
        %v896 = vpop.f32.mrf.mxu0
        %v897 = vadd.f32 %v774, %v896
        %v898 = vpop.f32.mrf.mxu0
        %v899 = vadd.f32 %v776, %v898
        %900 = vmatprep.mubr.bf16.mxu0 0
        %901 = vmatmul.mubr.bf16.gmra.mxu0 %v840
        %v902 = vpop.f32.mrf.mxu0
        %v903 = vadd.f32 %v780, %v902
        %v904 = vpop.f32.mrf.mxu0
        %v905 = vadd.f32 %v782, %v904
        %v906 = vpop.f32.mrf.mxu0
        %v907 = vadd.f32 %v784, %v906
        %v908 = vpop.f32.mrf.mxu0
        %v909 = vadd.f32 %v786, %v908
        %910 = vmatprep.mubr.bf16.mxu0 0
        %911 = vmatmul.mubr.bf16.gmra.mxu0 %v843
        %v912 = vpop.f32.mrf.mxu0
        %v913 = vadd.f32 %v790, %v912
        %v914 = vpop.f32.mrf.mxu0
        %v915 = vadd.f32 %v792, %v914
        %v916 = vpop.f32.mrf.mxu0
        %v917 = vadd.f32 %v794, %v916
        %v918 = vpop.f32.mrf.mxu0
        %v919 = vadd.f32 %v796, %v918
        %920 = vmatprep.mubr.bf16.mxu0 0
        %921 = vmatmul.mubr.bf16.gmra.mxu0 %v846
        %v922 = vpop.f32.mrf.mxu0
        %v923 = vadd.f32 %v800, %v922
        %v924 = vpop.f32.mrf.mxu0
        %v925 = vadd.f32 %v802, %v924
        %v926 = vpop.f32.mrf.mxu0
        %v927 = vadd.f32 %v804, %v926
        %v928 = vpop.f32.mrf.mxu0
        %v929 = vadd.f32 %v806, %v928
        %930 = vdwg.mxu0
        %931 = vrot.lane.b32.xlu0 %v598, 15
        %v932 = vpop.permute.xlu0 %931
        %933 = vrot.lane.b32.xlu0 %v597, 15
        %v934 = vpop.permute.xlu0 %933
        %vm935 = vcmask 121856
        %v936 = vsel %vm935, %v934, %v932
        %vm938 = vcmask 121856
        %v941 = vsel %vm938, %v932, %v934
        %v943 = vlaneseq
        %v944 = vshrl.u32 %v943, 7
        %v945 = vsub.s32 1, %v944
        %v946 = vrot.slane %v621, %v945
        %v947 = vlaneseq
        %v948 = vshrl.u32 %v947, 7
        %v949 = vsub.s32 1, %v948
        %v950 = vrot.slane %v628, %v949
        %v951 = vmul.bf16 %v941, %v946
        %v952 = vmul.bf16 %v936, %v950
        %s953 = scalar_lea.vmem %s3, 80
        %v954 = vld [vmem:[%s953] sm:$0xf]
        %v955 = vld [vmem:[%s953 + $0x4] sm:$0xf]
        %v956 = vld [vmem:[%s953 + $0x8] sm:$0xf]
        %v957 = vld [vmem:[%s953 + $0xc] sm:$0xf]
        %v958 = vld [vmem:[%s953 + $0x10] sm:$0xf]
        %v959 = vld [vmem:[%s953 + $0x14] sm:$0xf]
        %v960 = vld [vmem:[%s953 + $0x18] sm:$0xf]
        %v961 = vld [vmem:[%s953 + $0x1c] sm:$0xf]
        %v962 = vld [vmem:[%s953 + $0x20] sm:$0xf]
        %v963 = vld [vmem:[%s953 + $0x24] sm:$0xf]
        %v974 = vunpack.c.l.b16 %v954
        %v975 = vunpack.c.l.b16 %v955
        %v976 = vunpack.c.l.b16 %v956
        %v977 = vunpack.c.l.b16 %v957
        %v978 = vunpack.c.l.b16 %v958
        %v979 = vunpack.c.l.b16 %v959
        %v980 = vunpack.c.l.b16 %v960
        %v981 = vunpack.c.l.b16 %v961
        %v982 = vunpack.c.l.b16 %v962
        %v983 = vunpack.c.l.b16 %v963
        %v984 = vpack.c.b16 %v975, %v974
        %v985 = vpack.c.b16 %v977, %v976
        %v986 = vpack.c.b16 %v979, %v978
        %v987 = vpack.c.b16 %v981, %v980
        %v988 = vpack.c.b16 %v983, %v982
        %v990 = vsel %vm653, %v984, 0
        %v993 = vsel %vm653, %v985, 0
        %v996 = vsel %vm653, %v986, 0
        %v999 = vsel %vm653, %v987, 0
        %v1002 = vsel %vm653, %v988, 0
        %1004 = vmatprep.subr.bf16.mxu0 0
        %1005 = vmatpush1.bf16.msra.mxu0 0
        %1006 = vmatprep.subr.bf16.mxu0 0
        %1007 = vmatpush1.bf16.msra.mxu0 0
        %1008 = vmatprep.subr.bf16.mxu0 0
        %1009 = vmatpush1.bf16.msra.mxu0 0
        %1010 = vmatprep.subr.bf16.mxu0 0
        %1011 = vmatpush1.bf16.msra.mxu0 0
        %1012 = vmatprep.subr.bf16.mxu0 0
        %1013 = vmatpush1.bf16.msra.mxu0 0
        %1014 = vmatprep.subr.bf16.mxu0 0
        %1015 = vmatpush1.bf16.msra.mxu0 0
        %1016 = vmatprep.subr.bf16.mxu0 0
        %1017 = vmatpush1.bf16.msra.mxu0 0
        %1018 = vmatprep.subr.bf16.mxu0 %v952
        %1019 = vmatpush1.bf16.msra.mxu0 %v951
        %1020 = vmatprep.subr.bf16.mxu0 0
        %1021 = vmatpush2.bf16.msra.mxu0 0
        %1022 = vmatprep.subr.bf16.mxu0 0
        %1023 = vmatpush2.bf16.msra.mxu0 0
        %1024 = vmatprep.subr.bf16.mxu0 0
        %1025 = vmatpush2.bf16.msra.mxu0 0
        %1026 = vmatprep.subr.bf16.mxu0 0
        %1027 = vmatpush2.bf16.msra.mxu0 0
        %1028 = vmatprep.subr.bf16.mxu0 0
        %1029 = vmatpush2.bf16.msra.mxu0 0
        %1030 = vmatprep.subr.bf16.mxu0 0
        %1031 = vmatpush2.bf16.msra.mxu0 0
        %1032 = vmatprep.subr.bf16.mxu0 0
        %1033 = vmatpush2.bf16.msra.mxu0 0
        %1034 = vmatprep.subr.bf16.mxu0 0
        %1035 = vmatpush2.bf16.msra.mxu0 0
        %1036 = vmatprep.mubr.bf16.mxu0 0
        %1037 = vmatmul.mubr.bf16.gmra.mxu0 %v990
        %v1038 = vpop.f32.mrf.mxu0
        %v1039 = vadd.f32 0.0, %v1038
        %v1040 = vpop.f32.mrf.mxu0
        %v1041 = vadd.f32 0.0, %v1040
        %v1042 = vpop.f32.mrf.mxu0
        %v1043 = vadd.f32 0.0, %v1042
        %v1044 = vpop.f32.mrf.mxu0
        %v1045 = vadd.f32 0.0, %v1044
        %1046 = vmatprep.mubr.bf16.mxu0 0
        %1047 = vmatmul.mubr.bf16.gmra.mxu0 %v993
        %v1048 = vpop.f32.mrf.mxu0
        %v1049 = vadd.f32 0.0, %v1048
        %v1050 = vpop.f32.mrf.mxu0
        %v1051 = vadd.f32 0.0, %v1050
        %v1052 = vpop.f32.mrf.mxu0
        %v1053 = vadd.f32 0.0, %v1052
        %v1054 = vpop.f32.mrf.mxu0
        %v1055 = vadd.f32 0.0, %v1054
        %1056 = vmatprep.mubr.bf16.mxu0 0
        %1057 = vmatmul.mubr.bf16.gmra.mxu0 %v996
        %v1058 = vpop.f32.mrf.mxu0
        %v1059 = vadd.f32 0.0, %v1058
        %v1060 = vpop.f32.mrf.mxu0
        %v1061 = vadd.f32 0.0, %v1060
        %v1062 = vpop.f32.mrf.mxu0
        %v1063 = vadd.f32 0.0, %v1062
        %v1064 = vpop.f32.mrf.mxu0
        %v1065 = vadd.f32 0.0, %v1064
        %1066 = vmatprep.mubr.bf16.mxu0 0
        %1067 = vmatmul.mubr.bf16.gmra.mxu0 %v999
        %v1068 = vpop.f32.mrf.mxu0
        %v1069 = vadd.f32 0.0, %v1068
        %v1070 = vpop.f32.mrf.mxu0
        %v1071 = vadd.f32 0.0, %v1070
        %v1072 = vpop.f32.mrf.mxu0
        %v1073 = vadd.f32 0.0, %v1072
        %v1074 = vpop.f32.mrf.mxu0
        %v1075 = vadd.f32 0.0, %v1074
        %1076 = vmatprep.mubr.bf16.mxu0 0
        %1077 = vmatmul.mubr.bf16.gmra.mxu0 %v1002
        %v1078 = vpop.f32.mrf.mxu0
        %v1079 = vadd.f32 0.0, %v1078
        %v1080 = vpop.f32.mrf.mxu0
        %v1081 = vadd.f32 0.0, %v1080
        %v1082 = vpop.f32.mrf.mxu0
        %v1083 = vadd.f32 0.0, %v1082
        %v1084 = vpop.f32.mrf.mxu0
        %v1085 = vadd.f32 0.0, %v1084
        %1086 = vdwg.mxu0
        %v1087 = vadd.f32 %v883, %v1039
        %v1088 = vadd.f32 %v885, %v1041
        %v1089 = vadd.f32 %v887, %v1043
        %v1090 = vadd.f32 %v889, %v1045
        %v1091 = vadd.f32 %v893, %v1049
        %v1092 = vadd.f32 %v895, %v1051
        %v1093 = vadd.f32 %v897, %v1053
        %v1094 = vadd.f32 %v899, %v1055
        %v1095 = vadd.f32 %v903, %v1059
        %v1096 = vadd.f32 %v905, %v1061
        %v1097 = vadd.f32 %v907, %v1063
        %v1098 = vadd.f32 %v909, %v1065
        %v1099 = vadd.f32 %v913, %v1069
        %v1100 = vadd.f32 %v915, %v1071
        %v1101 = vadd.f32 %v917, %v1073
        %v1102 = vadd.f32 %v919, %v1075
        %v1103 = vadd.f32 %v923, %v1079
        %v1104 = vadd.f32 %v925, %v1081
        %v1105 = vadd.f32 %v927, %v1083
        %v1106 = vadd.f32 %v929, %v1085
        %1107 = vrot.lane.b32.xlu0 %v598, 1
        %v1108 = vpop.permute.xlu0 %1107
        %1109 = vrot.lane.b32.xlu0 %v597, 1
        %v1110 = vpop.permute.xlu0 %1109
        %vm1111 = vcmask 7168
        %v1112 = vsel %vm1111, %v1110, %v1108
        %vm1114 = vcmask 7168
        %v1117 = vsel %vm1114, %v1108, %v1110
        %v1119 = vlaneseq
        %v1120 = vshrl.u32 %v1119, 7
        %v1121 = vsub.s32 1, %v1120
        %v1122 = vrot.slane %v659, %v1121
        %v1123 = vlaneseq
        %v1124 = vshrl.u32 %v1123, 7
        %v1125 = vsub.s32 1, %v1124
        %v1126 = vrot.slane %v666, %v1125
        %v1127 = vmul.bf16 %v1117, %v1122
        %v1128 = vmul.bf16 %v1112, %v1126
        %s1129 = scalar_lea.vmem %s3, 120
        %v1130 = vld [vmem:[%s1129] sm:$0xf]
        %v1131 = vld [vmem:[%s1129 + $0x4] sm:$0xf]
        %v1132 = vld [vmem:[%s1129 + $0x8] sm:$0xf]
        %v1133 = vld [vmem:[%s1129 + $0xc] sm:$0xf]
        %v1134 = vld [vmem:[%s1129 + $0x10] sm:$0xf]
        %v1135 = vld [vmem:[%s1129 + $0x14] sm:$0xf]
        %v1136 = vld [vmem:[%s1129 + $0x18] sm:$0xf]
        %v1137 = vld [vmem:[%s1129 + $0x1c] sm:$0xf]
        %v1138 = vld [vmem:[%s1129 + $0x20] sm:$0xf]
        %v1139 = vld [vmem:[%s1129 + $0x24] sm:$0xf]
        %v1150 = vunpack.c.l.b16 %v1130
        %v1151 = vunpack.c.l.b16 %v1131
        %v1152 = vunpack.c.l.b16 %v1132
        %v1153 = vunpack.c.l.b16 %v1133
        %v1154 = vunpack.c.l.b16 %v1134
        %v1155 = vunpack.c.l.b16 %v1135
        %v1156 = vunpack.c.l.b16 %v1136
        %v1157 = vunpack.c.l.b16 %v1137
        %v1158 = vunpack.c.l.b16 %v1138
        %v1159 = vunpack.c.l.b16 %v1139
        %v1160 = vpack.c.b16 %v1151, %v1150
        %v1161 = vpack.c.b16 %v1153, %v1152
        %v1162 = vpack.c.b16 %v1155, %v1154
        %v1163 = vpack.c.b16 %v1157, %v1156
        %v1164 = vpack.c.b16 %v1159, %v1158
        %v1166 = vsel %vm653, %v1160, 0
        %v1169 = vsel %vm653, %v1161, 0
        %v1172 = vsel %vm653, %v1162, 0
        %v1175 = vsel %vm653, %v1163, 0
        %v1178 = vsel %vm653, %v1164, 0
        %1180 = vmatprep.subr.bf16.mxu0 0
        %1181 = vmatpush1.bf16.msra.mxu0 0
        %1182 = vmatprep.subr.bf16.mxu0 0
        %1183 = vmatpush1.bf16.msra.mxu0 0
        %1184 = vmatprep.subr.bf16.mxu0 0
        %1185 = vmatpush1.bf16.msra.mxu0 0
        %1186 = vmatprep.subr.bf16.mxu0 0
        %1187 = vmatpush1.bf16.msra.mxu0 0
        %1188 = vmatprep.subr.bf16.mxu0 0
        %1189 = vmatpush1.bf16.msra.mxu0 0
        %1190 = vmatprep.subr.bf16.mxu0 0
        %1191 = vmatpush1.bf16.msra.mxu0 0
        %1192 = vmatprep.subr.bf16.mxu0 0
        %1193 = vmatpush1.bf16.msra.mxu0 0
        %1194 = vmatprep.subr.bf16.mxu0 %v1128
        %1195 = vmatpush1.bf16.msra.mxu0 %v1127
        %1196 = vmatprep.subr.bf16.mxu0 0
        %1197 = vmatpush2.bf16.msra.mxu0 0
        %1198 = vmatprep.subr.bf16.mxu0 0
        %1199 = vmatpush2.bf16.msra.mxu0 0
        %1200 = vmatprep.subr.bf16.mxu0 0
        %1201 = vmatpush2.bf16.msra.mxu0 0
        %1202 = vmatprep.subr.bf16.mxu0 0
        %1203 = vmatpush2.bf16.msra.mxu0 0
        %1204 = vmatprep.subr.bf16.mxu0 0
        %1205 = vmatpush2.bf16.msra.mxu0 0
        %1206 = vmatprep.subr.bf16.mxu0 0
        %1207 = vmatpush2.bf16.msra.mxu0 0
        %1208 = vmatprep.subr.bf16.mxu0 0
        %1209 = vmatpush2.bf16.msra.mxu0 0
        %1210 = vmatprep.subr.bf16.mxu0 0
        %1211 = vmatpush2.bf16.msra.mxu0 0
        %1212 = vmatprep.mubr.bf16.mxu0 0
        %1213 = vmatmul.mubr.bf16.gmra.mxu0 %v1166
        %v1214 = vpop.f32.mrf.mxu0
        %v1215 = vadd.f32 0.0, %v1214
        %v1216 = vpop.f32.mrf.mxu0
        %v1217 = vadd.f32 0.0, %v1216
        %v1218 = vpop.f32.mrf.mxu0
        %v1219 = vadd.f32 0.0, %v1218
        %v1220 = vpop.f32.mrf.mxu0
        %v1221 = vadd.f32 0.0, %v1220
        %1222 = vmatprep.mubr.bf16.mxu0 0
        %1223 = vmatmul.mubr.bf16.gmra.mxu0 %v1169
        %v1224 = vpop.f32.mrf.mxu0
        %v1225 = vadd.f32 0.0, %v1224
        %v1226 = vpop.f32.mrf.mxu0
        %v1227 = vadd.f32 0.0, %v1226
        %v1228 = vpop.f32.mrf.mxu0
        %v1229 = vadd.f32 0.0, %v1228
        %v1230 = vpop.f32.mrf.mxu0
        %v1231 = vadd.f32 0.0, %v1230
        %1232 = vmatprep.mubr.bf16.mxu0 0
        %1233 = vmatmul.mubr.bf16.gmra.mxu0 %v1172
        %v1234 = vpop.f32.mrf.mxu0
        %v1235 = vadd.f32 0.0, %v1234
        %v1236 = vpop.f32.mrf.mxu0
        %v1237 = vadd.f32 0.0, %v1236
        %v1238 = vpop.f32.mrf.mxu0
        %v1239 = vadd.f32 0.0, %v1238
        %v1240 = vpop.f32.mrf.mxu0
        %v1241 = vadd.f32 0.0, %v1240
        %1242 = vmatprep.mubr.bf16.mxu0 0
        %1243 = vmatmul.mubr.bf16.gmra.mxu0 %v1175
        %v1244 = vpop.f32.mrf.mxu0
        %v1245 = vadd.f32 0.0, %v1244
        %v1246 = vpop.f32.mrf.mxu0
        %v1247 = vadd.f32 0.0, %v1246
        %v1248 = vpop.f32.mrf.mxu0
        %v1249 = vadd.f32 0.0, %v1248
        %v1250 = vpop.f32.mrf.mxu0
        %v1251 = vadd.f32 0.0, %v1250
        %1252 = vmatprep.mubr.bf16.mxu0 0
        %1253 = vmatmul.mubr.bf16.gmra.mxu0 %v1178
        %v1254 = vpop.f32.mrf.mxu0
        %v1255 = vadd.f32 0.0, %v1254
        %v1256 = vpop.f32.mrf.mxu0
        %v1257 = vadd.f32 0.0, %v1256
        %v1258 = vpop.f32.mrf.mxu0
        %v1259 = vadd.f32 0.0, %v1258
        %v1260 = vpop.f32.mrf.mxu0
        %v1261 = vadd.f32 0.0, %v1260
        %1262 = vdwg.mxu0
        %v1263 = vadd.f32 %v1087, %v1215
        %v1264 = vadd.f32 %v1088, %v1217
        %v1265 = vadd.f32 %v1089, %v1219
        %v1266 = vadd.f32 %v1090, %v1221
        %v1267 = vadd.f32 %v1091, %v1225
        %v1268 = vadd.f32 %v1092, %v1227
        %v1269 = vadd.f32 %v1093, %v1229
        %v1270 = vadd.f32 %v1094, %v1231
        %v1271 = vadd.f32 %v1095, %v1235
        %v1272 = vadd.f32 %v1096, %v1237
        %v1273 = vadd.f32 %v1097, %v1239
        %v1274 = vadd.f32 %v1098, %v1241
        %v1275 = vadd.f32 %v1099, %v1245
        %v1276 = vadd.f32 %v1100, %v1247
        %v1277 = vadd.f32 %v1101, %v1249
        %v1278 = vadd.f32 %v1102, %v1251
        %v1279 = vadd.f32 %v1103, %v1255
        %v1280 = vadd.f32 %v1104, %v1257
        %v1281 = vadd.f32 %v1105, %v1259
        %v1282 = vadd.f32 %v1106, %v1261
        %v1283 = vlaneseq
        %v1284 = vshrl.u32 %v1283, 7
        %v1285 = vsub.s32 2, %v1284
        %v1286 = vrot.slane %v621, %v1285
        %v1287 = vlaneseq
        %v1288 = vshrl.u32 %v1287, 7
        %v1289 = vsub.s32 2, %v1288
        %v1290 = vrot.slane %v628, %v1289
        %v1291 = vmul.bf16 %v597, %v1286
        %v1292 = vmul.bf16 %v598, %v1290
        %s1293 = scalar_lea.vmem %s3, 160
        %v1294 = vld [vmem:[%s1293] sm:$0xf]
        %v1295 = vld [vmem:[%s1293 + $0x4] sm:$0xf]
        %v1296 = vld [vmem:[%s1293 + $0x8] sm:$0xf]
        %v1297 = vld [vmem:[%s1293 + $0xc] sm:$0xf]
        %v1298 = vld [vmem:[%s1293 + $0x10] sm:$0xf]
        %v1299 = vld [vmem:[%s1293 + $0x14] sm:$0xf]
        %v1300 = vld [vmem:[%s1293 + $0x18] sm:$0xf]
        %v1301 = vld [vmem:[%s1293 + $0x1c] sm:$0xf]
        %v1302 = vld [vmem:[%s1293 + $0x20] sm:$0xf]
        %v1303 = vld [vmem:[%s1293 + $0x24] sm:$0xf]
        %v1314 = vunpack.c.l.b16 %v1294
        %v1315 = vunpack.c.l.b16 %v1295
        %v1316 = vunpack.c.l.b16 %v1296
        %v1317 = vunpack.c.l.b16 %v1297
        %v1318 = vunpack.c.l.b16 %v1298
        %v1319 = vunpack.c.l.b16 %v1299
        %v1320 = vunpack.c.l.b16 %v1300
        %v1321 = vunpack.c.l.b16 %v1301
        %v1322 = vunpack.c.l.b16 %v1302
        %v1323 = vunpack.c.l.b16 %v1303
        %v1324 = vpack.c.b16 %v1315, %v1314
        %v1325 = vpack.c.b16 %v1317, %v1316
        %v1326 = vpack.c.b16 %v1319, %v1318
        %v1327 = vpack.c.b16 %v1321, %v1320
        %v1328 = vpack.c.b16 %v1323, %v1322
        %v1330 = vsel %vm653, %v1324, 0
        %v1333 = vsel %vm653, %v1325, 0
        %v1336 = vsel %vm653, %v1326, 0
        %v1339 = vsel %vm653, %v1327, 0
        %v1342 = vsel %vm653, %v1328, 0
        %1344 = vmatprep.subr.bf16.mxu0 0
        %1345 = vmatpush1.bf16.msra.mxu0 0
        %1346 = vmatprep.subr.bf16.mxu0 0
        %1347 = vmatpush1.bf16.msra.mxu0 0
        %1348 = vmatprep.subr.bf16.mxu0 0
        %1349 = vmatpush1.bf16.msra.mxu0 0
        %1350 = vmatprep.subr.bf16.mxu0 0
        %1351 = vmatpush1.bf16.msra.mxu0 0
        %1352 = vmatprep.subr.bf16.mxu0 0
        %1353 = vmatpush1.bf16.msra.mxu0 0
        %1354 = vmatprep.subr.bf16.mxu0 0
        %1355 = vmatpush1.bf16.msra.mxu0 0
        %1356 = vmatprep.subr.bf16.mxu0 0
        %1357 = vmatpush1.bf16.msra.mxu0 0
        %1358 = vmatprep.subr.bf16.mxu0 %v1292
        %1359 = vmatpush1.bf16.msra.mxu0 %v1291
        %1360 = vmatprep.subr.bf16.mxu0 0
        %1361 = vmatpush2.bf16.msra.mxu0 0
        %1362 = vmatprep.subr.bf16.mxu0 0
        %1363 = vmatpush2.bf16.msra.mxu0 0
        %1364 = vmatprep.subr.bf16.mxu0 0
        %1365 = vmatpush2.bf16.msra.mxu0 0
        %1366 = vmatprep.subr.bf16.mxu0 0
        %1367 = vmatpush2.bf16.msra.mxu0 0
        %1368 = vmatprep.subr.bf16.mxu0 0
        %1369 = vmatpush2.bf16.msra.mxu0 0
        %1370 = vmatprep.subr.bf16.mxu0 0
        %1371 = vmatpush2.bf16.msra.mxu0 0
        %1372 = vmatprep.subr.bf16.mxu0 0
        %1373 = vmatpush2.bf16.msra.mxu0 0
        %1374 = vmatprep.subr.bf16.mxu0 0
        %1375 = vmatpush2.bf16.msra.mxu0 0
        %1376 = vmatprep.mubr.bf16.mxu0 0
        %1377 = vmatmul.mubr.bf16.gmra.mxu0 %v1330
        %v1378 = vpop.f32.mrf.mxu0
        %v1379 = vadd.f32 0.0, %v1378
        %v1380 = vpop.f32.mrf.mxu0
        %v1381 = vadd.f32 0.0, %v1380
        %v1382 = vpop.f32.mrf.mxu0
        %v1383 = vadd.f32 0.0, %v1382
        %v1384 = vpop.f32.mrf.mxu0
        %v1385 = vadd.f32 0.0, %v1384
        %1386 = vmatprep.mubr.bf16.mxu0 0
        %1387 = vmatmul.mubr.bf16.gmra.mxu0 %v1333
        %v1388 = vpop.f32.mrf.mxu0
        %v1389 = vadd.f32 0.0, %v1388
        %v1390 = vpop.f32.mrf.mxu0
        %v1391 = vadd.f32 0.0, %v1390
        %v1392 = vpop.f32.mrf.mxu0
        %v1393 = vadd.f32 0.0, %v1392
        %v1394 = vpop.f32.mrf.mxu0
        %v1395 = vadd.f32 0.0, %v1394
        %1396 = vmatprep.mubr.bf16.mxu0 0
        %1397 = vmatmul.mubr.bf16.gmra.mxu0 %v1336
        %v1398 = vpop.f32.mrf.mxu0
        %v1399 = vadd.f32 0.0, %v1398
        %v1400 = vpop.f32.mrf.mxu0
        %v1401 = vadd.f32 0.0, %v1400
        %v1402 = vpop.f32.mrf.mxu0
        %v1403 = vadd.f32 0.0, %v1402
        %v1404 = vpop.f32.mrf.mxu0
        %v1405 = vadd.f32 0.0, %v1404
        %1406 = vmatprep.mubr.bf16.mxu0 0
        %1407 = vmatmul.mubr.bf16.gmra.mxu0 %v1339
        %v1408 = vpop.f32.mrf.mxu0
        %v1409 = vadd.f32 0.0, %v1408
        %v1410 = vpop.f32.mrf.mxu0
        %v1411 = vadd.f32 0.0, %v1410
        %v1412 = vpop.f32.mrf.mxu0
        %v1413 = vadd.f32 0.0, %v1412
        %v1414 = vpop.f32.mrf.mxu0
        %v1415 = vadd.f32 0.0, %v1414
        %1416 = vmatprep.mubr.bf16.mxu0 0
        %1417 = vmatmul.mubr.bf16.gmra.mxu0 %v1342
        %v1418 = vpop.f32.mrf.mxu0
        %v1419 = vadd.f32 0.0, %v1418
        %v1420 = vpop.f32.mrf.mxu0
        %v1421 = vadd.f32 0.0, %v1420
        %v1422 = vpop.f32.mrf.mxu0
        %v1423 = vadd.f32 0.0, %v1422
        %v1424 = vpop.f32.mrf.mxu0
        %v1425 = vadd.f32 0.0, %v1424
        %1426 = vdwg.mxu0
        %v1427 = vadd.f32 %v1263, %v1379
        %v1428 = vadd.f32 %v1264, %v1381
        %v1429 = vadd.f32 %v1265, %v1383
        %v1430 = vadd.f32 %v1266, %v1385
        %v1431 = vadd.f32 %v1267, %v1389
        %v1432 = vadd.f32 %v1268, %v1391
        %v1433 = vadd.f32 %v1269, %v1393
        %v1434 = vadd.f32 %v1270, %v1395
        %v1435 = vadd.f32 %v1271, %v1399
        %v1436 = vadd.f32 %v1272, %v1401
        %v1437 = vadd.f32 %v1273, %v1403
        %v1438 = vadd.f32 %v1274, %v1405
        %v1439 = vadd.f32 %v1275, %v1409
        %v1440 = vadd.f32 %v1276, %v1411
        %v1441 = vadd.f32 %v1277, %v1413
        %v1442 = vadd.f32 %v1278, %v1415
        %v1443 = vadd.f32 %v1279, %v1419
        %v1444 = vadd.f32 %v1280, %v1421
        %v1445 = vadd.f32 %v1281, %v1423
        %v1446 = vadd.f32 %v1282, %v1425
        %1447 = vrot.lane.b32.xlu0 %v597, 127
        %v1448 = vpop.permute.xlu0 %1447
        %1449 = vrot.lane.b32.xlu0 %v598, 127
        %v1450 = vpop.permute.xlu0 %1449
        %vm1451 = vcmask 1039360
        %v1452 = vsel %vm1451, %v1448, %v1450
        %vm1454 = vcmask 1039360
        %v1457 = vsel %vm1454, %v1450, %v1448
        %v1459 = vlaneseq
        %v1460 = vshrl.u32 %v1459, 7
        %v1461 = vsub.s32 2, %v1460
        %v1462 = vrot.slane %v659, %v1461
        %v1463 = vlaneseq
        %v1464 = vshrl.u32 %v1463, 7
        %v1465 = vsub.s32 2, %v1464
        %v1466 = vrot.slane %v666, %v1465
        %v1467 = vmul.bf16 %v1452, %v1462
        %v1468 = vmul.bf16 %v1457, %v1466
        %s1469 = scalar_lea.vmem %s3, 200
        %v1470 = vld [vmem:[%s1469] sm:$0xf]
        %v1471 = vld [vmem:[%s1469 + $0x4] sm:$0xf]
        %v1472 = vld [vmem:[%s1469 + $0x8] sm:$0xf]
        %v1473 = vld [vmem:[%s1469 + $0xc] sm:$0xf]
        %v1474 = vld [vmem:[%s1469 + $0x10] sm:$0xf]
        %v1475 = vld [vmem:[%s1469 + $0x14] sm:$0xf]
        %v1476 = vld [vmem:[%s1469 + $0x18] sm:$0xf]
        %v1477 = vld [vmem:[%s1469 + $0x1c] sm:$0xf]
        %v1478 = vld [vmem:[%s1469 + $0x20] sm:$0xf]
        %v1479 = vld [vmem:[%s1469 + $0x24] sm:$0xf]
        %v1490 = vunpack.c.l.b16 %v1470
        %v1491 = vunpack.c.l.b16 %v1471
        %v1492 = vunpack.c.l.b16 %v1472
        %v1493 = vunpack.c.l.b16 %v1473
        %v1494 = vunpack.c.l.b16 %v1474
        %v1495 = vunpack.c.l.b16 %v1475
        %v1496 = vunpack.c.l.b16 %v1476
        %v1497 = vunpack.c.l.b16 %v1477
        %v1498 = vunpack.c.l.b16 %v1478
        %v1499 = vunpack.c.l.b16 %v1479
        %v1500 = vpack.c.b16 %v1491, %v1490
        %v1501 = vpack.c.b16 %v1493, %v1492
        %v1502 = vpack.c.b16 %v1495, %v1494
        %v1503 = vpack.c.b16 %v1497, %v1496
        %v1504 = vpack.c.b16 %v1499, %v1498
        %v1506 = vsel %vm653, %v1500, 0
        %v1509 = vsel %vm653, %v1501, 0
        %v1512 = vsel %vm653, %v1502, 0
        %v1515 = vsel %vm653, %v1503, 0
        %v1518 = vsel %vm653, %v1504, 0
        %1520 = vmatprep.subr.bf16.mxu0 0
        %1521 = vmatpush1.bf16.msra.mxu0 0
        %1522 = vmatprep.subr.bf16.mxu0 0
        %1523 = vmatpush1.bf16.msra.mxu0 0
        %1524 = vmatprep.subr.bf16.mxu0 0
        %1525 = vmatpush1.bf16.msra.mxu0 0
        %1526 = vmatprep.subr.bf16.mxu0 0
        %1527 = vmatpush1.bf16.msra.mxu0 0
        %1528 = vmatprep.subr.bf16.mxu0 0
        %1529 = vmatpush1.bf16.msra.mxu0 0
        %1530 = vmatprep.subr.bf16.mxu0 0
        %1531 = vmatpush1.bf16.msra.mxu0 0
        %1532 = vmatprep.subr.bf16.mxu0 0
        %1533 = vmatpush1.bf16.msra.mxu0 0
        %1534 = vmatprep.subr.bf16.mxu0 %v1468
        %1535 = vmatpush1.bf16.msra.mxu0 %v1467
        %1536 = vmatprep.subr.bf16.mxu0 0
        %1537 = vmatpush2.bf16.msra.mxu0 0
        %1538 = vmatprep.subr.bf16.mxu0 0
        %1539 = vmatpush2.bf16.msra.mxu0 0
        %1540 = vmatprep.subr.bf16.mxu0 0
        %1541 = vmatpush2.bf16.msra.mxu0 0
        %1542 = vmatprep.subr.bf16.mxu0 0
        %1543 = vmatpush2.bf16.msra.mxu0 0
        %1544 = vmatprep.subr.bf16.mxu0 0
        %1545 = vmatpush2.bf16.msra.mxu0 0
        %1546 = vmatprep.subr.bf16.mxu0 0
        %1547 = vmatpush2.bf16.msra.mxu0 0
        %1548 = vmatprep.subr.bf16.mxu0 0
        %1549 = vmatpush2.bf16.msra.mxu0 0
        %1550 = vmatprep.subr.bf16.mxu0 0
        %1551 = vmatpush2.bf16.msra.mxu0 0
        %1552 = vmatprep.mubr.bf16.mxu0 0
        %1553 = vmatmul.mubr.bf16.gmra.mxu0 %v1506
        %v1554 = vpop.f32.mrf.mxu0
        %v1555 = vadd.f32 0.0, %v1554
        %v1556 = vpop.f32.mrf.mxu0
        %v1557 = vadd.f32 0.0, %v1556
        %v1558 = vpop.f32.mrf.mxu0
        %v1559 = vadd.f32 0.0, %v1558
        %v1560 = vpop.f32.mrf.mxu0
        %v1561 = vadd.f32 0.0, %v1560
        %1562 = vmatprep.mubr.bf16.mxu0 0
        %1563 = vmatmul.mubr.bf16.gmra.mxu0 %v1509
        %v1564 = vpop.f32.mrf.mxu0
        %v1565 = vadd.f32 0.0, %v1564
        %v1566 = vpop.f32.mrf.mxu0
        %v1567 = vadd.f32 0.0, %v1566
        %v1568 = vpop.f32.mrf.mxu0
        %v1569 = vadd.f32 0.0, %v1568
        %v1570 = vpop.f32.mrf.mxu0
        %v1571 = vadd.f32 0.0, %v1570
        %1572 = vmatprep.mubr.bf16.mxu0 0
        %1573 = vmatmul.mubr.bf16.gmra.mxu0 %v1512
        %v1574 = vpop.f32.mrf.mxu0
        %v1575 = vadd.f32 0.0, %v1574
        %v1576 = vpop.f32.mrf.mxu0
        %v1577 = vadd.f32 0.0, %v1576
        %v1578 = vpop.f32.mrf.mxu0
        %v1579 = vadd.f32 0.0, %v1578
        %v1580 = vpop.f32.mrf.mxu0
        %v1581 = vadd.f32 0.0, %v1580
        %1582 = vmatprep.mubr.bf16.mxu0 0
        %1583 = vmatmul.mubr.bf16.gmra.mxu0 %v1515
        %v1584 = vpop.f32.mrf.mxu0
        %v1585 = vadd.f32 0.0, %v1584
        %v1586 = vpop.f32.mrf.mxu0
        %v1587 = vadd.f32 0.0, %v1586
        %v1588 = vpop.f32.mrf.mxu0
        %v1589 = vadd.f32 0.0, %v1588
        %v1590 = vpop.f32.mrf.mxu0
        %v1591 = vadd.f32 0.0, %v1590
        %1592 = vmatprep.mubr.bf16.mxu0 0
        %1593 = vmatmul.mubr.bf16.gmra.mxu0 %v1518
        %v1594 = vpop.f32.mrf.mxu0
        %v1595 = vadd.f32 0.0, %v1594
        %v1596 = vpop.f32.mrf.mxu0
        %v1597 = vadd.f32 0.0, %v1596
        %v1598 = vpop.f32.mrf.mxu0
        %v1599 = vadd.f32 0.0, %v1598
        %v1600 = vpop.f32.mrf.mxu0
        %v1601 = vadd.f32 0.0, %v1600
        %1602 = vdwg.mxu0
        %v1603 = vadd.f32 %v1427, %v1555
        %v1604 = vadd.f32 %v1428, %v1557
        %v1605 = vadd.f32 %v1429, %v1559
        %v1606 = vadd.f32 %v1430, %v1561
        %v1607 = vadd.f32 %v1431, %v1565
        %v1608 = vadd.f32 %v1432, %v1567
        %v1609 = vadd.f32 %v1433, %v1569
        %v1610 = vadd.f32 %v1434, %v1571
        %v1611 = vadd.f32 %v1435, %v1575
        %v1612 = vadd.f32 %v1436, %v1577
        %v1613 = vadd.f32 %v1437, %v1579
        %v1614 = vadd.f32 %v1438, %v1581
        %v1615 = vadd.f32 %v1439, %v1585
        %v1616 = vadd.f32 %v1440, %v1587
        %v1617 = vadd.f32 %v1441, %v1589
        %v1618 = vadd.f32 %v1442, %v1591
        %v1619 = vadd.f32 %v1443, %v1595
        %v1620 = vadd.f32 %v1444, %v1597
        %v1621 = vadd.f32 %v1445, %v1599
        %v1622 = vadd.f32 %v1446, %v1601
        %1623 = vrot.lane.b32.xlu0 %v597, 113
        %v1624 = vpop.permute.xlu0 %1623
        %1625 = vrot.lane.b32.xlu0 %v598, 113
        %v1626 = vpop.permute.xlu0 %1625
        %vm1627 = vcmask 924672
        %v1628 = vsel %vm1627, %v1624, %v1626
        %vm1630 = vcmask 924672
        %v1633 = vsel %vm1630, %v1626, %v1624
        %v1635 = vlaneseq
        %v1636 = vshrl.u32 %v1635, 7
        %v1637 = vsub.s32 3, %v1636
        %v1638 = vrot.slane %v621, %v1637
        %v1639 = vlaneseq
        %v1640 = vshrl.u32 %v1639, 7
        %v1641 = vsub.s32 3, %v1640
        %v1642 = vrot.slane %v628, %v1641
        %v1643 = vmul.bf16 %v1628, %v1638
        %v1644 = vmul.bf16 %v1633, %v1642
        %s1645 = scalar_lea.vmem %s3, 240
        %v1646 = vld [vmem:[%s1645] sm:$0xf]
        %v1647 = vld [vmem:[%s1645 + $0x4] sm:$0xf]
        %v1648 = vld [vmem:[%s1645 + $0x8] sm:$0xf]
        %v1649 = vld [vmem:[%s1645 + $0xc] sm:$0xf]
        %v1650 = vld [vmem:[%s1645 + $0x10] sm:$0xf]
        %v1651 = vld [vmem:[%s1645 + $0x14] sm:$0xf]
        %v1652 = vld [vmem:[%s1645 + $0x18] sm:$0xf]
        %v1653 = vld [vmem:[%s1645 + $0x1c] sm:$0xf]
        %v1654 = vld [vmem:[%s1645 + $0x20] sm:$0xf]
        %v1655 = vld [vmem:[%s1645 + $0x24] sm:$0xf]
        %v1666 = vunpack.c.l.b16 %v1646
        %v1667 = vunpack.c.l.b16 %v1647
        %v1668 = vunpack.c.l.b16 %v1648
        %v1669 = vunpack.c.l.b16 %v1649
        %v1670 = vunpack.c.l.b16 %v1650
        %v1671 = vunpack.c.l.b16 %v1651
        %v1672 = vunpack.c.l.b16 %v1652
        %v1673 = vunpack.c.l.b16 %v1653
        %v1674 = vunpack.c.l.b16 %v1654
        %v1675 = vunpack.c.l.b16 %v1655
        %v1676 = vpack.c.b16 %v1667, %v1666
        %v1677 = vpack.c.b16 %v1669, %v1668
        %v1678 = vpack.c.b16 %v1671, %v1670
        %v1679 = vpack.c.b16 %v1673, %v1672
        %v1680 = vpack.c.b16 %v1675, %v1674
        %v1682 = vsel %vm653, %v1676, 0
        %v1685 = vsel %vm653, %v1677, 0
        %v1688 = vsel %vm653, %v1678, 0
        %v1691 = vsel %vm653, %v1679, 0
        %v1694 = vsel %vm653, %v1680, 0
        %1696 = vmatprep.subr.bf16.mxu0 0
        %1697 = vmatpush1.bf16.msra.mxu0 0
        %1698 = vmatprep.subr.bf16.mxu0 0
        %1699 = vmatpush1.bf16.msra.mxu0 0
        %1700 = vmatprep.subr.bf16.mxu0 0
        %1701 = vmatpush1.bf16.msra.mxu0 0
        %1702 = vmatprep.subr.bf16.mxu0 0
        %1703 = vmatpush1.bf16.msra.mxu0 0
        %1704 = vmatprep.subr.bf16.mxu0 0
        %1705 = vmatpush1.bf16.msra.mxu0 0
        %1706 = vmatprep.subr.bf16.mxu0 0
        %1707 = vmatpush1.bf16.msra.mxu0 0
        %1708 = vmatprep.subr.bf16.mxu0 0
        %1709 = vmatpush1.bf16.msra.mxu0 0
        %1710 = vmatprep.subr.bf16.mxu0 %v1644
        %1711 = vmatpush1.bf16.msra.mxu0 %v1643
        %1712 = vmatprep.subr.bf16.mxu0 0
        %1713 = vmatpush2.bf16.msra.mxu0 0
        %1714 = vmatprep.subr.bf16.mxu0 0
        %1715 = vmatpush2.bf16.msra.mxu0 0
        %1716 = vmatprep.subr.bf16.mxu0 0
        %1717 = vmatpush2.bf16.msra.mxu0 0
        %1718 = vmatprep.subr.bf16.mxu0 0
        %1719 = vmatpush2.bf16.msra.mxu0 0
        %1720 = vmatprep.subr.bf16.mxu0 0
        %1721 = vmatpush2.bf16.msra.mxu0 0
        %1722 = vmatprep.subr.bf16.mxu0 0
        %1723 = vmatpush2.bf16.msra.mxu0 0
        %1724 = vmatprep.subr.bf16.mxu0 0
        %1725 = vmatpush2.bf16.msra.mxu0 0
        %1726 = vmatprep.subr.bf16.mxu0 0
        %1727 = vmatpush2.bf16.msra.mxu0 0
        %1728 = vmatprep.mubr.bf16.mxu0 0
        %1729 = vmatmul.mubr.bf16.gmra.mxu0 %v1682
        %v1730 = vpop.f32.mrf.mxu0
        %v1731 = vadd.f32 0.0, %v1730
        %v1732 = vpop.f32.mrf.mxu0
        %v1733 = vadd.f32 0.0, %v1732
        %v1734 = vpop.f32.mrf.mxu0
        %v1735 = vadd.f32 0.0, %v1734
        %v1736 = vpop.f32.mrf.mxu0
        %v1737 = vadd.f32 0.0, %v1736
        %1738 = vmatprep.mubr.bf16.mxu0 0
        %1739 = vmatmul.mubr.bf16.gmra.mxu0 %v1685
        %v1740 = vpop.f32.mrf.mxu0
        %v1741 = vadd.f32 0.0, %v1740
        %v1742 = vpop.f32.mrf.mxu0
        %v1743 = vadd.f32 0.0, %v1742
        %v1744 = vpop.f32.mrf.mxu0
        %v1745 = vadd.f32 0.0, %v1744
        %v1746 = vpop.f32.mrf.mxu0
        %v1747 = vadd.f32 0.0, %v1746
        %1748 = vmatprep.mubr.bf16.mxu0 0
        %1749 = vmatmul.mubr.bf16.gmra.mxu0 %v1688
        %v1750 = vpop.f32.mrf.mxu0
        %v1751 = vadd.f32 0.0, %v1750
        %v1752 = vpop.f32.mrf.mxu0
        %v1753 = vadd.f32 0.0, %v1752
        %v1754 = vpop.f32.mrf.mxu0
        %v1755 = vadd.f32 0.0, %v1754
        %v1756 = vpop.f32.mrf.mxu0
        %v1757 = vadd.f32 0.0, %v1756
        %1758 = vmatprep.mubr.bf16.mxu0 0
        %1759 = vmatmul.mubr.bf16.gmra.mxu0 %v1691
        %v1760 = vpop.f32.mrf.mxu0
        %v1761 = vadd.f32 0.0, %v1760
        %v1762 = vpop.f32.mrf.mxu0
        %v1763 = vadd.f32 0.0, %v1762
        %v1764 = vpop.f32.mrf.mxu0
        %v1765 = vadd.f32 0.0, %v1764
        %v1766 = vpop.f32.mrf.mxu0
        %v1767 = vadd.f32 0.0, %v1766
        %1768 = vmatprep.mubr.bf16.mxu0 0
        %1769 = vmatmul.mubr.bf16.gmra.mxu0 %v1694
        %v1770 = vpop.f32.mrf.mxu0
        %v1771 = vadd.f32 0.0, %v1770
        %v1772 = vpop.f32.mrf.mxu0
        %v1773 = vadd.f32 0.0, %v1772
        %v1774 = vpop.f32.mrf.mxu0
        %v1775 = vadd.f32 0.0, %v1774
        %v1776 = vpop.f32.mrf.mxu0
        %v1777 = vadd.f32 0.0, %v1776
        %1778 = vdwg.mxu0
        %v1779 = vadd.f32 %v1603, %v1731
        %v1780 = vadd.f32 %v1604, %v1733
        %v1781 = vadd.f32 %v1605, %v1735
        %v1782 = vadd.f32 %v1606, %v1737
        %v1783 = vadd.f32 %v1607, %v1741
        %v1784 = vadd.f32 %v1608, %v1743
        %v1785 = vadd.f32 %v1609, %v1745
        %v1786 = vadd.f32 %v1610, %v1747
        %v1787 = vadd.f32 %v1611, %v1751
        %v1788 = vadd.f32 %v1612, %v1753
        %v1789 = vadd.f32 %v1613, %v1755
        %v1790 = vadd.f32 %v1614, %v1757
        %v1791 = vadd.f32 %v1615, %v1761
        %v1792 = vadd.f32 %v1616, %v1763
        %v1793 = vadd.f32 %v1617, %v1765
        %v1794 = vadd.f32 %v1618, %v1767
        %v1795 = vadd.f32 %v1619, %v1771
        %v1796 = vadd.f32 %v1620, %v1773
        %v1797 = vadd.f32 %v1621, %v1775
        %v1798 = vadd.f32 %v1622, %v1777
        %1799 = vrot.lane.b32.xlu0 %v597, 112
        %v1800 = vpop.permute.xlu0 %1799
        %1801 = vrot.lane.b32.xlu0 %v598, 112
        %v1802 = vpop.permute.xlu0 %1801
        %vm1803 = vcmask 916480
        %v1804 = vsel %vm1803, %v1800, %v1802
        %vm1806 = vcmask 916480
        %v1809 = vsel %vm1806, %v1802, %v1800
        %v1811 = vlaneseq
        %v1812 = vshrl.u32 %v1811, 7
        %v1813 = vsub.s32 3, %v1812
        %v1814 = vrot.slane %v659, %v1813
        %v1815 = vlaneseq
        %v1816 = vshrl.u32 %v1815, 7
        %v1817 = vsub.s32 3, %v1816
        %v1818 = vrot.slane %v666, %v1817
        %v1819 = vmul.bf16 %v1804, %v1814
        %v1820 = vmul.bf16 %v1809, %v1818
        %s1821 = scalar_lea.vmem %s3, 280
        %v1822 = vld [vmem:[%s1821] sm:$0xf]
        %v1823 = vld [vmem:[%s1821 + $0x4] sm:$0xf]
        %v1824 = vld [vmem:[%s1821 + $0x8] sm:$0xf]
        %v1825 = vld [vmem:[%s1821 + $0xc] sm:$0xf]
        %v1826 = vld [vmem:[%s1821 + $0x10] sm:$0xf]
        %v1827 = vld [vmem:[%s1821 + $0x14] sm:$0xf]
        %v1828 = vld [vmem:[%s1821 + $0x18] sm:$0xf]
        %v1829 = vld [vmem:[%s1821 + $0x1c] sm:$0xf]
        %v1830 = vld [vmem:[%s1821 + $0x20] sm:$0xf]
        %v1831 = vld [vmem:[%s1821 + $0x24] sm:$0xf]
        %v1842 = vunpack.c.l.b16 %v1822
        %v1843 = vunpack.c.l.b16 %v1823
        %v1844 = vunpack.c.l.b16 %v1824
        %v1845 = vunpack.c.l.b16 %v1825
        %v1846 = vunpack.c.l.b16 %v1826
        %v1847 = vunpack.c.l.b16 %v1827
        %v1848 = vunpack.c.l.b16 %v1828
        %v1849 = vunpack.c.l.b16 %v1829
        %v1850 = vunpack.c.l.b16 %v1830
        %v1851 = vunpack.c.l.b16 %v1831
        %v1852 = vpack.c.b16 %v1843, %v1842
        %v1853 = vpack.c.b16 %v1845, %v1844
        %v1854 = vpack.c.b16 %v1847, %v1846
        %v1855 = vpack.c.b16 %v1849, %v1848
        %v1856 = vpack.c.b16 %v1851, %v1850
        %v1858 = vsel %vm653, %v1852, 0
        %v1861 = vsel %vm653, %v1853, 0
        %v1864 = vsel %vm653, %v1854, 0
        %v1867 = vsel %vm653, %v1855, 0
        %v1870 = vsel %vm653, %v1856, 0
        %1872 = vmatprep.subr.bf16.mxu0 0
        %1873 = vmatpush1.bf16.msra.mxu0 0
        %1874 = vmatprep.subr.bf16.mxu0 0
        %1875 = vmatpush1.bf16.msra.mxu0 0
        %1876 = vmatprep.subr.bf16.mxu0 0
        %1877 = vmatpush1.bf16.msra.mxu0 0
        %1878 = vmatprep.subr.bf16.mxu0 0
        %1879 = vmatpush1.bf16.msra.mxu0 0
        %1880 = vmatprep.subr.bf16.mxu0 0
        %1881 = vmatpush1.bf16.msra.mxu0 0
        %1882 = vmatprep.subr.bf16.mxu0 0
        %1883 = vmatpush1.bf16.msra.mxu0 0
        %1884 = vmatprep.subr.bf16.mxu0 0
        %1885 = vmatpush1.bf16.msra.mxu0 0
        %1886 = vmatprep.subr.bf16.mxu0 %v1820
        %1887 = vmatpush1.bf16.msra.mxu0 %v1819
        %1888 = vmatprep.subr.bf16.mxu0 0
        %1889 = vmatpush2.bf16.msra.mxu0 0
        %1890 = vmatprep.subr.bf16.mxu0 0
        %1891 = vmatpush2.bf16.msra.mxu0 0
        %1892 = vmatprep.subr.bf16.mxu0 0
        %1893 = vmatpush2.bf16.msra.mxu0 0
        %1894 = vmatprep.subr.bf16.mxu0 0
        %1895 = vmatpush2.bf16.msra.mxu0 0
        %1896 = vmatprep.subr.bf16.mxu0 0
        %1897 = vmatpush2.bf16.msra.mxu0 0
        %1898 = vmatprep.subr.bf16.mxu0 0
        %1899 = vmatpush2.bf16.msra.mxu0 0
        %1900 = vmatprep.subr.bf16.mxu0 0
        %1901 = vmatpush2.bf16.msra.mxu0 0
        %1902 = vmatprep.subr.bf16.mxu0 0
        %1903 = vmatpush2.bf16.msra.mxu0 0
        %1904 = vmatprep.mubr.bf16.mxu0 0
        %1905 = vmatmul.mubr.bf16.gmra.mxu0 %v1858
        %v1906 = vpop.f32.mrf.mxu0
        %v1907 = vadd.f32 0.0, %v1906
        %v1908 = vpop.f32.mrf.mxu0
        %v1909 = vadd.f32 0.0, %v1908
        %v1910 = vpop.f32.mrf.mxu0
        %v1911 = vadd.f32 0.0, %v1910
        %v1912 = vpop.f32.mrf.mxu0
        %v1913 = vadd.f32 0.0, %v1912
        %1914 = vmatprep.mubr.bf16.mxu0 0
        %1915 = vmatmul.mubr.bf16.gmra.mxu0 %v1861
        %v1916 = vpop.f32.mrf.mxu0
        %v1917 = vadd.f32 0.0, %v1916
        %v1918 = vpop.f32.mrf.mxu0
        %v1919 = vadd.f32 0.0, %v1918
        %v1920 = vpop.f32.mrf.mxu0
        %v1921 = vadd.f32 0.0, %v1920
        %v1922 = vpop.f32.mrf.mxu0
        %v1923 = vadd.f32 0.0, %v1922
        %1924 = vmatprep.mubr.bf16.mxu0 0
        %1925 = vmatmul.mubr.bf16.gmra.mxu0 %v1864
        %v1926 = vpop.f32.mrf.mxu0
        %v1927 = vadd.f32 0.0, %v1926
        %v1928 = vpop.f32.mrf.mxu0
        %v1929 = vadd.f32 0.0, %v1928
        %v1930 = vpop.f32.mrf.mxu0
        %v1931 = vadd.f32 0.0, %v1930
        %v1932 = vpop.f32.mrf.mxu0
        %v1933 = vadd.f32 0.0, %v1932
        %1934 = vmatprep.mubr.bf16.mxu0 0
        %1935 = vmatmul.mubr.bf16.gmra.mxu0 %v1867
        %v1936 = vpop.f32.mrf.mxu0
        %v1937 = vadd.f32 0.0, %v1936
        %v1938 = vpop.f32.mrf.mxu0
        %v1939 = vadd.f32 0.0, %v1938
        %v1940 = vpop.f32.mrf.mxu0
        %v1941 = vadd.f32 0.0, %v1940
        %v1942 = vpop.f32.mrf.mxu0
        %v1943 = vadd.f32 0.0, %v1942
        %1944 = vmatprep.mubr.bf16.mxu0 0
        %1945 = vmatmul.mubr.bf16.gmra.mxu0 %v1870
        %v1946 = vpop.f32.mrf.mxu0
        %v1947 = vadd.f32 0.0, %v1946
        %v1948 = vpop.f32.mrf.mxu0
        %v1949 = vadd.f32 0.0, %v1948
        %v1950 = vpop.f32.mrf.mxu0
        %v1951 = vadd.f32 0.0, %v1950
        %v1952 = vpop.f32.mrf.mxu0
        %v1953 = vadd.f32 0.0, %v1952
        %1954 = vdwg.mxu0
        %v1955 = vadd.f32 %v1779, %v1907
        %v1956 = vadd.f32 %v1780, %v1909
        %v1957 = vadd.f32 %v1781, %v1911
        %v1958 = vadd.f32 %v1782, %v1913
        %v1959 = vadd.f32 %v1783, %v1917
        %v1960 = vadd.f32 %v1784, %v1919
        %v1961 = vadd.f32 %v1785, %v1921
        %v1962 = vadd.f32 %v1786, %v1923
        %v1963 = vadd.f32 %v1787, %v1927
        %v1964 = vadd.f32 %v1788, %v1929
        %v1965 = vadd.f32 %v1789, %v1931
        %v1966 = vadd.f32 %v1790, %v1933
        %v1967 = vadd.f32 %v1791, %v1937
        %v1968 = vadd.f32 %v1792, %v1939
        %v1969 = vadd.f32 %v1793, %v1941
        %v1970 = vadd.f32 %v1794, %v1943
        %v1971 = vadd.f32 %v1795, %v1947
        %v1972 = vadd.f32 %v1796, %v1949
        %v1973 = vadd.f32 %v1797, %v1951
        %v1974 = vadd.f32 %v1798, %v1953
        %1975 = vrot.lane.b32.xlu0 %v597, 111
        %v1976 = vpop.permute.xlu0 %1975
        %1977 = vrot.lane.b32.xlu0 %v598, 111
        %v1978 = vpop.permute.xlu0 %1977
        %vm1979 = vcmask 908288
        %v1980 = vsel %vm1979, %v1976, %v1978
        %vm1982 = vcmask 908288
        %v1985 = vsel %vm1982, %v1978, %v1976
        %v1988 = vunpack.c.l.b16 %v600
        %v1989 = vunpack.c.h.b16 %v600
        %v1990 = vpack.c.b16 %v1988, %v1988
        %v1991 = vpack.c.b16 %v1989, %v1989
        %v1993 = vpack.i.b16 %v1990, %v1990
        %v1995 = vlaneseq
        %v1996 = vshrl.u32 %v1995, 7
        %v1997 = vsub.s32 0, %v1996
        %v1998 = vrot.slane %v1993, %v1997
        %v2000 = vpack.i.b16 %v1991, %v1991
        %v2002 = vlaneseq
        %v2003 = vshrl.u32 %v2002, 7
        %v2004 = vsub.s32 0, %v2003
        %v2005 = vrot.slane %v2000, %v2004
        %v2006 = vmul.bf16 %v1980, %v1998
        %v2007 = vmul.bf16 %v1985, %v2005
        %s2008 = scalar_lea.vmem %s3, 320
        %v2009 = vld [vmem:[%s2008] sm:$0xf]
        %v2010 = vld [vmem:[%s2008 + $0x4] sm:$0xf]
        %v2011 = vld [vmem:[%s2008 + $0x8] sm:$0xf]
        %v2012 = vld [vmem:[%s2008 + $0xc] sm:$0xf]
        %v2013 = vld [vmem:[%s2008 + $0x10] sm:$0xf]
        %v2014 = vld [vmem:[%s2008 + $0x14] sm:$0xf]
        %v2015 = vld [vmem:[%s2008 + $0x18] sm:$0xf]
        %v2016 = vld [vmem:[%s2008 + $0x1c] sm:$0xf]
        %v2017 = vld [vmem:[%s2008 + $0x20] sm:$0xf]
        %v2018 = vld [vmem:[%s2008 + $0x24] sm:$0xf]
        %v2029 = vunpack.c.l.b16 %v2009
        %v2030 = vunpack.c.l.b16 %v2010
        %v2031 = vunpack.c.l.b16 %v2011
        %v2032 = vunpack.c.l.b16 %v2012
        %v2033 = vunpack.c.l.b16 %v2013
        %v2034 = vunpack.c.l.b16 %v2014
        %v2035 = vunpack.c.l.b16 %v2015
        %v2036 = vunpack.c.l.b16 %v2016
        %v2037 = vunpack.c.l.b16 %v2017
        %v2038 = vunpack.c.l.b16 %v2018
        %v2039 = vpack.c.b16 %v2030, %v2029
        %v2040 = vpack.c.b16 %v2032, %v2031
        %v2041 = vpack.c.b16 %v2034, %v2033
        %v2042 = vpack.c.b16 %v2036, %v2035
        %v2043 = vpack.c.b16 %v2038, %v2037
        %v2045 = vsel %vm653, %v2039, 0
        %v2048 = vsel %vm653, %v2040, 0
        %v2051 = vsel %vm653, %v2041, 0
        %v2054 = vsel %vm653, %v2042, 0
        %v2057 = vsel %vm653, %v2043, 0
        %2059 = vmatprep.subr.bf16.mxu0 0
        %2060 = vmatpush1.bf16.msra.mxu0 0
        %2061 = vmatprep.subr.bf16.mxu0 0
        %2062 = vmatpush1.bf16.msra.mxu0 0
        %2063 = vmatprep.subr.bf16.mxu0 0
        %2064 = vmatpush1.bf16.msra.mxu0 0
        %2065 = vmatprep.subr.bf16.mxu0 0
        %2066 = vmatpush1.bf16.msra.mxu0 0
        %2067 = vmatprep.subr.bf16.mxu0 0
        %2068 = vmatpush1.bf16.msra.mxu0 0
        %2069 = vmatprep.subr.bf16.mxu0 0
        %2070 = vmatpush1.bf16.msra.mxu0 0
        %2071 = vmatprep.subr.bf16.mxu0 0
        %2072 = vmatpush1.bf16.msra.mxu0 0
        %2073 = vmatprep.subr.bf16.mxu0 %v2007
        %2074 = vmatpush1.bf16.msra.mxu0 %v2006
        %2075 = vmatprep.subr.bf16.mxu0 0
        %2076 = vmatpush2.bf16.msra.mxu0 0
        %2077 = vmatprep.subr.bf16.mxu0 0
        %2078 = vmatpush2.bf16.msra.mxu0 0
        %2079 = vmatprep.subr.bf16.mxu0 0
        %2080 = vmatpush2.bf16.msra.mxu0 0
        %2081 = vmatprep.subr.bf16.mxu0 0
        %2082 = vmatpush2.bf16.msra.mxu0 0
        %2083 = vmatprep.subr.bf16.mxu0 0
        %2084 = vmatpush2.bf16.msra.mxu0 0
        %2085 = vmatprep.subr.bf16.mxu0 0
        %2086 = vmatpush2.bf16.msra.mxu0 0
        %2087 = vmatprep.subr.bf16.mxu0 0
        %2088 = vmatpush2.bf16.msra.mxu0 0
        %2089 = vmatprep.subr.bf16.mxu0 0
        %2090 = vmatpush2.bf16.msra.mxu0 0
        %2091 = vmatprep.mubr.bf16.mxu0 0
        %2092 = vmatmul.mubr.bf16.gmra.mxu0 %v2045
        %v2093 = vpop.f32.mrf.mxu0
        %v2094 = vadd.f32 0.0, %v2093
        %v2095 = vpop.f32.mrf.mxu0
        %v2096 = vadd.f32 0.0, %v2095
        %v2097 = vpop.f32.mrf.mxu0
        %v2098 = vadd.f32 0.0, %v2097
        %v2099 = vpop.f32.mrf.mxu0
        %v2100 = vadd.f32 0.0, %v2099
        %2101 = vmatprep.mubr.bf16.mxu0 0
        %2102 = vmatmul.mubr.bf16.gmra.mxu0 %v2048
        %v2103 = vpop.f32.mrf.mxu0
        %v2104 = vadd.f32 0.0, %v2103
        %v2105 = vpop.f32.mrf.mxu0
        %v2106 = vadd.f32 0.0, %v2105
        %v2107 = vpop.f32.mrf.mxu0
        %v2108 = vadd.f32 0.0, %v2107
        %v2109 = vpop.f32.mrf.mxu0
        %v2110 = vadd.f32 0.0, %v2109
        %2111 = vmatprep.mubr.bf16.mxu0 0
        %2112 = vmatmul.mubr.bf16.gmra.mxu0 %v2051
        %v2113 = vpop.f32.mrf.mxu0
        %v2114 = vadd.f32 0.0, %v2113
        %v2115 = vpop.f32.mrf.mxu0
        %v2116 = vadd.f32 0.0, %v2115
        %v2117 = vpop.f32.mrf.mxu0
        %v2118 = vadd.f32 0.0, %v2117
        %v2119 = vpop.f32.mrf.mxu0
        %v2120 = vadd.f32 0.0, %v2119
        %2121 = vmatprep.mubr.bf16.mxu0 0
        %2122 = vmatmul.mubr.bf16.gmra.mxu0 %v2054
        %v2123 = vpop.f32.mrf.mxu0
        %v2124 = vadd.f32 0.0, %v2123
        %v2125 = vpop.f32.mrf.mxu0
        %v2126 = vadd.f32 0.0, %v2125
        %v2127 = vpop.f32.mrf.mxu0
        %v2128 = vadd.f32 0.0, %v2127
        %v2129 = vpop.f32.mrf.mxu0
        %v2130 = vadd.f32 0.0, %v2129
        %2131 = vmatprep.mubr.bf16.mxu0 0
        %2132 = vmatmul.mubr.bf16.gmra.mxu0 %v2057
        %v2133 = vpop.f32.mrf.mxu0
        %v2134 = vadd.f32 0.0, %v2133
        %v2135 = vpop.f32.mrf.mxu0
        %v2136 = vadd.f32 0.0, %v2135
        %v2137 = vpop.f32.mrf.mxu0
        %v2138 = vadd.f32 0.0, %v2137
        %v2139 = vpop.f32.mrf.mxu0
        %v2140 = vadd.f32 0.0, %v2139
        %2141 = vdwg.mxu0
        %v2142 = vadd.f32 %v1955, %v2094
        %v2143 = vadd.f32 %v1956, %v2096
        %v2144 = vadd.f32 %v1957, %v2098
        %v2145 = vadd.f32 %v1958, %v2100
        %v2146 = vadd.f32 %v1959, %v2104
        %v2147 = vadd.f32 %v1960, %v2106
        %v2148 = vadd.f32 %v1961, %v2108
        %v2149 = vadd.f32 %v1962, %v2110
        %v2150 = vadd.f32 %v1963, %v2114
        %v2151 = vadd.f32 %v1964, %v2116
        %v2152 = vadd.f32 %v1965, %v2118
        %v2153 = vadd.f32 %v1966, %v2120
        %v2154 = vadd.f32 %v1967, %v2124
        %v2155 = vadd.f32 %v1968, %v2126
        %v2156 = vadd.f32 %v1969, %v2128
        %v2157 = vadd.f32 %v1970, %v2130
        %v2158 = vadd.f32 %v1971, %v2134
        %v2159 = vadd.f32 %v1972, %v2136
        %v2160 = vadd.f32 %v1973, %v2138
        %v2161 = vadd.f32 %v1974, %v2140
        %v2162 = vld [vmem:[%s4] sm:$0xff]
        %v2163 = vld [vmem:[%s4 + $0x8] sm:$0xff]
        %v2164 = vld [vmem:[%s4 + $0x10] sm:$0xff]
        %v2165 = vld [vmem:[%s4 + $0x18] sm:$0xff]
        %v2166 = vld [vmem:[%s4 + $0x20] sm:$0xff]
        %v2167 = vld [vmem:[%s4 + $0x28] sm:$0xff]
        %v2168 = vld [vmem:[%s4 + $0x30] sm:$0xff]
        %v2169 = vld [vmem:[%s4 + $0x38] sm:$0xff]
        %v2170 = vld [vmem:[%s4 + $0x40] sm:$0xff]
        %v2171 = vld [vmem:[%s4 + $0x48] sm:$0xff]
        %2173 = vset.pattern.permute.xlu0 0
        %2174 = vperm.xlu0 %2173, %v2162
        %v2175 = vpop.permute.xlu0 %2174
        %2178 = vset.pattern.permute.xlu0 0
        %2179 = vperm.xlu0 %2178, %v2163
        %v2180 = vpop.permute.xlu0 %2179
        %2183 = vset.pattern.permute.xlu0 0
        %2184 = vperm.xlu0 %2183, %v2164
        %v2185 = vpop.permute.xlu0 %2184
        %2188 = vset.pattern.permute.xlu0 0
        %2189 = vperm.xlu0 %2188, %v2165
        %v2190 = vpop.permute.xlu0 %2189
        %2193 = vset.pattern.permute.xlu0 0
        %2194 = vperm.xlu0 %2193, %v2166
        %v2195 = vpop.permute.xlu0 %2194
        %2198 = vset.pattern.permute.xlu0 0
        %2199 = vperm.xlu0 %2198, %v2167
        %v2200 = vpop.permute.xlu0 %2199
        %2203 = vset.pattern.permute.xlu0 0
        %2204 = vperm.xlu0 %2203, %v2168
        %v2205 = vpop.permute.xlu0 %2204
        %2208 = vset.pattern.permute.xlu0 0
        %2209 = vperm.xlu0 %2208, %v2169
        %v2210 = vpop.permute.xlu0 %2209
        %2213 = vset.pattern.permute.xlu0 0
        %2214 = vperm.xlu0 %2213, %v2170
        %v2215 = vpop.permute.xlu0 %2214
        %2218 = vset.pattern.permute.xlu0 0
        %2219 = vperm.xlu0 %2218, %v2171
        %v2220 = vpop.permute.xlu0 %2219
        %v2222 = vadd.f32 %v2142, %v2175
        %v2223 = vadd.f32 %v2143, %v2175
        %v2224 = vadd.f32 %v2144, %v2180
        %v2225 = vadd.f32 %v2145, %v2180
        %v2226 = vadd.f32 %v2146, %v2185
        %v2227 = vadd.f32 %v2147, %v2185
        %v2228 = vadd.f32 %v2148, %v2190
        %v2229 = vadd.f32 %v2149, %v2190
        %v2230 = vadd.f32 %v2150, %v2195
        %v2231 = vadd.f32 %v2151, %v2195
        %v2232 = vadd.f32 %v2152, %v2200
        %v2233 = vadd.f32 %v2153, %v2200
        %v2234 = vadd.f32 %v2154, %v2205
        %v2235 = vadd.f32 %v2155, %v2205
        %v2236 = vadd.f32 %v2156, %v2210
        %v2237 = vadd.f32 %v2157, %v2210
        %v2238 = vadd.f32 %v2158, %v2215
        %v2239 = vadd.f32 %v2159, %v2215
        %v2240 = vadd.f32 %v2160, %v2220
        %v2241 = vadd.f32 %v2161, %v2220
        %v2242 = vmul.f32 %v2222, 0.01
        %v2243 = vmul.f32 %v2223, 0.01
        %v2244 = vmul.f32 %v2224, 0.01
        %v2245 = vmul.f32 %v2225, 0.01
        %v2246 = vmul.f32 %v2226, 0.01
        %v2247 = vmul.f32 %v2227, 0.01
        %v2248 = vmul.f32 %v2228, 0.01
        %v2249 = vmul.f32 %v2229, 0.01
        %v2250 = vmul.f32 %v2230, 0.01
        %v2251 = vmul.f32 %v2231, 0.01
        %v2252 = vmul.f32 %v2232, 0.01
        %v2253 = vmul.f32 %v2233, 0.01
        %v2254 = vmul.f32 %v2234, 0.01
        %v2255 = vmul.f32 %v2235, 0.01
        %v2256 = vmul.f32 %v2236, 0.01
        %v2257 = vmul.f32 %v2237, 0.01
        %v2258 = vmul.f32 %v2238, 0.01
        %v2259 = vmul.f32 %v2239, 0.01
        %v2260 = vmul.f32 %v2240, 0.01
        %v2261 = vmul.f32 %v2241, 0.01
        %v2262 = vmax.f32 %v2222, %v2242
        %v2263 = vmax.f32 %v2223, %v2243
        %v2264 = vmax.f32 %v2224, %v2244
        %v2265 = vmax.f32 %v2225, %v2245
        %v2266 = vmax.f32 %v2226, %v2246
        %v2267 = vmax.f32 %v2227, %v2247
        %v2268 = vmax.f32 %v2228, %v2248
        %v2269 = vmax.f32 %v2229, %v2249
        %v2270 = vmax.f32 %v2230, %v2250
        %v2271 = vmax.f32 %v2231, %v2251
        %v2272 = vmax.f32 %v2232, %v2252
        %v2273 = vmax.f32 %v2233, %v2253
        %v2274 = vmax.f32 %v2234, %v2254
        %v2275 = vmax.f32 %v2235, %v2255
        %v2276 = vmax.f32 %v2236, %v2256
        %v2277 = vmax.f32 %v2237, %v2257
        %v2278 = vmax.f32 %v2238, %v2258
        %v2279 = vmax.f32 %v2239, %v2259
        %v2280 = vmax.f32 %v2240, %v2260
        %v2281 = vmax.f32 %v2241, %v2261
        %v2282 = vpack.c.bf16 %v2264, %v2262
        %v2283 = vpack.c.bf16 %v2265, %v2263
        %v2284 = vpack.c.bf16 %v2268, %v2266
        %v2285 = vpack.c.bf16 %v2269, %v2267
        %v2286 = vpack.c.bf16 %v2272, %v2270
        %v2287 = vpack.c.bf16 %v2273, %v2271
        %v2288 = vpack.c.bf16 %v2276, %v2274
        %v2289 = vpack.c.bf16 %v2277, %v2275
        %v2290 = vpack.c.bf16 %v2280, %v2278
        %v2291 = vpack.c.bf16 %v2281, %v2279
        %2297 = vrot.lane.b32.xlu0 %v2283, 17
        %v2298 = vpop.permute.xlu0 %2297
        %2299 = vrot.lane.b32.xlu0 %v2285, 17
        %v2300 = vpop.permute.xlu0 %2299
        %2301 = vrot.lane.b32.xlu0 %v2287, 17
        %v2302 = vpop.permute.xlu0 %2301
        %2303 = vrot.lane.b32.xlu0 %v2289, 17
        %v2304 = vpop.permute.xlu0 %2303
        %2305 = vrot.lane.b32.xlu0 %v2291, 17
        %v2306 = vpop.permute.xlu0 %2305
        %2312 = vrot.lane.b32.xlu0 %v2282, 17
        %v2313 = vpop.permute.xlu0 %2312
        %2314 = vrot.lane.b32.xlu0 %v2284, 17
        %v2315 = vpop.permute.xlu0 %2314
        %2316 = vrot.lane.b32.xlu0 %v2286, 17
        %v2317 = vpop.permute.xlu0 %2316
        %2318 = vrot.lane.b32.xlu0 %v2288, 17
        %v2319 = vpop.permute.xlu0 %2318
        %2320 = vrot.lane.b32.xlu0 %v2290, 17
        %v2321 = vpop.permute.xlu0 %2320
        %v2322 = vsel %vm607, %v2313, %v2298
        %v2323 = vsel %vm607, %v2315, %v2300
        %v2324 = vsel %vm607, %v2317, %v2302
        %v2325 = vsel %vm607, %v2319, %v2304
        %v2326 = vsel %vm607, %v2321, %v2306
        %v2334 = vsel %vm610, %v2298, %v2313
        %v2338 = vsel %vm610, %v2300, %v2315
        %v2342 = vsel %vm610, %v2302, %v2317
        %v2346 = vsel %vm610, %v2304, %v2319
        %v2350 = vsel %vm610, %v2306, %v2321
        %v2352 = vmul.bf16 %v2334, %v626
        %v2353 = vmul.bf16 %v2322, %v633
        %v2354 = vmul.bf16 %v2338, %v626
        %v2355 = vmul.bf16 %v2323, %v633
        %v2356 = vmul.bf16 %v2342, %v626
        %v2357 = vmul.bf16 %v2324, %v633
        %v2358 = vmul.bf16 %v2346, %v626
        %v2359 = vmul.bf16 %v2325, %v633
        %v2360 = vmul.bf16 %v2350, %v626
        %v2361 = vmul.bf16 %v2326, %v633
        %v2362 = vld [vmem:[%s5] sm:$0xf]
        %v2363 = vld [vmem:[%s5 + $0x4] sm:$0xf]
        %v2364 = vld [vmem:[%s5 + $0x8] sm:$0xf]
        %v2365 = vld [vmem:[%s5 + $0xc] sm:$0xf]
        %v2366 = vld [vmem:[%s5 + $0x10] sm:$0xf]
        %2367 = vrot.lane.b32.xlu0 %v2283, 16
        %v2368 = vpop.permute.xlu0 %2367
        %2369 = vrot.lane.b32.xlu0 %v2285, 16
        %v2370 = vpop.permute.xlu0 %2369
        %2371 = vrot.lane.b32.xlu0 %v2287, 16
        %v2372 = vpop.permute.xlu0 %2371
        %2373 = vrot.lane.b32.xlu0 %v2289, 16
        %v2374 = vpop.permute.xlu0 %2373
        %2375 = vrot.lane.b32.xlu0 %v2291, 16
        %v2376 = vpop.permute.xlu0 %2375
        %2377 = vrot.lane.b32.xlu0 %v2282, 16
        %v2378 = vpop.permute.xlu0 %2377
        %2379 = vrot.lane.b32.xlu0 %v2284, 16
        %v2380 = vpop.permute.xlu0 %2379
        %2381 = vrot.lane.b32.xlu0 %v2286, 16
        %v2382 = vpop.permute.xlu0 %2381
        %2383 = vrot.lane.b32.xlu0 %v2288, 16
        %v2384 = vpop.permute.xlu0 %2383
        %2385 = vrot.lane.b32.xlu0 %v2290, 16
        %v2386 = vpop.permute.xlu0 %2385
        %v2387 = vsel %vm650, %v2378, %v2368
        %v2388 = vsel %vm650, %v2380, %v2370
        %v2389 = vsel %vm650, %v2382, %v2372
        %v2390 = vsel %vm650, %v2384, %v2374
        %v2391 = vsel %vm650, %v2386, %v2376
        %v2399 = vsel %vm653, %v2368, %v2378
        %v2403 = vsel %vm653, %v2370, %v2380
        %v2407 = vsel %vm653, %v2372, %v2382
        %v2411 = vsel %vm653, %v2374, %v2384
        %v2415 = vsel %vm653, %v2376, %v2386
        %v2417 = vmul.bf16 %v2399, %v664
        %v2418 = vmul.bf16 %v2387, %v671
        %v2419 = vmul.bf16 %v2403, %v664
        %v2420 = vmul.bf16 %v2388, %v671
        %v2421 = vmul.bf16 %v2407, %v664
        %v2422 = vmul.bf16 %v2389, %v671
        %v2423 = vmul.bf16 %v2411, %v664
        %v2424 = vmul.bf16 %v2390, %v671
        %v2425 = vmul.bf16 %v2415, %v664
        %v2426 = vmul.bf16 %v2391, %v671
        %s2427 = scalar_lea.vmem %s5, 20
        %v2428 = vld [vmem:[%s2427] sm:$0xf]
        %v2429 = vld [vmem:[%s2427 + $0x4] sm:$0xf]
        %v2430 = vld [vmem:[%s2427 + $0x8] sm:$0xf]
        %v2431 = vld [vmem:[%s2427 + $0xc] sm:$0xf]
        %v2432 = vld [vmem:[%s2427 + $0x10] sm:$0xf]
        %v2438 = vunpack.c.l.b16 %v2428
        %v2439 = vunpack.c.l.b16 %v2429
        %v2440 = vunpack.c.l.b16 %v2430
        %v2441 = vunpack.c.l.b16 %v2431
        %v2442 = vunpack.c.l.b16 %v2432
        %v2443 = vpack.c.b16 %v2439, %v2438
        %v2444 = vpack.c.b16 %v2441, %v2440
        %v2445 = vpack.c.b16 %v2442, %v2442
        %vm2446 = vcmask 654336
        %v2448 = vsel %vm2446, %v2443, 0
        %v2451 = vsel %vm2446, %v2444, 0
        %v2454 = vsel %vm2446, %v2445, 0
        %2456 = vmatprep.subr.bf16.mxu0 0
        %2457 = vmatpush1.bf16.msra.mxu0 0
        %2458 = vmatprep.subr.bf16.mxu0 0
        %2459 = vmatpush1.bf16.msra.mxu0 0
        %2460 = vmatprep.subr.bf16.mxu0 0
        %2461 = vmatpush1.bf16.msra.mxu0 0
        %2462 = vmatprep.subr.bf16.mxu0 %v2426
        %2463 = vmatpush1.bf16.msra.mxu0 %v2425
        %2464 = vmatprep.subr.bf16.mxu0 %v2424
        %2465 = vmatpush1.bf16.msra.mxu0 %v2423
        %2466 = vmatprep.subr.bf16.mxu0 %v2422
        %2467 = vmatpush1.bf16.msra.mxu0 %v2421
        %2468 = vmatprep.subr.bf16.mxu0 %v2420
        %2469 = vmatpush1.bf16.msra.mxu0 %v2419
        %2470 = vmatprep.subr.bf16.mxu0 %v2418
        %2471 = vmatpush1.bf16.msra.mxu0 %v2417
        %2472 = vmatprep.subr.bf16.mxu0 0
        %2473 = vmatpush2.bf16.msra.mxu0 0
        %2474 = vmatprep.subr.bf16.mxu0 0
        %2475 = vmatpush2.bf16.msra.mxu0 0
        %2476 = vmatprep.subr.bf16.mxu0 0
        %2477 = vmatpush2.bf16.msra.mxu0 0
        %2478 = vmatprep.subr.bf16.mxu0 0
        %2479 = vmatpush2.bf16.msra.mxu0 0
        %2480 = vmatprep.subr.bf16.mxu0 0
        %2481 = vmatpush2.bf16.msra.mxu0 0
        %2482 = vmatprep.subr.bf16.mxu0 0
        %2483 = vmatpush2.bf16.msra.mxu0 0
        %2484 = vmatprep.subr.bf16.mxu0 0
        %2485 = vmatpush2.bf16.msra.mxu0 0
        %2486 = vmatprep.subr.bf16.mxu0 0
        %2487 = vmatpush2.bf16.msra.mxu0 0
        %2488 = vmatprep.mubr.bf16.mxu0 0
        %2489 = vmatmul.mubr.bf16.gmra.mxu0 %v2448
        %v2490 = vpop.f32.mrf.mxu0
        %v2491 = vadd.f32 0.0, %v2490
        %v2492 = vpop.f32.mrf.mxu0
        %v2493 = vadd.f32 0.0, %v2492
        %v2494 = vpop.f32.mrf.mxu0
        %v2495 = vadd.f32 0.0, %v2494
        %v2496 = vpop.f32.mrf.mxu0
        %v2497 = vadd.f32 0.0, %v2496
        %2498 = vmatprep.mubr.bf16.mxu0 0
        %2499 = vmatmul.mubr.bf16.gmra.mxu0 %v2451
        %v2500 = vpop.f32.mrf.mxu0
        %v2501 = vadd.f32 0.0, %v2500
        %v2502 = vpop.f32.mrf.mxu0
        %v2503 = vadd.f32 0.0, %v2502
        %v2504 = vpop.f32.mrf.mxu0
        %v2505 = vadd.f32 0.0, %v2504
        %v2506 = vpop.f32.mrf.mxu0
        %v2507 = vadd.f32 0.0, %v2506
        %2508 = vmatprep.mubr.bf16.mxu0 0
        %2509 = vmatmul.mubr.bf16.gmra.mxu0 %v2454
        %v2510 = vpop.f32.mrf.mxu0
        %v2511 = vadd.f32 0.0, %v2510
        %v2512 = vpop.f32.mrf.mxu0
        %v2513 = vadd.f32 0.0, %v2512
        %v2514 = vpop.f32.mrf.mxu0
        %v2515 = vpop.f32.mrf.mxu0
        %2516 = vdwg.mxu0
        %v2522 = vunpack.c.l.b16 %v2362
        %v2523 = vunpack.c.l.b16 %v2363
        %v2524 = vunpack.c.l.b16 %v2364
        %v2525 = vunpack.c.l.b16 %v2365
        %v2526 = vunpack.c.l.b16 %v2366
        %v2527 = vpack.c.b16 %v2523, %v2522
        %v2528 = vpack.c.b16 %v2525, %v2524
        %v2529 = vpack.c.b16 %v2526, %v2526
        %v2531 = vsel %vm2446, %v2527, 0
        %v2534 = vsel %vm2446, %v2528, 0
        %v2537 = vsel %vm2446, %v2529, 0
        %2539 = vmatprep.subr.bf16.mxu0 0
        %2540 = vmatpush1.bf16.msra.mxu0 0
        %2541 = vmatprep.subr.bf16.mxu0 0
        %2542 = vmatpush1.bf16.msra.mxu0 0
        %2543 = vmatprep.subr.bf16.mxu0 0
        %2544 = vmatpush1.bf16.msra.mxu0 0
        %2545 = vmatprep.subr.bf16.mxu0 %v2361
        %2546 = vmatpush1.bf16.msra.mxu0 %v2360
        %2547 = vmatprep.subr.bf16.mxu0 %v2359
        %2548 = vmatpush1.bf16.msra.mxu0 %v2358
        %2549 = vmatprep.subr.bf16.mxu0 %v2357
        %2550 = vmatpush1.bf16.msra.mxu0 %v2356
        %2551 = vmatprep.subr.bf16.mxu0 %v2355
        %2552 = vmatpush1.bf16.msra.mxu0 %v2354
        %2553 = vmatprep.subr.bf16.mxu0 %v2353
        %2554 = vmatpush1.bf16.msra.mxu0 %v2352
        %2555 = vmatprep.subr.bf16.mxu0 0
        %2556 = vmatpush2.bf16.msra.mxu0 0
        %2557 = vmatprep.subr.bf16.mxu0 0
        %2558 = vmatpush2.bf16.msra.mxu0 0
        %2559 = vmatprep.subr.bf16.mxu0 0
        %2560 = vmatpush2.bf16.msra.mxu0 0
        %2561 = vmatprep.subr.bf16.mxu0 0
        %2562 = vmatpush2.bf16.msra.mxu0 0
        %2563 = vmatprep.subr.bf16.mxu0 0
        %2564 = vmatpush2.bf16.msra.mxu0 0
        %2565 = vmatprep.subr.bf16.mxu0 0
        %2566 = vmatpush2.bf16.msra.mxu0 0
        %2567 = vmatprep.subr.bf16.mxu0 0
        %2568 = vmatpush2.bf16.msra.mxu0 0
        %2569 = vmatprep.subr.bf16.mxu0 0
        %2570 = vmatpush2.bf16.msra.mxu0 0
        %2571 = vmatprep.mubr.bf16.mxu0 0
        %2572 = vmatmul.mubr.bf16.gmra.mxu0 %v2531
        %v2573 = vpop.f32.mrf.mxu0
        %v2574 = vadd.f32 %v2491, %v2573
        %v2575 = vpop.f32.mrf.mxu0
        %v2576 = vadd.f32 %v2493, %v2575
        %v2577 = vpop.f32.mrf.mxu0
        %v2578 = vadd.f32 %v2495, %v2577
        %v2579 = vpop.f32.mrf.mxu0
        %v2580 = vadd.f32 %v2497, %v2579
        %2581 = vmatprep.mubr.bf16.mxu0 0
        %2582 = vmatmul.mubr.bf16.gmra.mxu0 %v2534
        %v2583 = vpop.f32.mrf.mxu0
        %v2584 = vadd.f32 %v2501, %v2583
        %v2585 = vpop.f32.mrf.mxu0
        %v2586 = vadd.f32 %v2503, %v2585
        %v2587 = vpop.f32.mrf.mxu0
        %v2588 = vadd.f32 %v2505, %v2587
        %v2589 = vpop.f32.mrf.mxu0
        %v2590 = vadd.f32 %v2507, %v2589
        %2591 = vmatprep.mubr.bf16.mxu0 0
        %2592 = vmatmul.mubr.bf16.gmra.mxu0 %v2537
        %v2593 = vpop.f32.mrf.mxu0
        %v2594 = vadd.f32 %v2511, %v2593
        %v2595 = vpop.f32.mrf.mxu0
        %v2596 = vadd.f32 %v2513, %v2595
        %v2597 = vpop.f32.mrf.mxu0
        %v2598 = vpop.f32.mrf.mxu0
        %2599 = vdwg.mxu0
        %2600 = vrot.lane.b32.xlu0 %v2283, 15
        %v2601 = vpop.permute.xlu0 %2600
        %2602 = vrot.lane.b32.xlu0 %v2285, 15
        %v2603 = vpop.permute.xlu0 %2602
        %2604 = vrot.lane.b32.xlu0 %v2287, 15
        %v2605 = vpop.permute.xlu0 %2604
        %2606 = vrot.lane.b32.xlu0 %v2289, 15
        %v2607 = vpop.permute.xlu0 %2606
        %2608 = vrot.lane.b32.xlu0 %v2291, 15
        %v2609 = vpop.permute.xlu0 %2608
        %2610 = vrot.lane.b32.xlu0 %v2282, 15
        %v2611 = vpop.permute.xlu0 %2610
        %2612 = vrot.lane.b32.xlu0 %v2284, 15
        %v2613 = vpop.permute.xlu0 %2612
        %2614 = vrot.lane.b32.xlu0 %v2286, 15
        %v2615 = vpop.permute.xlu0 %2614
        %2616 = vrot.lane.b32.xlu0 %v2288, 15
        %v2617 = vpop.permute.xlu0 %2616
        %2618 = vrot.lane.b32.xlu0 %v2290, 15
        %v2619 = vpop.permute.xlu0 %2618
        %v2620 = vsel %vm935, %v2611, %v2601
        %v2621 = vsel %vm935, %v2613, %v2603
        %v2622 = vsel %vm935, %v2615, %v2605
        %v2623 = vsel %vm935, %v2617, %v2607
        %v2624 = vsel %vm935, %v2619, %v2609
        %v2632 = vsel %vm938, %v2601, %v2611
        %v2636 = vsel %vm938, %v2603, %v2613
        %v2640 = vsel %vm938, %v2605, %v2615
        %v2644 = vsel %vm938, %v2607, %v2617
        %v2648 = vsel %vm938, %v2609, %v2619
        %v2650 = vmul.bf16 %v2632, %v946
        %v2651 = vmul.bf16 %v2620, %v950
        %v2652 = vmul.bf16 %v2636, %v946
        %v2653 = vmul.bf16 %v2621, %v950
        %v2654 = vmul.bf16 %v2640, %v946
        %v2655 = vmul.bf16 %v2622, %v950
        %v2656 = vmul.bf16 %v2644, %v946
        %v2657 = vmul.bf16 %v2623, %v950
        %v2658 = vmul.bf16 %v2648, %v946
        %v2659 = vmul.bf16 %v2624, %v950
        %s2660 = scalar_lea.vmem %s5, 40
        %v2661 = vld [vmem:[%s2660] sm:$0xf]
        %v2662 = vld [vmem:[%s2660 + $0x4] sm:$0xf]
        %v2663 = vld [vmem:[%s2660 + $0x8] sm:$0xf]
        %v2664 = vld [vmem:[%s2660 + $0xc] sm:$0xf]
        %v2665 = vld [vmem:[%s2660 + $0x10] sm:$0xf]
        %v2671 = vunpack.c.l.b16 %v2661
        %v2672 = vunpack.c.l.b16 %v2662
        %v2673 = vunpack.c.l.b16 %v2663
        %v2674 = vunpack.c.l.b16 %v2664
        %v2675 = vunpack.c.l.b16 %v2665
        %v2676 = vpack.c.b16 %v2672, %v2671
        %v2677 = vpack.c.b16 %v2674, %v2673
        %v2678 = vpack.c.b16 %v2675, %v2675
        %v2680 = vsel %vm2446, %v2676, 0
        %v2683 = vsel %vm2446, %v2677, 0
        %v2686 = vsel %vm2446, %v2678, 0
        %2688 = vmatprep.subr.bf16.mxu0 0
        %2689 = vmatpush1.bf16.msra.mxu0 0
        %2690 = vmatprep.subr.bf16.mxu0 0
        %2691 = vmatpush1.bf16.msra.mxu0 0
        %2692 = vmatprep.subr.bf16.mxu0 0
        %2693 = vmatpush1.bf16.msra.mxu0 0
        %2694 = vmatprep.subr.bf16.mxu0 %v2659
        %2695 = vmatpush1.bf16.msra.mxu0 %v2658
        %2696 = vmatprep.subr.bf16.mxu0 %v2657
        %2697 = vmatpush1.bf16.msra.mxu0 %v2656
        %2698 = vmatprep.subr.bf16.mxu0 %v2655
        %2699 = vmatpush1.bf16.msra.mxu0 %v2654
        %2700 = vmatprep.subr.bf16.mxu0 %v2653
        %2701 = vmatpush1.bf16.msra.mxu0 %v2652
        %2702 = vmatprep.subr.bf16.mxu0 %v2651
        %2703 = vmatpush1.bf16.msra.mxu0 %v2650
        %2704 = vmatprep.subr.bf16.mxu0 0
        %2705 = vmatpush2.bf16.msra.mxu0 0
        %2706 = vmatprep.subr.bf16.mxu0 0
        %2707 = vmatpush2.bf16.msra.mxu0 0
        %2708 = vmatprep.subr.bf16.mxu0 0
        %2709 = vmatpush2.bf16.msra.mxu0 0
        %2710 = vmatprep.subr.bf16.mxu0 0
        %2711 = vmatpush2.bf16.msra.mxu0 0
        %2712 = vmatprep.subr.bf16.mxu0 0
        %2713 = vmatpush2.bf16.msra.mxu0 0
        %2714 = vmatprep.subr.bf16.mxu0 0
        %2715 = vmatpush2.bf16.msra.mxu0 0
        %2716 = vmatprep.subr.bf16.mxu0 0
        %2717 = vmatpush2.bf16.msra.mxu0 0
        %2718 = vmatprep.subr.bf16.mxu0 0
        %2719 = vmatpush2.bf16.msra.mxu0 0
        %2720 = vmatprep.mubr.bf16.mxu0 0
        %2721 = vmatmul.mubr.bf16.gmra.mxu0 %v2680
        %v2722 = vpop.f32.mrf.mxu0
        %v2723 = vadd.f32 0.0, %v2722
        %v2724 = vpop.f32.mrf.mxu0
        %v2725 = vadd.f32 0.0, %v2724
        %v2726 = vpop.f32.mrf.mxu0
        %v2727 = vadd.f32 0.0, %v2726
        %v2728 = vpop.f32.mrf.mxu0
        %v2729 = vadd.f32 0.0, %v2728
        %2730 = vmatprep.mubr.bf16.mxu0 0
        %2731 = vmatmul.mubr.bf16.gmra.mxu0 %v2683
        %v2732 = vpop.f32.mrf.mxu0
        %v2733 = vadd.f32 0.0, %v2732
        %v2734 = vpop.f32.mrf.mxu0
        %v2735 = vadd.f32 0.0, %v2734
        %v2736 = vpop.f32.mrf.mxu0
        %v2737 = vadd.f32 0.0, %v2736
        %v2738 = vpop.f32.mrf.mxu0
        %v2739 = vadd.f32 0.0, %v2738
        %2740 = vmatprep.mubr.bf16.mxu0 0
        %2741 = vmatmul.mubr.bf16.gmra.mxu0 %v2686
        %v2742 = vpop.f32.mrf.mxu0
        %v2743 = vadd.f32 0.0, %v2742
        %v2744 = vpop.f32.mrf.mxu0
        %v2745 = vadd.f32 0.0, %v2744
        %v2746 = vpop.f32.mrf.mxu0
        %v2747 = vpop.f32.mrf.mxu0
        %2748 = vdwg.mxu0
        %v2749 = vadd.f32 %v2574, %v2723
        %v2750 = vadd.f32 %v2576, %v2725
        %v2751 = vadd.f32 %v2578, %v2727
        %v2752 = vadd.f32 %v2580, %v2729
        %v2753 = vadd.f32 %v2584, %v2733
        %v2754 = vadd.f32 %v2586, %v2735
        %v2755 = vadd.f32 %v2588, %v2737
        %v2756 = vadd.f32 %v2590, %v2739
        %v2757 = vadd.f32 %v2594, %v2743
        %v2758 = vadd.f32 %v2596, %v2745
        %2759 = vrot.lane.b32.xlu0 %v2283, 1
        %v2760 = vpop.permute.xlu0 %2759
        %2761 = vrot.lane.b32.xlu0 %v2285, 1
        %v2762 = vpop.permute.xlu0 %2761
        %2763 = vrot.lane.b32.xlu0 %v2287, 1
        %v2764 = vpop.permute.xlu0 %2763
        %2765 = vrot.lane.b32.xlu0 %v2289, 1
        %v2766 = vpop.permute.xlu0 %2765
        %2767 = vrot.lane.b32.xlu0 %v2291, 1
        %v2768 = vpop.permute.xlu0 %2767
        %2769 = vrot.lane.b32.xlu0 %v2282, 1
        %v2770 = vpop.permute.xlu0 %2769
        %2771 = vrot.lane.b32.xlu0 %v2284, 1
        %v2772 = vpop.permute.xlu0 %2771
        %2773 = vrot.lane.b32.xlu0 %v2286, 1
        %v2774 = vpop.permute.xlu0 %2773
        %2775 = vrot.lane.b32.xlu0 %v2288, 1
        %v2776 = vpop.permute.xlu0 %2775
        %2777 = vrot.lane.b32.xlu0 %v2290, 1
        %v2778 = vpop.permute.xlu0 %2777
        %v2779 = vsel %vm1111, %v2770, %v2760
        %v2780 = vsel %vm1111, %v2772, %v2762
        %v2781 = vsel %vm1111, %v2774, %v2764
        %v2782 = vsel %vm1111, %v2776, %v2766
        %v2783 = vsel %vm1111, %v2778, %v2768
        %v2791 = vsel %vm1114, %v2760, %v2770
        %v2795 = vsel %vm1114, %v2762, %v2772
        %v2799 = vsel %vm1114, %v2764, %v2774
        %v2803 = vsel %vm1114, %v2766, %v2776
        %v2807 = vsel %vm1114, %v2768, %v2778
        %v2809 = vmul.bf16 %v2791, %v1122
        %v2810 = vmul.bf16 %v2779, %v1126
        %v2811 = vmul.bf16 %v2795, %v1122
        %v2812 = vmul.bf16 %v2780, %v1126
        %v2813 = vmul.bf16 %v2799, %v1122
        %v2814 = vmul.bf16 %v2781, %v1126
        %v2815 = vmul.bf16 %v2803, %v1122
        %v2816 = vmul.bf16 %v2782, %v1126
        %v2817 = vmul.bf16 %v2807, %v1122
        %v2818 = vmul.bf16 %v2783, %v1126
        %s2819 = scalar_lea.vmem %s5, 60
        %v2820 = vld [vmem:[%s2819] sm:$0xf]
        %v2821 = vld [vmem:[%s2819 + $0x4] sm:$0xf]
        %v2822 = vld [vmem:[%s2819 + $0x8] sm:$0xf]
        %v2823 = vld [vmem:[%s2819 + $0xc] sm:$0xf]
        %v2824 = vld [vmem:[%s2819 + $0x10] sm:$0xf]
        %v2830 = vunpack.c.l.b16 %v2820
        %v2831 = vunpack.c.l.b16 %v2821
        %v2832 = vunpack.c.l.b16 %v2822
        %v2833 = vunpack.c.l.b16 %v2823
        %v2834 = vunpack.c.l.b16 %v2824
        %v2835 = vpack.c.b16 %v2831, %v2830
        %v2836 = vpack.c.b16 %v2833, %v2832
        %v2837 = vpack.c.b16 %v2834, %v2834
        %v2839 = vsel %vm2446, %v2835, 0
        %v2842 = vsel %vm2446, %v2836, 0
        %v2845 = vsel %vm2446, %v2837, 0
        %2847 = vmatprep.subr.bf16.mxu0 0
        %2848 = vmatpush1.bf16.msra.mxu0 0
        %2849 = vmatprep.subr.bf16.mxu0 0
        %2850 = vmatpush1.bf16.msra.mxu0 0
        %2851 = vmatprep.subr.bf16.mxu0 0
        %2852 = vmatpush1.bf16.msra.mxu0 0
        %2853 = vmatprep.subr.bf16.mxu0 %v2818
        %2854 = vmatpush1.bf16.msra.mxu0 %v2817
        %2855 = vmatprep.subr.bf16.mxu0 %v2816
        %2856 = vmatpush1.bf16.msra.mxu0 %v2815
        %2857 = vmatprep.subr.bf16.mxu0 %v2814
        %2858 = vmatpush1.bf16.msra.mxu0 %v2813
        %2859 = vmatprep.subr.bf16.mxu0 %v2812
        %2860 = vmatpush1.bf16.msra.mxu0 %v2811
        %2861 = vmatprep.subr.bf16.mxu0 %v2810
        %2862 = vmatpush1.bf16.msra.mxu0 %v2809
        %2863 = vmatprep.subr.bf16.mxu0 0
        %2864 = vmatpush2.bf16.msra.mxu0 0
        %2865 = vmatprep.subr.bf16.mxu0 0
        %2866 = vmatpush2.bf16.msra.mxu0 0
        %2867 = vmatprep.subr.bf16.mxu0 0
        %2868 = vmatpush2.bf16.msra.mxu0 0
        %2869 = vmatprep.subr.bf16.mxu0 0
        %2870 = vmatpush2.bf16.msra.mxu0 0
        %2871 = vmatprep.subr.bf16.mxu0 0
        %2872 = vmatpush2.bf16.msra.mxu0 0
        %2873 = vmatprep.subr.bf16.mxu0 0
        %2874 = vmatpush2.bf16.msra.mxu0 0
        %2875 = vmatprep.subr.bf16.mxu0 0
        %2876 = vmatpush2.bf16.msra.mxu0 0
        %2877 = vmatprep.subr.bf16.mxu0 0
        %2878 = vmatpush2.bf16.msra.mxu0 0
        %2879 = vmatprep.mubr.bf16.mxu0 0
        %2880 = vmatmul.mubr.bf16.gmra.mxu0 %v2839
        %v2881 = vpop.f32.mrf.mxu0
        %v2882 = vadd.f32 0.0, %v2881
        %v2883 = vpop.f32.mrf.mxu0
        %v2884 = vadd.f32 0.0, %v2883
        %v2885 = vpop.f32.mrf.mxu0
        %v2886 = vadd.f32 0.0, %v2885
        %v2887 = vpop.f32.mrf.mxu0
        %v2888 = vadd.f32 0.0, %v2887
        %2889 = vmatprep.mubr.bf16.mxu0 0
        %2890 = vmatmul.mubr.bf16.gmra.mxu0 %v2842
        %v2891 = vpop.f32.mrf.mxu0
        %v2892 = vadd.f32 0.0, %v2891
        %v2893 = vpop.f32.mrf.mxu0
        %v2894 = vadd.f32 0.0, %v2893
        %v2895 = vpop.f32.mrf.mxu0
        %v2896 = vadd.f32 0.0, %v2895
        %v2897 = vpop.f32.mrf.mxu0
        %v2898 = vadd.f32 0.0, %v2897
        %2899 = vmatprep.mubr.bf16.mxu0 0
        %2900 = vmatmul.mubr.bf16.gmra.mxu0 %v2845
        %v2901 = vpop.f32.mrf.mxu0
        %v2902 = vadd.f32 0.0, %v2901
        %v2903 = vpop.f32.mrf.mxu0
        %v2904 = vadd.f32 0.0, %v2903
        %v2905 = vpop.f32.mrf.mxu0
        %v2906 = vpop.f32.mrf.mxu0
        %2907 = vdwg.mxu0
        %v2908 = vadd.f32 %v2749, %v2882
        %v2909 = vadd.f32 %v2750, %v2884
        %v2910 = vadd.f32 %v2751, %v2886
        %v2911 = vadd.f32 %v2752, %v2888
        %v2912 = vadd.f32 %v2753, %v2892
        %v2913 = vadd.f32 %v2754, %v2894
        %v2914 = vadd.f32 %v2755, %v2896
        %v2915 = vadd.f32 %v2756, %v2898
        %v2916 = vadd.f32 %v2757, %v2902
        %v2917 = vadd.f32 %v2758, %v2904
        %v2918 = vmul.bf16 %v2282, %v1286
        %v2919 = vmul.bf16 %v2283, %v1290
        %v2920 = vmul.bf16 %v2284, %v1286
        %v2921 = vmul.bf16 %v2285, %v1290
        %v2922 = vmul.bf16 %v2286, %v1286
        %v2923 = vmul.bf16 %v2287, %v1290
        %v2924 = vmul.bf16 %v2288, %v1286
        %v2925 = vmul.bf16 %v2289, %v1290
        %v2926 = vmul.bf16 %v2290, %v1286
        %v2927 = vmul.bf16 %v2291, %v1290
        %s2928 = scalar_lea.vmem %s5, 80
        %v2929 = vld [vmem:[%s2928] sm:$0xf]
        %v2930 = vld [vmem:[%s2928 + $0x4] sm:$0xf]
        %v2931 = vld [vmem:[%s2928 + $0x8] sm:$0xf]
        %v2932 = vld [vmem:[%s2928 + $0xc] sm:$0xf]
        %v2933 = vld [vmem:[%s2928 + $0x10] sm:$0xf]
        %v2939 = vunpack.c.l.b16 %v2929
        %v2940 = vunpack.c.l.b16 %v2930
        %v2941 = vunpack.c.l.b16 %v2931
        %v2942 = vunpack.c.l.b16 %v2932
        %v2943 = vunpack.c.l.b16 %v2933
        %v2944 = vpack.c.b16 %v2940, %v2939
        %v2945 = vpack.c.b16 %v2942, %v2941
        %v2946 = vpack.c.b16 %v2943, %v2943
        %v2948 = vsel %vm2446, %v2944, 0
        %v2951 = vsel %vm2446, %v2945, 0
        %v2954 = vsel %vm2446, %v2946, 0
        %2956 = vmatprep.subr.bf16.mxu0 0
        %2957 = vmatpush1.bf16.msra.mxu0 0
        %2958 = vmatprep.subr.bf16.mxu0 0
        %2959 = vmatpush1.bf16.msra.mxu0 0
        %2960 = vmatprep.subr.bf16.mxu0 0
        %2961 = vmatpush1.bf16.msra.mxu0 0
        %2962 = vmatprep.subr.bf16.mxu0 %v2927
        %2963 = vmatpush1.bf16.msra.mxu0 %v2926
        %2964 = vmatprep.subr.bf16.mxu0 %v2925
        %2965 = vmatpush1.bf16.msra.mxu0 %v2924
        %2966 = vmatprep.subr.bf16.mxu0 %v2923
        %2967 = vmatpush1.bf16.msra.mxu0 %v2922
        %2968 = vmatprep.subr.bf16.mxu0 %v2921
        %2969 = vmatpush1.bf16.msra.mxu0 %v2920
        %2970 = vmatprep.subr.bf16.mxu0 %v2919
        %2971 = vmatpush1.bf16.msra.mxu0 %v2918
        %2972 = vmatprep.subr.bf16.mxu0 0
        %2973 = vmatpush2.bf16.msra.mxu0 0
        %2974 = vmatprep.subr.bf16.mxu0 0
        %2975 = vmatpush2.bf16.msra.mxu0 0
        %2976 = vmatprep.subr.bf16.mxu0 0
        %2977 = vmatpush2.bf16.msra.mxu0 0
        %2978 = vmatprep.subr.bf16.mxu0 0
        %2979 = vmatpush2.bf16.msra.mxu0 0
        %2980 = vmatprep.subr.bf16.mxu0 0
        %2981 = vmatpush2.bf16.msra.mxu0 0
        %2982 = vmatprep.subr.bf16.mxu0 0
        %2983 = vmatpush2.bf16.msra.mxu0 0
        %2984 = vmatprep.subr.bf16.mxu0 0
        %2985 = vmatpush2.bf16.msra.mxu0 0
        %2986 = vmatprep.subr.bf16.mxu0 0
        %2987 = vmatpush2.bf16.msra.mxu0 0
        %2988 = vmatprep.mubr.bf16.mxu0 0
        %2989 = vmatmul.mubr.bf16.gmra.mxu0 %v2948
        %v2990 = vpop.f32.mrf.mxu0
        %v2991 = vadd.f32 0.0, %v2990
        %v2992 = vpop.f32.mrf.mxu0
        %v2993 = vadd.f32 0.0, %v2992
        %v2994 = vpop.f32.mrf.mxu0
        %v2995 = vadd.f32 0.0, %v2994
        %v2996 = vpop.f32.mrf.mxu0
        %v2997 = vadd.f32 0.0, %v2996
        %2998 = vmatprep.mubr.bf16.mxu0 0
        %2999 = vmatmul.mubr.bf16.gmra.mxu0 %v2951
        %v3000 = vpop.f32.mrf.mxu0
        %v3001 = vadd.f32 0.0, %v3000
        %v3002 = vpop.f32.mrf.mxu0
        %v3003 = vadd.f32 0.0, %v3002
        %v3004 = vpop.f32.mrf.mxu0
        %v3005 = vadd.f32 0.0, %v3004
        %v3006 = vpop.f32.mrf.mxu0
        %v3007 = vadd.f32 0.0, %v3006
        %3008 = vmatprep.mubr.bf16.mxu0 0
        %3009 = vmatmul.mubr.bf16.gmra.mxu0 %v2954
        %v3010 = vpop.f32.mrf.mxu0
        %v3011 = vadd.f32 0.0, %v3010
        %v3012 = vpop.f32.mrf.mxu0
        %v3013 = vadd.f32 0.0, %v3012
        %v3014 = vpop.f32.mrf.mxu0
        %v3015 = vpop.f32.mrf.mxu0
        %3016 = vdwg.mxu0
        %v3017 = vadd.f32 %v2908, %v2991
        %v3018 = vadd.f32 %v2909, %v2993
        %v3019 = vadd.f32 %v2910, %v2995
        %v3020 = vadd.f32 %v2911, %v2997
        %v3021 = vadd.f32 %v2912, %v3001
        %v3022 = vadd.f32 %v2913, %v3003
        %v3023 = vadd.f32 %v2914, %v3005
        %v3024 = vadd.f32 %v2915, %v3007
        %v3025 = vadd.f32 %v2916, %v3011
        %v3026 = vadd.f32 %v2917, %v3013
        %3027 = vrot.lane.b32.xlu0 %v2282, 127
        %v3028 = vpop.permute.xlu0 %3027
        %3029 = vrot.lane.b32.xlu0 %v2283, 127
        %v3030 = vpop.permute.xlu0 %3029
        %3031 = vrot.lane.b32.xlu0 %v2284, 127
        %v3032 = vpop.permute.xlu0 %3031
        %3033 = vrot.lane.b32.xlu0 %v2285, 127
        %v3034 = vpop.permute.xlu0 %3033
        %3035 = vrot.lane.b32.xlu0 %v2286, 127
        %v3036 = vpop.permute.xlu0 %3035
        %3037 = vrot.lane.b32.xlu0 %v2287, 127
        %v3038 = vpop.permute.xlu0 %3037
        %3039 = vrot.lane.b32.xlu0 %v2288, 127
        %v3040 = vpop.permute.xlu0 %3039
        %3041 = vrot.lane.b32.xlu0 %v2289, 127
        %v3042 = vpop.permute.xlu0 %3041
        %3043 = vrot.lane.b32.xlu0 %v2290, 127
        %v3044 = vpop.permute.xlu0 %3043
        %3045 = vrot.lane.b32.xlu0 %v2291, 127
        %v3046 = vpop.permute.xlu0 %3045
        %v3047 = vsel %vm1451, %v3028, %v3030
        %v3048 = vsel %vm1451, %v3032, %v3034
        %v3049 = vsel %vm1451, %v3036, %v3038
        %v3050 = vsel %vm1451, %v3040, %v3042
        %v3051 = vsel %vm1451, %v3044, %v3046
        %v3059 = vsel %vm1454, %v3030, %v3028
        %v3063 = vsel %vm1454, %v3034, %v3032
        %v3067 = vsel %vm1454, %v3038, %v3036
        %v3071 = vsel %vm1454, %v3042, %v3040
        %v3075 = vsel %vm1454, %v3046, %v3044
        %v3077 = vmul.bf16 %v3047, %v1462
        %v3078 = vmul.bf16 %v3059, %v1466
        %v3079 = vmul.bf16 %v3048, %v1462
        %v3080 = vmul.bf16 %v3063, %v1466
        %v3081 = vmul.bf16 %v3049, %v1462
        %v3082 = vmul.bf16 %v3067, %v1466
        %v3083 = vmul.bf16 %v3050, %v1462
        %v3084 = vmul.bf16 %v3071, %v1466
        %v3085 = vmul.bf16 %v3051, %v1462
        %v3086 = vmul.bf16 %v3075, %v1466
        %s3087 = scalar_lea.vmem %s5, 100
        %v3088 = vld [vmem:[%s3087] sm:$0xf]
        %v3089 = vld [vmem:[%s3087 + $0x4] sm:$0xf]
        %v3090 = vld [vmem:[%s3087 + $0x8] sm:$0xf]
        %v3091 = vld [vmem:[%s3087 + $0xc] sm:$0xf]
        %v3092 = vld [vmem:[%s3087 + $0x10] sm:$0xf]
        %v3098 = vunpack.c.l.b16 %v3088
        %v3099 = vunpack.c.l.b16 %v3089
        %v3100 = vunpack.c.l.b16 %v3090
        %v3101 = vunpack.c.l.b16 %v3091
        %v3102 = vunpack.c.l.b16 %v3092
        %v3103 = vpack.c.b16 %v3099, %v3098
        %v3104 = vpack.c.b16 %v3101, %v3100
        %v3105 = vpack.c.b16 %v3102, %v3102
        %v3107 = vsel %vm2446, %v3103, 0
        %v3110 = vsel %vm2446, %v3104, 0
        %v3113 = vsel %vm2446, %v3105, 0
        %3115 = vmatprep.subr.bf16.mxu0 0
        %3116 = vmatpush1.bf16.msra.mxu0 0
        %3117 = vmatprep.subr.bf16.mxu0 0
        %3118 = vmatpush1.bf16.msra.mxu0 0
        %3119 = vmatprep.subr.bf16.mxu0 0
        %3120 = vmatpush1.bf16.msra.mxu0 0
        %3121 = vmatprep.subr.bf16.mxu0 %v3086
        %3122 = vmatpush1.bf16.msra.mxu0 %v3085
        %3123 = vmatprep.subr.bf16.mxu0 %v3084
        %3124 = vmatpush1.bf16.msra.mxu0 %v3083
        %3125 = vmatprep.subr.bf16.mxu0 %v3082
        %3126 = vmatpush1.bf16.msra.mxu0 %v3081
        %3127 = vmatprep.subr.bf16.mxu0 %v3080
        %3128 = vmatpush1.bf16.msra.mxu0 %v3079
        %3129 = vmatprep.subr.bf16.mxu0 %v3078
        %3130 = vmatpush1.bf16.msra.mxu0 %v3077
        %3131 = vmatprep.subr.bf16.mxu0 0
        %3132 = vmatpush2.bf16.msra.mxu0 0
        %3133 = vmatprep.subr.bf16.mxu0 0
        %3134 = vmatpush2.bf16.msra.mxu0 0
        %3135 = vmatprep.subr.bf16.mxu0 0
        %3136 = vmatpush2.bf16.msra.mxu0 0
        %3137 = vmatprep.subr.bf16.mxu0 0
        %3138 = vmatpush2.bf16.msra.mxu0 0
        %3139 = vmatprep.subr.bf16.mxu0 0
        %3140 = vmatpush2.bf16.msra.mxu0 0
        %3141 = vmatprep.subr.bf16.mxu0 0
        %3142 = vmatpush2.bf16.msra.mxu0 0
        %3143 = vmatprep.subr.bf16.mxu0 0
        %3144 = vmatpush2.bf16.msra.mxu0 0
        %3145 = vmatprep.subr.bf16.mxu0 0
        %3146 = vmatpush2.bf16.msra.mxu0 0
        %3147 = vmatprep.mubr.bf16.mxu0 0
        %3148 = vmatmul.mubr.bf16.gmra.mxu0 %v3107
        %v3149 = vpop.f32.mrf.mxu0
        %v3150 = vadd.f32 0.0, %v3149
        %v3151 = vpop.f32.mrf.mxu0
        %v3152 = vadd.f32 0.0, %v3151
        %v3153 = vpop.f32.mrf.mxu0
        %v3154 = vadd.f32 0.0, %v3153
        %v3155 = vpop.f32.mrf.mxu0
        %v3156 = vadd.f32 0.0, %v3155
        %3157 = vmatprep.mubr.bf16.mxu0 0
        %3158 = vmatmul.mubr.bf16.gmra.mxu0 %v3110
        %v3159 = vpop.f32.mrf.mxu0
        %v3160 = vadd.f32 0.0, %v3159
        %v3161 = vpop.f32.mrf.mxu0
        %v3162 = vadd.f32 0.0, %v3161
        %v3163 = vpop.f32.mrf.mxu0
        %v3164 = vadd.f32 0.0, %v3163
        %v3165 = vpop.f32.mrf.mxu0
        %v3166 = vadd.f32 0.0, %v3165
        %3167 = vmatprep.mubr.bf16.mxu0 0
        %3168 = vmatmul.mubr.bf16.gmra.mxu0 %v3113
        %v3169 = vpop.f32.mrf.mxu0
        %v3170 = vadd.f32 0.0, %v3169
        %v3171 = vpop.f32.mrf.mxu0
        %v3172 = vadd.f32 0.0, %v3171
        %v3173 = vpop.f32.mrf.mxu0
        %v3174 = vpop.f32.mrf.mxu0
        %3175 = vdwg.mxu0
        %v3176 = vadd.f32 %v3017, %v3150
        %v3177 = vadd.f32 %v3018, %v3152
        %v3178 = vadd.f32 %v3019, %v3154
        %v3179 = vadd.f32 %v3020, %v3156
        %v3180 = vadd.f32 %v3021, %v3160
        %v3181 = vadd.f32 %v3022, %v3162
        %v3182 = vadd.f32 %v3023, %v3164
        %v3183 = vadd.f32 %v3024, %v3166
        %v3184 = vadd.f32 %v3025, %v3170
        %v3185 = vadd.f32 %v3026, %v3172
        %3186 = vrot.lane.b32.xlu0 %v2282, 113
        %v3187 = vpop.permute.xlu0 %3186
        %3188 = vrot.lane.b32.xlu0 %v2283, 113
        %v3189 = vpop.permute.xlu0 %3188
        %3190 = vrot.lane.b32.xlu0 %v2284, 113
        %v3191 = vpop.permute.xlu0 %3190
        %3192 = vrot.lane.b32.xlu0 %v2285, 113
        %v3193 = vpop.permute.xlu0 %3192
        %3194 = vrot.lane.b32.xlu0 %v2286, 113
        %v3195 = vpop.permute.xlu0 %3194
        %3196 = vrot.lane.b32.xlu0 %v2287, 113
        %v3197 = vpop.permute.xlu0 %3196
        %3198 = vrot.lane.b32.xlu0 %v2288, 113
        %v3199 = vpop.permute.xlu0 %3198
        %3200 = vrot.lane.b32.xlu0 %v2289, 113
        %v3201 = vpop.permute.xlu0 %3200
        %3202 = vrot.lane.b32.xlu0 %v2290, 113
        %v3203 = vpop.permute.xlu0 %3202
        %3204 = vrot.lane.b32.xlu0 %v2291, 113
        %v3205 = vpop.permute.xlu0 %3204
        %v3206 = vsel %vm1627, %v3187, %v3189
        %v3207 = vsel %vm1627, %v3191, %v3193
        %v3208 = vsel %vm1627, %v3195, %v3197
        %v3209 = vsel %vm1627, %v3199, %v3201
        %v3210 = vsel %vm1627, %v3203, %v3205
        %v3218 = vsel %vm1630, %v3189, %v3187
        %v3222 = vsel %vm1630, %v3193, %v3191
        %v3226 = vsel %vm1630, %v3197, %v3195
        %v3230 = vsel %vm1630, %v3201, %v3199
        %v3234 = vsel %vm1630, %v3205, %v3203
        %v3236 = vmul.bf16 %v3206, %v1638
        %v3237 = vmul.bf16 %v3218, %v1642
        %v3238 = vmul.bf16 %v3207, %v1638
        %v3239 = vmul.bf16 %v3222, %v1642
        %v3240 = vmul.bf16 %v3208, %v1638
        %v3241 = vmul.bf16 %v3226, %v1642
        %v3242 = vmul.bf16 %v3209, %v1638
        %v3243 = vmul.bf16 %v3230, %v1642
        %v3244 = vmul.bf16 %v3210, %v1638
        %v3245 = vmul.bf16 %v3234, %v1642
        %s3246 = scalar_lea.vmem %s5, 120
        %v3247 = vld [vmem:[%s3246] sm:$0xf]
        %v3248 = vld [vmem:[%s3246 + $0x4] sm:$0xf]
        %v3249 = vld [vmem:[%s3246 + $0x8] sm:$0xf]
        %v3250 = vld [vmem:[%s3246 + $0xc] sm:$0xf]
        %v3251 = vld [vmem:[%s3246 + $0x10] sm:$0xf]
        %v3257 = vunpack.c.l.b16 %v3247
        %v3258 = vunpack.c.l.b16 %v3248
        %v3259 = vunpack.c.l.b16 %v3249
        %v3260 = vunpack.c.l.b16 %v3250
        %v3261 = vunpack.c.l.b16 %v3251
        %v3262 = vpack.c.b16 %v3258, %v3257
        %v3263 = vpack.c.b16 %v3260, %v3259
        %v3264 = vpack.c.b16 %v3261, %v3261
        %v3266 = vsel %vm2446, %v3262, 0
        %v3269 = vsel %vm2446, %v3263, 0
        %v3272 = vsel %vm2446, %v3264, 0
        %3274 = vmatprep.subr.bf16.mxu0 0
        %3275 = vmatpush1.bf16.msra.mxu0 0
        %3276 = vmatprep.subr.bf16.mxu0 0
        %3277 = vmatpush1.bf16.msra.mxu0 0
        %3278 = vmatprep.subr.bf16.mxu0 0
        %3279 = vmatpush1.bf16.msra.mxu0 0
        %3280 = vmatprep.subr.bf16.mxu0 %v3245
        %3281 = vmatpush1.bf16.msra.mxu0 %v3244
        %3282 = vmatprep.subr.bf16.mxu0 %v3243
        %3283 = vmatpush1.bf16.msra.mxu0 %v3242
        %3284 = vmatprep.subr.bf16.mxu0 %v3241
        %3285 = vmatpush1.bf16.msra.mxu0 %v3240
        %3286 = vmatprep.subr.bf16.mxu0 %v3239
        %3287 = vmatpush1.bf16.msra.mxu0 %v3238
        %3288 = vmatprep.subr.bf16.mxu0 %v3237
        %3289 = vmatpush1.bf16.msra.mxu0 %v3236
        %3290 = vmatprep.subr.bf16.mxu0 0
        %3291 = vmatpush2.bf16.msra.mxu0 0
        %3292 = vmatprep.subr.bf16.mxu0 0
        %3293 = vmatpush2.bf16.msra.mxu0 0
        %3294 = vmatprep.subr.bf16.mxu0 0
        %3295 = vmatpush2.bf16.msra.mxu0 0
        %3296 = vmatprep.subr.bf16.mxu0 0
        %3297 = vmatpush2.bf16.msra.mxu0 0
        %3298 = vmatprep.subr.bf16.mxu0 0
        %3299 = vmatpush2.bf16.msra.mxu0 0
        %3300 = vmatprep.subr.bf16.mxu0 0
        %3301 = vmatpush2.bf16.msra.mxu0 0
        %3302 = vmatprep.subr.bf16.mxu0 0
        %3303 = vmatpush2.bf16.msra.mxu0 0
        %3304 = vmatprep.subr.bf16.mxu0 0
        %3305 = vmatpush2.bf16.msra.mxu0 0
        %3306 = vmatprep.mubr.bf16.mxu0 0
        %3307 = vmatmul.mubr.bf16.gmra.mxu0 %v3266
        %v3308 = vpop.f32.mrf.mxu0
        %v3309 = vadd.f32 0.0, %v3308
        %v3310 = vpop.f32.mrf.mxu0
        %v3311 = vadd.f32 0.0, %v3310
        %v3312 = vpop.f32.mrf.mxu0
        %v3313 = vadd.f32 0.0, %v3312
        %v3314 = vpop.f32.mrf.mxu0
        %v3315 = vadd.f32 0.0, %v3314
        %3316 = vmatprep.mubr.bf16.mxu0 0
        %3317 = vmatmul.mubr.bf16.gmra.mxu0 %v3269
        %v3318 = vpop.f32.mrf.mxu0
        %v3319 = vadd.f32 0.0, %v3318
        %v3320 = vpop.f32.mrf.mxu0
        %v3321 = vadd.f32 0.0, %v3320
        %v3322 = vpop.f32.mrf.mxu0
        %v3323 = vadd.f32 0.0, %v3322
        %v3324 = vpop.f32.mrf.mxu0
        %v3325 = vadd.f32 0.0, %v3324
        %3326 = vmatprep.mubr.bf16.mxu0 0
        %3327 = vmatmul.mubr.bf16.gmra.mxu0 %v3272
        %v3328 = vpop.f32.mrf.mxu0
        %v3329 = vadd.f32 0.0, %v3328
        %v3330 = vpop.f32.mrf.mxu0
        %v3331 = vadd.f32 0.0, %v3330
        %v3332 = vpop.f32.mrf.mxu0
        %v3333 = vpop.f32.mrf.mxu0
        %3334 = vdwg.mxu0
        %v3335 = vadd.f32 %v3176, %v3309
        %v3336 = vadd.f32 %v3177, %v3311
        %v3337 = vadd.f32 %v3178, %v3313
        %v3338 = vadd.f32 %v3179, %v3315
        %v3339 = vadd.f32 %v3180, %v3319
        %v3340 = vadd.f32 %v3181, %v3321
        %v3341 = vadd.f32 %v3182, %v3323
        %v3342 = vadd.f32 %v3183, %v3325
        %v3343 = vadd.f32 %v3184, %v3329
        %v3344 = vadd.f32 %v3185, %v3331
        %3345 = vrot.lane.b32.xlu0 %v2282, 112
        %v3346 = vpop.permute.xlu0 %3345
        %3347 = vrot.lane.b32.xlu0 %v2283, 112
        %v3348 = vpop.permute.xlu0 %3347
        %3349 = vrot.lane.b32.xlu0 %v2284, 112
        %v3350 = vpop.permute.xlu0 %3349
        %3351 = vrot.lane.b32.xlu0 %v2285, 112
        %v3352 = vpop.permute.xlu0 %3351
        %3353 = vrot.lane.b32.xlu0 %v2286, 112
        %v3354 = vpop.permute.xlu0 %3353
        %3355 = vrot.lane.b32.xlu0 %v2287, 112
        %v3356 = vpop.permute.xlu0 %3355
        %3357 = vrot.lane.b32.xlu0 %v2288, 112
        %v3358 = vpop.permute.xlu0 %3357
        %3359 = vrot.lane.b32.xlu0 %v2289, 112
        %v3360 = vpop.permute.xlu0 %3359
        %3361 = vrot.lane.b32.xlu0 %v2290, 112
        %v3362 = vpop.permute.xlu0 %3361
        %3363 = vrot.lane.b32.xlu0 %v2291, 112
        %v3364 = vpop.permute.xlu0 %3363
        %v3365 = vsel %vm1803, %v3346, %v3348
        %v3366 = vsel %vm1803, %v3350, %v3352
        %v3367 = vsel %vm1803, %v3354, %v3356
        %v3368 = vsel %vm1803, %v3358, %v3360
        %v3369 = vsel %vm1803, %v3362, %v3364
        %v3377 = vsel %vm1806, %v3348, %v3346
        %v3381 = vsel %vm1806, %v3352, %v3350
        %v3385 = vsel %vm1806, %v3356, %v3354
        %v3389 = vsel %vm1806, %v3360, %v3358
        %v3393 = vsel %vm1806, %v3364, %v3362
        %v3395 = vmul.bf16 %v3365, %v1814
        %v3396 = vmul.bf16 %v3377, %v1818
        %v3397 = vmul.bf16 %v3366, %v1814
        %v3398 = vmul.bf16 %v3381, %v1818
        %v3399 = vmul.bf16 %v3367, %v1814
        %v3400 = vmul.bf16 %v3385, %v1818
        %v3401 = vmul.bf16 %v3368, %v1814
        %v3402 = vmul.bf16 %v3389, %v1818
        %v3403 = vmul.bf16 %v3369, %v1814
        %v3404 = vmul.bf16 %v3393, %v1818
        %s3405 = scalar_lea.vmem %s5, 140
        %v3406 = vld [vmem:[%s3405] sm:$0xf]
        %v3407 = vld [vmem:[%s3405 + $0x4] sm:$0xf]
        %v3408 = vld [vmem:[%s3405 + $0x8] sm:$0xf]
        %v3409 = vld [vmem:[%s3405 + $0xc] sm:$0xf]
        %v3410 = vld [vmem:[%s3405 + $0x10] sm:$0xf]
        %v3416 = vunpack.c.l.b16 %v3406
        %v3417 = vunpack.c.l.b16 %v3407
        %v3418 = vunpack.c.l.b16 %v3408
        %v3419 = vunpack.c.l.b16 %v3409
        %v3420 = vunpack.c.l.b16 %v3410
        %v3421 = vpack.c.b16 %v3417, %v3416
        %v3422 = vpack.c.b16 %v3419, %v3418
        %v3423 = vpack.c.b16 %v3420, %v3420
        %v3425 = vsel %vm2446, %v3421, 0
        %v3428 = vsel %vm2446, %v3422, 0
        %v3431 = vsel %vm2446, %v3423, 0
        %3433 = vmatprep.subr.bf16.mxu0 0
        %3434 = vmatpush1.bf16.msra.mxu0 0
        %3435 = vmatprep.subr.bf16.mxu0 0
        %3436 = vmatpush1.bf16.msra.mxu0 0
        %3437 = vmatprep.subr.bf16.mxu0 0
        %3438 = vmatpush1.bf16.msra.mxu0 0
        %3439 = vmatprep.subr.bf16.mxu0 %v3404
        %3440 = vmatpush1.bf16.msra.mxu0 %v3403
        %3441 = vmatprep.subr.bf16.mxu0 %v3402
        %3442 = vmatpush1.bf16.msra.mxu0 %v3401
        %3443 = vmatprep.subr.bf16.mxu0 %v3400
        %3444 = vmatpush1.bf16.msra.mxu0 %v3399
        %3445 = vmatprep.subr.bf16.mxu0 %v3398
        %3446 = vmatpush1.bf16.msra.mxu0 %v3397
        %3447 = vmatprep.subr.bf16.mxu0 %v3396
        %3448 = vmatpush1.bf16.msra.mxu0 %v3395
        %3449 = vmatprep.subr.bf16.mxu0 0
        %3450 = vmatpush2.bf16.msra.mxu0 0
        %3451 = vmatprep.subr.bf16.mxu0 0
        %3452 = vmatpush2.bf16.msra.mxu0 0
        %3453 = vmatprep.subr.bf16.mxu0 0
        %3454 = vmatpush2.bf16.msra.mxu0 0
        %3455 = vmatprep.subr.bf16.mxu0 0
        %3456 = vmatpush2.bf16.msra.mxu0 0
        %3457 = vmatprep.subr.bf16.mxu0 0
        %3458 = vmatpush2.bf16.msra.mxu0 0
        %3459 = vmatprep.subr.bf16.mxu0 0
        %3460 = vmatpush2.bf16.msra.mxu0 0
        %3461 = vmatprep.subr.bf16.mxu0 0
        %3462 = vmatpush2.bf16.msra.mxu0 0
        %3463 = vmatprep.subr.bf16.mxu0 0
        %3464 = vmatpush2.bf16.msra.mxu0 0
        %3465 = vmatprep.mubr.bf16.mxu0 0
        %3466 = vmatmul.mubr.bf16.gmra.mxu0 %v3425
        %v3467 = vpop.f32.mrf.mxu0
        %v3468 = vadd.f32 0.0, %v3467
        %v3469 = vpop.f32.mrf.mxu0
        %v3470 = vadd.f32 0.0, %v3469
        %v3471 = vpop.f32.mrf.mxu0
        %v3472 = vadd.f32 0.0, %v3471
        %v3473 = vpop.f32.mrf.mxu0
        %v3474 = vadd.f32 0.0, %v3473
        %3475 = vmatprep.mubr.bf16.mxu0 0
        %3476 = vmatmul.mubr.bf16.gmra.mxu0 %v3428
        %v3477 = vpop.f32.mrf.mxu0
        %v3478 = vadd.f32 0.0, %v3477
        %v3479 = vpop.f32.mrf.mxu0
        %v3480 = vadd.f32 0.0, %v3479
        %v3481 = vpop.f32.mrf.mxu0
        %v3482 = vadd.f32 0.0, %v3481
        %v3483 = vpop.f32.mrf.mxu0
        %v3484 = vadd.f32 0.0, %v3483
        %3485 = vmatprep.mubr.bf16.mxu0 0
        %3486 = vmatmul.mubr.bf16.gmra.mxu0 %v3431
        %v3487 = vpop.f32.mrf.mxu0
        %v3488 = vadd.f32 0.0, %v3487
        %v3489 = vpop.f32.mrf.mxu0
        %v3490 = vadd.f32 0.0, %v3489
        %v3491 = vpop.f32.mrf.mxu0
        %v3492 = vpop.f32.mrf.mxu0
        %3493 = vdwg.mxu0
        %v3494 = vadd.f32 %v3335, %v3468
        %v3495 = vadd.f32 %v3336, %v3470
        %v3496 = vadd.f32 %v3337, %v3472
        %v3497 = vadd.f32 %v3338, %v3474
        %v3498 = vadd.f32 %v3339, %v3478
        %v3499 = vadd.f32 %v3340, %v3480
        %v3500 = vadd.f32 %v3341, %v3482
        %v3501 = vadd.f32 %v3342, %v3484
        %v3502 = vadd.f32 %v3343, %v3488
        %v3503 = vadd.f32 %v3344, %v3490
        %3504 = vrot.lane.b32.xlu0 %v2282, 111
        %v3505 = vpop.permute.xlu0 %3504
        %3506 = vrot.lane.b32.xlu0 %v2283, 111
        %v3507 = vpop.permute.xlu0 %3506
        %3508 = vrot.lane.b32.xlu0 %v2284, 111
        %v3509 = vpop.permute.xlu0 %3508
        %3510 = vrot.lane.b32.xlu0 %v2285, 111
        %v3511 = vpop.permute.xlu0 %3510
        %3512 = vrot.lane.b32.xlu0 %v2286, 111
        %v3513 = vpop.permute.xlu0 %3512
        %3514 = vrot.lane.b32.xlu0 %v2287, 111
        %v3515 = vpop.permute.xlu0 %3514
        %3516 = vrot.lane.b32.xlu0 %v2288, 111
        %v3517 = vpop.permute.xlu0 %3516
        %3518 = vrot.lane.b32.xlu0 %v2289, 111
        %v3519 = vpop.permute.xlu0 %3518
        %3520 = vrot.lane.b32.xlu0 %v2290, 111
        %v3521 = vpop.permute.xlu0 %3520
        %3522 = vrot.lane.b32.xlu0 %v2291, 111
        %v3523 = vpop.permute.xlu0 %3522
        %v3524 = vsel %vm1979, %v3505, %v3507
        %v3525 = vsel %vm1979, %v3509, %v3511
        %v3526 = vsel %vm1979, %v3513, %v3515
        %v3527 = vsel %vm1979, %v3517, %v3519
        %v3528 = vsel %vm1979, %v3521, %v3523
        %v3536 = vsel %vm1982, %v3507, %v3505
        %v3540 = vsel %vm1982, %v3511, %v3509
        %v3544 = vsel %vm1982, %v3515, %v3513
        %v3548 = vsel %vm1982, %v3519, %v3517
        %v3552 = vsel %vm1982, %v3523, %v3521
        %v3554 = vmul.bf16 %v3524, %v1998
        %v3555 = vmul.bf16 %v3536, %v2005
        %v3556 = vmul.bf16 %v3525, %v1998
        %v3557 = vmul.bf16 %v3540, %v2005
        %v3558 = vmul.bf16 %v3526, %v1998
        %v3559 = vmul.bf16 %v3544, %v2005
        %v3560 = vmul.bf16 %v3527, %v1998
        %v3561 = vmul.bf16 %v3548, %v2005
        %v3562 = vmul.bf16 %v3528, %v1998
        %v3563 = vmul.bf16 %v3552, %v2005
        %s3564 = scalar_lea.vmem %s5, 160
        %v3565 = vld [vmem:[%s3564] sm:$0xf]
        %v3566 = vld [vmem:[%s3564 + $0x4] sm:$0xf]
        %v3567 = vld [vmem:[%s3564 + $0x8] sm:$0xf]
        %v3568 = vld [vmem:[%s3564 + $0xc] sm:$0xf]
        %v3569 = vld [vmem:[%s3564 + $0x10] sm:$0xf]
        %v3575 = vunpack.c.l.b16 %v3565
        %v3576 = vunpack.c.l.b16 %v3566
        %v3577 = vunpack.c.l.b16 %v3567
        %v3578 = vunpack.c.l.b16 %v3568
        %v3579 = vunpack.c.l.b16 %v3569
        %v3580 = vpack.c.b16 %v3576, %v3575
        %v3581 = vpack.c.b16 %v3578, %v3577
        %v3582 = vpack.c.b16 %v3579, %v3579
        %v3584 = vsel %vm2446, %v3580, 0
        %v3587 = vsel %vm2446, %v3581, 0
        %v3590 = vsel %vm2446, %v3582, 0
        %3592 = vmatprep.subr.bf16.mxu0 0
        %3593 = vmatpush1.bf16.msra.mxu0 0
        %3594 = vmatprep.subr.bf16.mxu0 0
        %3595 = vmatpush1.bf16.msra.mxu0 0
        %3596 = vmatprep.subr.bf16.mxu0 0
        %3597 = vmatpush1.bf16.msra.mxu0 0
        %3598 = vmatprep.subr.bf16.mxu0 %v3563
        %3599 = vmatpush1.bf16.msra.mxu0 %v3562
        %3600 = vmatprep.subr.bf16.mxu0 %v3561
        %3601 = vmatpush1.bf16.msra.mxu0 %v3560
        %3602 = vmatprep.subr.bf16.mxu0 %v3559
        %3603 = vmatpush1.bf16.msra.mxu0 %v3558
        %3604 = vmatprep.subr.bf16.mxu0 %v3557
        %3605 = vmatpush1.bf16.msra.mxu0 %v3556
        %3606 = vmatprep.subr.bf16.mxu0 %v3555
        %3607 = vmatpush1.bf16.msra.mxu0 %v3554
        %3608 = vmatprep.subr.bf16.mxu0 0
        %3609 = vmatpush2.bf16.msra.mxu0 0
        %3610 = vmatprep.subr.bf16.mxu0 0
        %3611 = vmatpush2.bf16.msra.mxu0 0
        %3612 = vmatprep.subr.bf16.mxu0 0
        %3613 = vmatpush2.bf16.msra.mxu0 0
        %3614 = vmatprep.subr.bf16.mxu0 0
        %3615 = vmatpush2.bf16.msra.mxu0 0
        %3616 = vmatprep.subr.bf16.mxu0 0
        %3617 = vmatpush2.bf16.msra.mxu0 0
        %3618 = vmatprep.subr.bf16.mxu0 0
        %3619 = vmatpush2.bf16.msra.mxu0 0
        %3620 = vmatprep.subr.bf16.mxu0 0
        %3621 = vmatpush2.bf16.msra.mxu0 0
        %3622 = vmatprep.subr.bf16.mxu0 0
        %3623 = vmatpush2.bf16.msra.mxu0 0
        %3624 = vmatprep.mubr.bf16.mxu0 0
        %3625 = vmatmul.mubr.bf16.gmra.mxu0 %v3584
        %v3626 = vpop.f32.mrf.mxu0
        %v3627 = vadd.f32 0.0, %v3626
        %v3628 = vpop.f32.mrf.mxu0
        %v3629 = vadd.f32 0.0, %v3628
        %v3630 = vpop.f32.mrf.mxu0
        %v3631 = vadd.f32 0.0, %v3630
        %v3632 = vpop.f32.mrf.mxu0
        %v3633 = vadd.f32 0.0, %v3632
        %3634 = vmatprep.mubr.bf16.mxu0 0
        %3635 = vmatmul.mubr.bf16.gmra.mxu0 %v3587
        %v3636 = vpop.f32.mrf.mxu0
        %v3637 = vadd.f32 0.0, %v3636
        %v3638 = vpop.f32.mrf.mxu0
        %v3639 = vadd.f32 0.0, %v3638
        %v3640 = vpop.f32.mrf.mxu0
        %v3641 = vadd.f32 0.0, %v3640
        %v3642 = vpop.f32.mrf.mxu0
        %v3643 = vadd.f32 0.0, %v3642
        %3644 = vmatprep.mubr.bf16.mxu0 0
        %3645 = vmatmul.mubr.bf16.gmra.mxu0 %v3590
        %v3646 = vpop.f32.mrf.mxu0
        %v3647 = vadd.f32 0.0, %v3646
        %v3648 = vpop.f32.mrf.mxu0
        %v3649 = vadd.f32 0.0, %v3648
        %v3650 = vpop.f32.mrf.mxu0
        %v3651 = vpop.f32.mrf.mxu0
        %3652 = vdwg.mxu0
        %v3653 = vadd.f32 %v3494, %v3627
        %v3654 = vadd.f32 %v3495, %v3629
        %v3655 = vadd.f32 %v3496, %v3631
        %v3656 = vadd.f32 %v3497, %v3633
        %v3657 = vadd.f32 %v3498, %v3637
        %v3658 = vadd.f32 %v3499, %v3639
        %v3659 = vadd.f32 %v3500, %v3641
        %v3660 = vadd.f32 %v3501, %v3643
        %v3661 = vadd.f32 %v3502, %v3647
        %v3662 = vadd.f32 %v3503, %v3649
        %v3663 = vld [vmem:[%s6] sm:$0xff]
        %v3664 = vld [vmem:[%s6 + $0x8] sm:$0xff]
        %v3665 = vld [vmem:[%s6 + $0x10] sm:$0xff]
        %v3666 = vld [vmem:[%s6 + $0x18] sm:$0xff]
        %v3667 = vld [vmem:[%s6 + $0x20] sm:$0xff]
        %3669 = vset.pattern.permute.xlu0 0
        %3670 = vperm.xlu0 %3669, %v3663
        %v3671 = vpop.permute.xlu0 %3670
        %3674 = vset.pattern.permute.xlu0 0
        %3675 = vperm.xlu0 %3674, %v3664
        %v3676 = vpop.permute.xlu0 %3675
        %3679 = vset.pattern.permute.xlu0 0
        %3680 = vperm.xlu0 %3679, %v3665
        %v3681 = vpop.permute.xlu0 %3680
        %3684 = vset.pattern.permute.xlu0 0
        %3685 = vperm.xlu0 %3684, %v3666
        %v3686 = vpop.permute.xlu0 %3685
        %3689 = vset.pattern.permute.xlu0 0
        %3690 = vperm.xlu0 %3689, %v3667
        %v3691 = vpop.permute.xlu0 %3690
        %v3693 = vadd.f32 %v3653, %v3671
        %v3694 = vadd.f32 %v3654, %v3671
        %v3695 = vadd.f32 %v3655, %v3676
        %v3696 = vadd.f32 %v3656, %v3676
        %v3697 = vadd.f32 %v3657, %v3681
        %v3698 = vadd.f32 %v3658, %v3681
        %v3699 = vadd.f32 %v3659, %v3686
        %v3700 = vadd.f32 %v3660, %v3686
        %v3701 = vadd.f32 %v3661, %v3691
        %v3702 = vadd.f32 %v3662, %v3691
        %v3703 = vmul.f32 %v3693, 0.01
        %v3704 = vmul.f32 %v3694, 0.01
        %v3705 = vmul.f32 %v3695, 0.01
        %v3706 = vmul.f32 %v3696, 0.01
        %v3707 = vmul.f32 %v3697, 0.01
        %v3708 = vmul.f32 %v3698, 0.01
        %v3709 = vmul.f32 %v3699, 0.01
        %v3710 = vmul.f32 %v3700, 0.01
        %v3711 = vmul.f32 %v3701, 0.01
        %v3712 = vmul.f32 %v3702, 0.01
        %v3713 = vmax.f32 %v3693, %v3703
        %v3714 = vmax.f32 %v3694, %v3704
        %v3715 = vmax.f32 %v3695, %v3705
        %v3716 = vmax.f32 %v3696, %v3706
        %v3717 = vmax.f32 %v3697, %v3707
        %v3718 = vmax.f32 %v3698, %v3708
        %v3719 = vmax.f32 %v3699, %v3709
        %v3720 = vmax.f32 %v3700, %v3710
        %v3721 = vmax.f32 %v3701, %v3711
        %v3722 = vmax.f32 %v3702, %v3712
        %3733 = vrot.lane.b32.xlu0 %v3713, 127
        %v3734 = vpop.permute.xlu0 %3733
        %3735 = vrot.lane.b32.xlu0 %v3714, 127
        %v3736 = vpop.permute.xlu0 %3735
        %3737 = vrot.lane.b32.xlu0 %v3715, 127
        %v3738 = vpop.permute.xlu0 %3737
        %3739 = vrot.lane.b32.xlu0 %v3716, 127
        %v3740 = vpop.permute.xlu0 %3739
        %3741 = vrot.lane.b32.xlu0 %v3717, 127
        %v3742 = vpop.permute.xlu0 %3741
        %3743 = vrot.lane.b32.xlu0 %v3718, 127
        %v3744 = vpop.permute.xlu0 %3743
        %3745 = vrot.lane.b32.xlu0 %v3719, 127
        %v3746 = vpop.permute.xlu0 %3745
        %3747 = vrot.lane.b32.xlu0 %v3720, 127
        %v3748 = vpop.permute.xlu0 %3747
        %3749 = vrot.lane.b32.xlu0 %v3721, 127
        %v3750 = vpop.permute.xlu0 %3749
        %3751 = vrot.lane.b32.xlu0 %v3722, 127
        %v3752 = vpop.permute.xlu0 %3751
        %v3753 = vsel %vm1454, %v3734, %v3736
        %v3754 = vsel %vm1454, %v3738, %v3740
        %v3755 = vsel %vm1454, %v3742, %v3744
        %v3756 = vsel %vm1454, %v3746, %v3748
        %v3757 = vsel %vm1454, %v3750, %v3752
        %v3773 = vsel %vm1454, %v3736, %v3734
        %v3774 = vsel %vm1454, %v3740, %v3738
        %v3775 = vsel %vm1454, %v3744, %v3742
        %v3776 = vsel %vm1454, %v3748, %v3746
        %v3777 = vsel %vm1454, %v3752, %v3750
        %v3778 = vmax.f32 %v3713, %v3753
        %v3779 = vmax.f32 %v3714, %v3773
        %v3780 = vmax.f32 %v3715, %v3754
        %v3781 = vmax.f32 %v3716, %v3774
        %v3782 = vmax.f32 %v3717, %v3755
        %v3783 = vmax.f32 %v3718, %v3775
        %v3784 = vmax.f32 %v3719, %v3756
        %v3785 = vmax.f32 %v3720, %v3776
        %v3786 = vmax.f32 %v3721, %v3757
        %v3787 = vmax.f32 %v3722, %v3777
        %3798 = vrot.lane.b32.xlu0 %v3778, 112
        %v3799 = vpop.permute.xlu0 %3798
        %3800 = vrot.lane.b32.xlu0 %v3779, 112
        %v3801 = vpop.permute.xlu0 %3800
        %3802 = vrot.lane.b32.xlu0 %v3780, 112
        %v3803 = vpop.permute.xlu0 %3802
        %3804 = vrot.lane.b32.xlu0 %v3781, 112
        %v3805 = vpop.permute.xlu0 %3804
        %3806 = vrot.lane.b32.xlu0 %v3782, 112
        %v3807 = vpop.permute.xlu0 %3806
        %3808 = vrot.lane.b32.xlu0 %v3783, 112
        %v3809 = vpop.permute.xlu0 %3808
        %3810 = vrot.lane.b32.xlu0 %v3784, 112
        %v3811 = vpop.permute.xlu0 %3810
        %3812 = vrot.lane.b32.xlu0 %v3785, 112
        %v3813 = vpop.permute.xlu0 %3812
        %3814 = vrot.lane.b32.xlu0 %v3786, 112
        %v3815 = vpop.permute.xlu0 %3814
        %3816 = vrot.lane.b32.xlu0 %v3787, 112
        %v3817 = vpop.permute.xlu0 %3816
        %v3818 = vsel %vm1806, %v3799, %v3801
        %v3819 = vsel %vm1806, %v3803, %v3805
        %v3820 = vsel %vm1806, %v3807, %v3809
        %v3821 = vsel %vm1806, %v3811, %v3813
        %v3822 = vsel %vm1806, %v3815, %v3817
        %v3838 = vsel %vm1806, %v3801, %v3799
        %v3839 = vsel %vm1806, %v3805, %v3803
        %v3840 = vsel %vm1806, %v3809, %v3807
        %v3841 = vsel %vm1806, %v3813, %v3811
        %v3842 = vsel %vm1806, %v3817, %v3815
        %v3843 = vmax.f32 %v3778, %v3818
        %v3844 = vmax.f32 %v3779, %v3838
        %v3845 = vmax.f32 %v3780, %v3819
        %v3846 = vmax.f32 %v3781, %v3839
        %v3847 = vmax.f32 %v3782, %v3820
        %v3848 = vmax.f32 %v3783, %v3840
        %v3849 = vmax.f32 %v3784, %v3821
        %v3850 = vmax.f32 %v3785, %v3841
        %v3851 = vmax.f32 %v3786, %v3822
        %v3852 = vmax.f32 %v3787, %v3842
        %v3853 = vpack.c.bf16 %v3845, %v3843
        %v3854 = vpack.c.bf16 %v3846, %v3844
        %v3855 = vpack.c.bf16 %v3849, %v3847
        %v3856 = vpack.c.bf16 %v3850, %v3848
        %v3857 = vpack.c.bf16 %v3851, %v3851
        %v3858 = vpack.c.bf16 %v3852, %v3852
        %v3859 = vld [vmem:[%s9] sm:$0xf]
        %v3860 = vld [vmem:[%s9 + $0x4] sm:$0xf]
        %v3861 = vld [vmem:[%s9 + $0x8] sm:$0xf]
        %v3862 = vld [vmem:[%s9 + $0xc] sm:$0xf]
        %v3863 = vld [vmem:[%s9 + $0x10] sm:$0xf]
        %v3864 = vld [vmem:[%s9 + $0x14] sm:$0xf]
        %v3865 = vld [vmem:[%s9 + $0x18] sm:$0xf]
        %v3866 = vld [vmem:[%s9 + $0x1c] sm:$0xf]
        %v3867 = vld [vmem:[%s9 + $0x20] sm:$0xf]
        %v3868 = vld [vmem:[%s9 + $0x24] sm:$0xf]
        %v3869 = vld [vmem:[%s9 + $0x28] sm:$0xf]
        %v3870 = vld [vmem:[%s9 + $0x2c] sm:$0xf]
        %v3871 = vld [vmem:[%s9 + $0x30] sm:$0xf]
        %v3872 = vld [vmem:[%s9 + $0x34] sm:$0xf]
        %v3873 = vld [vmem:[%s9 + $0x38] sm:$0xf]
        %v3874 = vld [vmem:[%s9 + $0x3c] sm:$0xf]
        %v3875 = vld [vmem:[%s9 + $0x40] sm:$0xf]
        %v3876 = vld [vmem:[%s9 + $0x44] sm:$0xf]
        %v3877 = vld [vmem:[%s9 + $0x48] sm:$0xf]
        %v3878 = vld [vmem:[%s9 + $0x4c] sm:$0xf]
        %v3879 = vld [vmem:[%s9 + $0x50] sm:$0xf]
        %v3880 = vld [vmem:[%s9 + $0x54] sm:$0xf]
        %v3881 = vld [vmem:[%s9 + $0x58] sm:$0xf]
        %v3882 = vld [vmem:[%s9 + $0x5c] sm:$0xf]
        %v3883 = vld [vmem:[%s9 + $0x60] sm:$0xf]
        %v3884 = vld [vmem:[%s9 + $0x64] sm:$0xf]
        %v3885 = vld [vmem:[%s9 + $0x68] sm:$0xf]
        %v3886 = vld [vmem:[%s9 + $0x6c] sm:$0xf]
        %v3887 = vld [vmem:[%s9 + $0x70] sm:$0xf]
        %v3888 = vld [vmem:[%s9 + $0x74] sm:$0xf]
        %v3889 = vld [vmem:[%s9 + $0x78] sm:$0xf]
        %v3890 = vld [vmem:[%s9 + $0x7c] sm:$0xf]
        %v3923 = vunpack.c.l.b16 %v3859
        %v3924 = vunpack.c.l.b16 %v3860
        %v3925 = vunpack.c.l.b16 %v3861
        %v3926 = vunpack.c.l.b16 %v3862
        %v3927 = vunpack.c.l.b16 %v3863
        %v3928 = vunpack.c.l.b16 %v3864
        %v3929 = vunpack.c.l.b16 %v3865
        %v3930 = vunpack.c.l.b16 %v3866
        %v3931 = vunpack.c.l.b16 %v3867
        %v3932 = vunpack.c.l.b16 %v3868
        %v3933 = vunpack.c.l.b16 %v3869
        %v3934 = vunpack.c.l.b16 %v3870
        %v3935 = vunpack.c.l.b16 %v3871
        %v3936 = vunpack.c.l.b16 %v3872
        %v3937 = vunpack.c.l.b16 %v3873
        %v3938 = vunpack.c.l.b16 %v3874
        %v3939 = vunpack.c.l.b16 %v3875
        %v3940 = vunpack.c.l.b16 %v3876
        %v3941 = vunpack.c.l.b16 %v3877
        %v3942 = vunpack.c.l.b16 %v3878
        %v3943 = vunpack.c.l.b16 %v3879
        %v3944 = vunpack.c.l.b16 %v3880
        %v3945 = vunpack.c.l.b16 %v3881
        %v3946 = vunpack.c.l.b16 %v3882
        %v3947 = vunpack.c.l.b16 %v3883
        %v3948 = vunpack.c.l.b16 %v3884
        %v3949 = vunpack.c.l.b16 %v3885
        %v3950 = vunpack.c.l.b16 %v3886
        %v3951 = vunpack.c.l.b16 %v3887
        %v3952 = vunpack.c.l.b16 %v3888
        %v3953 = vunpack.c.l.b16 %v3889
        %v3954 = vunpack.c.l.b16 %v3890
        %v3955 = vpack.c.b16 %v3924, %v3923
        %v3956 = vpack.c.b16 %v3926, %v3925
        %v3957 = vpack.c.b16 %v3928, %v3927
        %v3958 = vpack.c.b16 %v3930, %v3929
        %v3959 = vpack.c.b16 %v3932, %v3931
        %v3960 = vpack.c.b16 %v3934, %v3933
        %v3961 = vpack.c.b16 %v3936, %v3935
        %v3962 = vpack.c.b16 %v3938, %v3937
        %v3963 = vpack.c.b16 %v3940, %v3939
        %v3964 = vpack.c.b16 %v3942, %v3941
        %v3965 = vpack.c.b16 %v3944, %v3943
        %v3966 = vpack.c.b16 %v3946, %v3945
        %v3967 = vpack.c.b16 %v3948, %v3947
        %v3968 = vpack.c.b16 %v3950, %v3949
        %v3969 = vpack.c.b16 %v3952, %v3951
        %v3970 = vpack.c.b16 %v3954, %v3953
        %3987 = vmatprep.subr.bf16.mxu0 0
        %3988 = vmatpush1.bf16.msra.mxu0 %v3962
        %3989 = vmatprep.subr.bf16.mxu0 0
        %3990 = vmatpush1.bf16.msra.mxu0 %v3961
        %3991 = vmatprep.subr.bf16.mxu0 0
        %3992 = vmatpush1.bf16.msra.mxu0 %v3960
        %3993 = vmatprep.subr.bf16.mxu0 0
        %3994 = vmatpush1.bf16.msra.mxu0 %v3959
        %3995 = vmatprep.subr.bf16.mxu0 0
        %3996 = vmatpush1.bf16.msra.mxu0 %v3958
        %3997 = vmatprep.subr.bf16.mxu0 0
        %3998 = vmatpush1.bf16.msra.mxu0 %v3957
        %3999 = vmatprep.subr.bf16.mxu0 0
        %4000 = vmatpush1.bf16.msra.mxu0 %v3956
        %4001 = vmatprep.subr.bf16.mxu0 0
        %4002 = vmatpush1.bf16.msra.mxu0 %v3955
        %4003 = vmatprep.subr.bf16.mxu0 0
        %4004 = vmatpush2.bf16.msra.mxu0 %v3970
        %4005 = vmatprep.subr.bf16.mxu0 0
        %4006 = vmatpush2.bf16.msra.mxu0 %v3969
        %4007 = vmatprep.subr.bf16.mxu0 0
        %4008 = vmatpush2.bf16.msra.mxu0 %v3968
        %4009 = vmatprep.subr.bf16.mxu0 0
        %4010 = vmatpush2.bf16.msra.mxu0 %v3967
        %4011 = vmatprep.subr.bf16.mxu0 0
        %4012 = vmatpush2.bf16.msra.mxu0 %v3966
        %4013 = vmatprep.subr.bf16.mxu0 0
        %4014 = vmatpush2.bf16.msra.mxu0 %v3965
        %4015 = vmatprep.subr.bf16.mxu0 0
        %4016 = vmatpush2.bf16.msra.mxu0 %v3964
        %4017 = vmatprep.subr.bf16.mxu0 0
        %4018 = vmatpush2.bf16.msra.mxu0 %v3963
        %4019 = vmatprep.mubr.bf16.mxu0 %v3854
        %4020 = vmatmul.mubr.bf16.gmra.mxu0 %v3853
        %v4021 = vpop.f32.mrf.mxu0
        %v4022 = vadd.f32 0.0, %v4021
        %v4023 = vpop.f32.mrf.mxu0
        %v4024 = vpop.f32.mrf.mxu0
        %v4025 = vadd.f32 0.0, %v4024
        %v4026 = vpop.f32.mrf.mxu0
        %4027 = vmatprep.mubr.bf16.mxu0 %v3856
        %4028 = vmatmul.mubr.bf16.gmra.mxu0 %v3855
        %v4029 = vpop.f32.mrf.mxu0
        %v4030 = vadd.f32 0.0, %v4029
        %v4031 = vpop.f32.mrf.mxu0
        %v4032 = vpop.f32.mrf.mxu0
        %v4033 = vadd.f32 0.0, %v4032
        %v4034 = vpop.f32.mrf.mxu0
        %4035 = vmatprep.mubr.bf16.mxu0 %v3858
        %4036 = vmatmul.mubr.bf16.gmra.mxu0 %v3857
        %v4037 = vpop.f32.mrf.mxu0
        %v4038 = vadd.f32 0.0, %v4037
        %v4039 = vpop.f32.mrf.mxu0
        %v4040 = vpop.f32.mrf.mxu0
        %v4041 = vpop.f32.mrf.mxu0
        %4042 = vdwg.mxu0
        %v4043 = vpack.c.bf16 %v4025, %v4022
        %v4044 = vpack.c.bf16 %v4033, %v4030
        %v4045 = vpack.c.bf16 %v4038, %v4038
        %v4046 = vld [vmem:[%s8] sm:$0xf]
        %v4047 = vld [vmem:[%s8 + $0x4] sm:$0x1]
        %4051 = vrot.lane.b32.xlu0 %v4043, 73
        %v4052 = vpop.permute.xlu0 %4051
        %4053 = vrot.lane.b32.xlu0 %v4044, 73
        %v4054 = vpop.permute.xlu0 %4053
        %4055 = vrot.lane.b32.xlu0 %v4045, 73
        %v4056 = vpop.permute.xlu0 %4055
        %4057 = vrot.lane.b32.xlu0 %v4043, 9
        %v4058 = vpop.permute.xlu0 %4057
        %4059 = vrot.lane.b32.xlu0 %v4044, 9
        %v4060 = vpop.permute.xlu0 %4059
        %4061 = vrot.lane.b32.xlu0 %v4045, 9
        %v4062 = vpop.permute.xlu0 %4061
        %vm4063 = vcmask 72704
        %v4066 = vsel %vm4063, %v4052, %v4058
        %v4070 = vsel %vm4063, %v4054, %v4060
        %v4074 = vsel %vm4063, %v4056, %v4062
        %v4077 = vpack.i.b16 %v4046, %v4046
        %v4079 = vlaneseq
        %v4080 = vshrl.u32 %v4079, 7
        %v4081 = vsub.s32 0, %v4080
        %v4082 = vrot.slane %v4077, %v4081
        %v4083 = vmul.bf16 %v4066, %v4082
        %v4084 = vmul.bf16 %v4070, %v4082
        %v4085 = vmul.bf16 %v4074, %v4082
        %v4086 = vld [vmem:[%s10] sm:$0xf]
        %4087 = vrot.lane.b32.xlu0 %v4043, 72
        %v4088 = vpop.permute.xlu0 %4087
        %4089 = vrot.lane.b32.xlu0 %v4044, 72
        %v4090 = vpop.permute.xlu0 %4089
        %4091 = vrot.lane.b32.xlu0 %v4045, 72
        %v4092 = vpop.permute.xlu0 %4091
        %4093 = vrot.lane.b32.xlu0 %v4043, 8
        %v4094 = vpop.permute.xlu0 %4093
        %4095 = vrot.lane.b32.xlu0 %v4044, 8
        %v4096 = vpop.permute.xlu0 %4095
        %4097 = vrot.lane.b32.xlu0 %v4045, 8
        %v4098 = vpop.permute.xlu0 %4097
        %v4101 = vsel %vm543, %v4088, %v4094
        %v4105 = vsel %vm543, %v4090, %v4096
        %v4109 = vsel %vm543, %v4092, %v4098
        %v4111 = vshrl.u32 %v4046, 16
        %v4112 = vpack.i.b16 %v4111, %v4111
        %v4114 = vlaneseq
        %v4115 = vshrl.u32 %v4114, 7
        %v4116 = vsub.s32 0, %v4115
        %v4117 = vrot.slane %v4112, %v4116
        %v4118 = vmul.bf16 %v4101, %v4117
        %v4119 = vmul.bf16 %v4105, %v4117
        %v4120 = vmul.bf16 %v4109, %v4117
        %s4121 = scalar_lea.vmem %s10, 4
        %v4122 = vld [vmem:[%s4121] sm:$0xf]
        %vm4123 = vcmask 326656
        %v4125 = vsel %vm4123, %v4122, 0
        %v4128 = vsel %vm547, %v4120, 0
        %4130 = vmatprep.subr.bf16.mxu0 0
        %4131 = vmatpush1.bf16.msra.mxu0 0
        %4132 = vmatprep.subr.bf16.mxu0 0
        %4133 = vmatpush1.bf16.msra.mxu0 0
        %4134 = vmatprep.subr.bf16.mxu0 0
        %4135 = vmatpush1.bf16.msra.mxu0 0
        %4136 = vmatprep.subr.bf16.mxu0 0
        %4137 = vmatpush1.bf16.msra.mxu0 0
        %4138 = vmatprep.subr.bf16.mxu0 0
        %4139 = vmatpush1.bf16.msra.mxu0 0
        %4140 = vmatprep.subr.bf16.mxu0 0
        %4141 = vmatpush1.bf16.msra.mxu0 %v4128
        %4142 = vmatprep.subr.bf16.mxu0 0
        %4143 = vmatpush1.bf16.msra.mxu0 %v4119
        %4144 = vmatprep.subr.bf16.mxu0 0
        %4145 = vmatpush1.bf16.msra.mxu0 %v4118
        %4146 = vmatprep.subr.bf16.mxu0 0
        %4147 = vmatpush2.bf16.msra.mxu0 0
        %4148 = vmatprep.subr.bf16.mxu0 0
        %4149 = vmatpush2.bf16.msra.mxu0 0
        %4150 = vmatprep.subr.bf16.mxu0 0
        %4151 = vmatpush2.bf16.msra.mxu0 0
        %4152 = vmatprep.subr.bf16.mxu0 0
        %4153 = vmatpush2.bf16.msra.mxu0 0
        %4154 = vmatprep.subr.bf16.mxu0 0
        %4155 = vmatpush2.bf16.msra.mxu0 0
        %4156 = vmatprep.subr.bf16.mxu0 0
        %4157 = vmatpush2.bf16.msra.mxu0 0
        %4158 = vmatprep.subr.bf16.mxu0 0
        %4159 = vmatpush2.bf16.msra.mxu0 0
        %4160 = vmatprep.subr.bf16.mxu0 0
        %4161 = vmatpush2.bf16.msra.mxu0 0
        %4162 = vmatprep.mubr.bf16.mxu0 0
        %4163 = vmatmul.mubr.bf16.gmra.mxu0 %v4125
        %v4164 = vpop.f32.mrf.mxu0
        %v4165 = vadd.f32 0.0, %v4164
        %v4166 = vpop.f32.mrf.mxu0
        %v4167 = vpop.f32.mrf.mxu0
        %v4168 = vpop.f32.mrf.mxu0
        %4169 = vdwg.mxu0
        %v4171 = vsel %vm4123, %v4086, 0
        %v4174 = vsel %vm547, %v4085, 0
        %4176 = vmatprep.subr.bf16.mxu0 0
        %4177 = vmatpush1.bf16.msra.mxu0 0
        %4178 = vmatprep.subr.bf16.mxu0 0
        %4179 = vmatpush1.bf16.msra.mxu0 0
        %4180 = vmatprep.subr.bf16.mxu0 0
        %4181 = vmatpush1.bf16.msra.mxu0 0
        %4182 = vmatprep.subr.bf16.mxu0 0
        %4183 = vmatpush1.bf16.msra.mxu0 0
        %4184 = vmatprep.subr.bf16.mxu0 0
        %4185 = vmatpush1.bf16.msra.mxu0 0
        %4186 = vmatprep.subr.bf16.mxu0 0
        %4187 = vmatpush1.bf16.msra.mxu0 %v4174
        %4188 = vmatprep.subr.bf16.mxu0 0
        %4189 = vmatpush1.bf16.msra.mxu0 %v4084
        %4190 = vmatprep.subr.bf16.mxu0 0
        %4191 = vmatpush1.bf16.msra.mxu0 %v4083
        %4192 = vmatprep.subr.bf16.mxu0 0
        %4193 = vmatpush2.bf16.msra.mxu0 0
        %4194 = vmatprep.subr.bf16.mxu0 0
        %4195 = vmatpush2.bf16.msra.mxu0 0
        %4196 = vmatprep.subr.bf16.mxu0 0
        %4197 = vmatpush2.bf16.msra.mxu0 0
        %4198 = vmatprep.subr.bf16.mxu0 0
        %4199 = vmatpush2.bf16.msra.mxu0 0
        %4200 = vmatprep.subr.bf16.mxu0 0
        %4201 = vmatpush2.bf16.msra.mxu0 0
        %4202 = vmatprep.subr.bf16.mxu0 0
        %4203 = vmatpush2.bf16.msra.mxu0 0
        %4204 = vmatprep.subr.bf16.mxu0 0
        %4205 = vmatpush2.bf16.msra.mxu0 0
        %4206 = vmatprep.subr.bf16.mxu0 0
        %4207 = vmatpush2.bf16.msra.mxu0 0
        %4208 = vmatprep.mubr.bf16.mxu0 0
        %4209 = vmatmul.mubr.bf16.gmra.mxu0 %v4171
        %v4210 = vpop.f32.mrf.mxu0
        %v4211 = vadd.f32 %v4165, %v4210
        %v4212 = vpop.f32.mrf.mxu0
        %v4213 = vpop.f32.mrf.mxu0
        %v4214 = vpop.f32.mrf.mxu0
        %4215 = vdwg.mxu0
        %4216 = vrot.lane.b32.xlu0 %v4043, 71
        %v4217 = vpop.permute.xlu0 %4216
        %4218 = vrot.lane.b32.xlu0 %v4044, 71
        %v4219 = vpop.permute.xlu0 %4218
        %4220 = vrot.lane.b32.xlu0 %v4045, 71
        %v4221 = vpop.permute.xlu0 %4220
        %4222 = vrot.lane.b32.xlu0 %v4043, 7
        %v4223 = vpop.permute.xlu0 %4222
        %4224 = vrot.lane.b32.xlu0 %v4044, 7
        %v4225 = vpop.permute.xlu0 %4224
        %4226 = vrot.lane.b32.xlu0 %v4045, 7
        %v4227 = vpop.permute.xlu0 %4226
        %vm4228 = vcmask 56320
        %v4231 = vsel %vm4228, %v4217, %v4223
        %v4235 = vsel %vm4228, %v4219, %v4225
        %v4239 = vsel %vm4228, %v4221, %v4227
        %v4241 = vlaneseq
        %v4242 = vshrl.u32 %v4241, 7
        %v4243 = vsub.s32 1, %v4242
        %v4244 = vrot.slane %v4077, %v4243
        %v4245 = vmul.bf16 %v4231, %v4244
        %v4246 = vmul.bf16 %v4235, %v4244
        %v4247 = vmul.bf16 %v4239, %v4244
        %s4248 = scalar_lea.vmem %s10, 8
        %v4249 = vld [vmem:[%s4248] sm:$0xf]
        %v4251 = vsel %vm4123, %v4249, 0
        %v4254 = vsel %vm547, %v4247, 0
        %4256 = vmatprep.subr.bf16.mxu0 0
        %4257 = vmatpush1.bf16.msra.mxu0 0
        %4258 = vmatprep.subr.bf16.mxu0 0
        %4259 = vmatpush1.bf16.msra.mxu0 0
        %4260 = vmatprep.subr.bf16.mxu0 0
        %4261 = vmatpush1.bf16.msra.mxu0 0
        %4262 = vmatprep.subr.bf16.mxu0 0
        %4263 = vmatpush1.bf16.msra.mxu0 0
        %4264 = vmatprep.subr.bf16.mxu0 0
        %4265 = vmatpush1.bf16.msra.mxu0 0
        %4266 = vmatprep.subr.bf16.mxu0 0
        %4267 = vmatpush1.bf16.msra.mxu0 %v4254
        %4268 = vmatprep.subr.bf16.mxu0 0
        %4269 = vmatpush1.bf16.msra.mxu0 %v4246
        %4270 = vmatprep.subr.bf16.mxu0 0
        %4271 = vmatpush1.bf16.msra.mxu0 %v4245
        %4272 = vmatprep.subr.bf16.mxu0 0
        %4273 = vmatpush2.bf16.msra.mxu0 0
        %4274 = vmatprep.subr.bf16.mxu0 0
        %4275 = vmatpush2.bf16.msra.mxu0 0
        %4276 = vmatprep.subr.bf16.mxu0 0
        %4277 = vmatpush2.bf16.msra.mxu0 0
        %4278 = vmatprep.subr.bf16.mxu0 0
        %4279 = vmatpush2.bf16.msra.mxu0 0
        %4280 = vmatprep.subr.bf16.mxu0 0
        %4281 = vmatpush2.bf16.msra.mxu0 0
        %4282 = vmatprep.subr.bf16.mxu0 0
        %4283 = vmatpush2.bf16.msra.mxu0 0
        %4284 = vmatprep.subr.bf16.mxu0 0
        %4285 = vmatpush2.bf16.msra.mxu0 0
        %4286 = vmatprep.subr.bf16.mxu0 0
        %4287 = vmatpush2.bf16.msra.mxu0 0
        %4288 = vmatprep.mubr.bf16.mxu0 0
        %4289 = vmatmul.mubr.bf16.gmra.mxu0 %v4251
        %v4290 = vpop.f32.mrf.mxu0
        %v4291 = vadd.f32 0.0, %v4290
        %v4292 = vpop.f32.mrf.mxu0
        %v4293 = vpop.f32.mrf.mxu0
        %v4294 = vpop.f32.mrf.mxu0
        %4295 = vdwg.mxu0
        %v4296 = vadd.f32 %v4211, %v4291
        %4297 = vrot.lane.b32.xlu0 %v4043, 65
        %v4298 = vpop.permute.xlu0 %4297
        %4299 = vrot.lane.b32.xlu0 %v4044, 65
        %v4300 = vpop.permute.xlu0 %4299
        %4301 = vrot.lane.b32.xlu0 %v4045, 65
        %v4302 = vpop.permute.xlu0 %4301
        %4303 = vrot.lane.b32.xlu0 %v4043, 1
        %v4304 = vpop.permute.xlu0 %4303
        %4305 = vrot.lane.b32.xlu0 %v4044, 1
        %v4306 = vpop.permute.xlu0 %4305
        %4307 = vrot.lane.b32.xlu0 %v4045, 1
        %v4308 = vpop.permute.xlu0 %4307
        %v4311 = vsel %vm1114, %v4298, %v4304
        %v4315 = vsel %vm1114, %v4300, %v4306
        %v4319 = vsel %vm1114, %v4302, %v4308
        %v4321 = vlaneseq
        %v4322 = vshrl.u32 %v4321, 7
        %v4323 = vsub.s32 1, %v4322
        %v4324 = vrot.slane %v4112, %v4323
        %v4325 = vmul.bf16 %v4311, %v4324
        %v4326 = vmul.bf16 %v4315, %v4324
        %v4327 = vmul.bf16 %v4319, %v4324
        %s4328 = scalar_lea.vmem %s10, 12
        %v4329 = vld [vmem:[%s4328] sm:$0xf]
        %v4331 = vsel %vm4123, %v4329, 0
        %v4334 = vsel %vm547, %v4327, 0
        %4336 = vmatprep.subr.bf16.mxu0 0
        %4337 = vmatpush1.bf16.msra.mxu0 0
        %4338 = vmatprep.subr.bf16.mxu0 0
        %4339 = vmatpush1.bf16.msra.mxu0 0
        %4340 = vmatprep.subr.bf16.mxu0 0
        %4341 = vmatpush1.bf16.msra.mxu0 0
        %4342 = vmatprep.subr.bf16.mxu0 0
        %4343 = vmatpush1.bf16.msra.mxu0 0
        %4344 = vmatprep.subr.bf16.mxu0 0
        %4345 = vmatpush1.bf16.msra.mxu0 0
        %4346 = vmatprep.subr.bf16.mxu0 0
        %4347 = vmatpush1.bf16.msra.mxu0 %v4334
        %4348 = vmatprep.subr.bf16.mxu0 0
        %4349 = vmatpush1.bf16.msra.mxu0 %v4326
        %4350 = vmatprep.subr.bf16.mxu0 0
        %4351 = vmatpush1.bf16.msra.mxu0 %v4325
        %4352 = vmatprep.subr.bf16.mxu0 0
        %4353 = vmatpush2.bf16.msra.mxu0 0
        %4354 = vmatprep.subr.bf16.mxu0 0
        %4355 = vmatpush2.bf16.msra.mxu0 0
        %4356 = vmatprep.subr.bf16.mxu0 0
        %4357 = vmatpush2.bf16.msra.mxu0 0
        %4358 = vmatprep.subr.bf16.mxu0 0
        %4359 = vmatpush2.bf16.msra.mxu0 0
        %4360 = vmatprep.subr.bf16.mxu0 0
        %4361 = vmatpush2.bf16.msra.mxu0 0
        %4362 = vmatprep.subr.bf16.mxu0 0
        %4363 = vmatpush2.bf16.msra.mxu0 0
        %4364 = vmatprep.subr.bf16.mxu0 0
        %4365 = vmatpush2.bf16.msra.mxu0 0
        %4366 = vmatprep.subr.bf16.mxu0 0
        %4367 = vmatpush2.bf16.msra.mxu0 0
        %4368 = vmatprep.mubr.bf16.mxu0 0
        %4369 = vmatmul.mubr.bf16.gmra.mxu0 %v4331
        %v4370 = vpop.f32.mrf.mxu0
        %v4371 = vadd.f32 0.0, %v4370
        %v4372 = vpop.f32.mrf.mxu0
        %v4373 = vpop.f32.mrf.mxu0
        %v4374 = vpop.f32.mrf.mxu0
        %4375 = vdwg.mxu0
        %v4376 = vadd.f32 %v4296, %v4371
        %v4377 = vlaneseq
        %v4378 = vshrl.u32 %v4377, 7
        %v4379 = vsub.s32 2, %v4378
        %v4380 = vrot.slane %v4077, %v4379
        %v4381 = vmul.bf16 %v4043, %v4380
        %v4382 = vmul.bf16 %v4044, %v4380
        %v4383 = vmul.bf16 %v4045, %v4380
        %s4384 = scalar_lea.vmem %s10, 16
        %v4385 = vld [vmem:[%s4384] sm:$0xf]
        %v4387 = vsel %vm4123, %v4385, 0
        %v4390 = vsel %vm547, %v4383, 0
        %4392 = vmatprep.subr.bf16.mxu0 0
        %4393 = vmatpush1.bf16.msra.mxu0 0
        %4394 = vmatprep.subr.bf16.mxu0 0
        %4395 = vmatpush1.bf16.msra.mxu0 0
        %4396 = vmatprep.subr.bf16.mxu0 0
        %4397 = vmatpush1.bf16.msra.mxu0 0
        %4398 = vmatprep.subr.bf16.mxu0 0
        %4399 = vmatpush1.bf16.msra.mxu0 0
        %4400 = vmatprep.subr.bf16.mxu0 0
        %4401 = vmatpush1.bf16.msra.mxu0 0
        %4402 = vmatprep.subr.bf16.mxu0 0
        %4403 = vmatpush1.bf16.msra.mxu0 %v4390
        %4404 = vmatprep.subr.bf16.mxu0 0
        %4405 = vmatpush1.bf16.msra.mxu0 %v4382
        %4406 = vmatprep.subr.bf16.mxu0 0
        %4407 = vmatpush1.bf16.msra.mxu0 %v4381
        %4408 = vmatprep.subr.bf16.mxu0 0
        %4409 = vmatpush2.bf16.msra.mxu0 0
        %4410 = vmatprep.subr.bf16.mxu0 0
        %4411 = vmatpush2.bf16.msra.mxu0 0
        %4412 = vmatprep.subr.bf16.mxu0 0
        %4413 = vmatpush2.bf16.msra.mxu0 0
        %4414 = vmatprep.subr.bf16.mxu0 0
        %4415 = vmatpush2.bf16.msra.mxu0 0
        %4416 = vmatprep.subr.bf16.mxu0 0
        %4417 = vmatpush2.bf16.msra.mxu0 0
        %4418 = vmatprep.subr.bf16.mxu0 0
        %4419 = vmatpush2.bf16.msra.mxu0 0
        %4420 = vmatprep.subr.bf16.mxu0 0
        %4421 = vmatpush2.bf16.msra.mxu0 0
        %4422 = vmatprep.subr.bf16.mxu0 0
        %4423 = vmatpush2.bf16.msra.mxu0 0
        %4424 = vmatprep.mubr.bf16.mxu0 0
        %4425 = vmatmul.mubr.bf16.gmra.mxu0 %v4387
        %v4426 = vpop.f32.mrf.mxu0
        %v4427 = vadd.f32 0.0, %v4426
        %v4428 = vpop.f32.mrf.mxu0
        %v4429 = vpop.f32.mrf.mxu0
        %v4430 = vpop.f32.mrf.mxu0
        %4431 = vdwg.mxu0
        %v4432 = vadd.f32 %v4376, %v4427
        %4433 = vrot.lane.b32.xlu0 %v4043, 127
        %v4434 = vpop.permute.xlu0 %4433
        %4435 = vrot.lane.b32.xlu0 %v4044, 127
        %v4436 = vpop.permute.xlu0 %4435
        %4437 = vrot.lane.b32.xlu0 %v4045, 127
        %v4438 = vpop.permute.xlu0 %4437
        %4439 = vrot.lane.b32.xlu0 %v4043, 63
        %v4440 = vpop.permute.xlu0 %4439
        %4441 = vrot.lane.b32.xlu0 %v4044, 63
        %v4442 = vpop.permute.xlu0 %4441
        %4443 = vrot.lane.b32.xlu0 %v4045, 63
        %v4444 = vpop.permute.xlu0 %4443
        %vm4445 = vcmask 515072
        %v4448 = vsel %vm4445, %v4434, %v4440
        %v4452 = vsel %vm4445, %v4436, %v4442
        %v4456 = vsel %vm4445, %v4438, %v4444
        %v4458 = vlaneseq
        %v4459 = vshrl.u32 %v4458, 7
        %v4460 = vsub.s32 2, %v4459
        %v4461 = vrot.slane %v4112, %v4460
        %v4462 = vmul.bf16 %v4448, %v4461
        %v4463 = vmul.bf16 %v4452, %v4461
        %v4464 = vmul.bf16 %v4456, %v4461
        %s4465 = scalar_lea.vmem %s10, 20
        %v4466 = vld [vmem:[%s4465] sm:$0xf]
        %v4468 = vsel %vm4123, %v4466, 0
        %v4471 = vsel %vm547, %v4464, 0
        %4473 = vmatprep.subr.bf16.mxu0 0
        %4474 = vmatpush1.bf16.msra.mxu0 0
        %4475 = vmatprep.subr.bf16.mxu0 0
        %4476 = vmatpush1.bf16.msra.mxu0 0
        %4477 = vmatprep.subr.bf16.mxu0 0
        %4478 = vmatpush1.bf16.msra.mxu0 0
        %4479 = vmatprep.subr.bf16.mxu0 0
        %4480 = vmatpush1.bf16.msra.mxu0 0
        %4481 = vmatprep.subr.bf16.mxu0 0
        %4482 = vmatpush1.bf16.msra.mxu0 0
        %4483 = vmatprep.subr.bf16.mxu0 0
        %4484 = vmatpush1.bf16.msra.mxu0 %v4471
        %4485 = vmatprep.subr.bf16.mxu0 0
        %4486 = vmatpush1.bf16.msra.mxu0 %v4463
        %4487 = vmatprep.subr.bf16.mxu0 0
        %4488 = vmatpush1.bf16.msra.mxu0 %v4462
        %4489 = vmatprep.subr.bf16.mxu0 0
        %4490 = vmatpush2.bf16.msra.mxu0 0
        %4491 = vmatprep.subr.bf16.mxu0 0
        %4492 = vmatpush2.bf16.msra.mxu0 0
        %4493 = vmatprep.subr.bf16.mxu0 0
        %4494 = vmatpush2.bf16.msra.mxu0 0
        %4495 = vmatprep.subr.bf16.mxu0 0
        %4496 = vmatpush2.bf16.msra.mxu0 0
        %4497 = vmatprep.subr.bf16.mxu0 0
        %4498 = vmatpush2.bf16.msra.mxu0 0
        %4499 = vmatprep.subr.bf16.mxu0 0
        %4500 = vmatpush2.bf16.msra.mxu0 0
        %4501 = vmatprep.subr.bf16.mxu0 0
        %4502 = vmatpush2.bf16.msra.mxu0 0
        %4503 = vmatprep.subr.bf16.mxu0 0
        %4504 = vmatpush2.bf16.msra.mxu0 0
        %4505 = vmatprep.mubr.bf16.mxu0 0
        %4506 = vmatmul.mubr.bf16.gmra.mxu0 %v4468
        %v4507 = vpop.f32.mrf.mxu0
        %v4508 = vadd.f32 0.0, %v4507
        %v4509 = vpop.f32.mrf.mxu0
        %v4510 = vpop.f32.mrf.mxu0
        %v4511 = vpop.f32.mrf.mxu0
        %4512 = vdwg.mxu0
        %v4513 = vadd.f32 %v4432, %v4508
        %4514 = vrot.lane.b32.xlu0 %v4043, 121
        %v4515 = vpop.permute.xlu0 %4514
        %4516 = vrot.lane.b32.xlu0 %v4044, 121
        %v4517 = vpop.permute.xlu0 %4516
        %4518 = vrot.lane.b32.xlu0 %v4045, 121
        %v4519 = vpop.permute.xlu0 %4518
        %4520 = vrot.lane.b32.xlu0 %v4043, 57
        %v4521 = vpop.permute.xlu0 %4520
        %4522 = vrot.lane.b32.xlu0 %v4044, 57
        %v4523 = vpop.permute.xlu0 %4522
        %4524 = vrot.lane.b32.xlu0 %v4045, 57
        %v4525 = vpop.permute.xlu0 %4524
        %vm4526 = vcmask 465920
        %v4529 = vsel %vm4526, %v4515, %v4521
        %v4533 = vsel %vm4526, %v4517, %v4523
        %v4537 = vsel %vm4526, %v4519, %v4525
        %v4539 = vlaneseq
        %v4540 = vshrl.u32 %v4539, 7
        %v4541 = vsub.s32 3, %v4540
        %v4542 = vrot.slane %v4077, %v4541
        %v4543 = vmul.bf16 %v4529, %v4542
        %v4544 = vmul.bf16 %v4533, %v4542
        %v4545 = vmul.bf16 %v4537, %v4542
        %s4546 = scalar_lea.vmem %s10, 24
        %v4547 = vld [vmem:[%s4546] sm:$0xf]
        %v4549 = vsel %vm4123, %v4547, 0
        %v4552 = vsel %vm547, %v4545, 0
        %4554 = vmatprep.subr.bf16.mxu0 0
        %4555 = vmatpush1.bf16.msra.mxu0 0
        %4556 = vmatprep.subr.bf16.mxu0 0
        %4557 = vmatpush1.bf16.msra.mxu0 0
        %4558 = vmatprep.subr.bf16.mxu0 0
        %4559 = vmatpush1.bf16.msra.mxu0 0
        %4560 = vmatprep.subr.bf16.mxu0 0
        %4561 = vmatpush1.bf16.msra.mxu0 0
        %4562 = vmatprep.subr.bf16.mxu0 0
        %4563 = vmatpush1.bf16.msra.mxu0 0
        %4564 = vmatprep.subr.bf16.mxu0 0
        %4565 = vmatpush1.bf16.msra.mxu0 %v4552
        %4566 = vmatprep.subr.bf16.mxu0 0
        %4567 = vmatpush1.bf16.msra.mxu0 %v4544
        %4568 = vmatprep.subr.bf16.mxu0 0
        %4569 = vmatpush1.bf16.msra.mxu0 %v4543
        %4570 = vmatprep.subr.bf16.mxu0 0
        %4571 = vmatpush2.bf16.msra.mxu0 0
        %4572 = vmatprep.subr.bf16.mxu0 0
        %4573 = vmatpush2.bf16.msra.mxu0 0
        %4574 = vmatprep.subr.bf16.mxu0 0
        %4575 = vmatpush2.bf16.msra.mxu0 0
        %4576 = vmatprep.subr.bf16.mxu0 0
        %4577 = vmatpush2.bf16.msra.mxu0 0
        %4578 = vmatprep.subr.bf16.mxu0 0
        %4579 = vmatpush2.bf16.msra.mxu0 0
        %4580 = vmatprep.subr.bf16.mxu0 0
        %4581 = vmatpush2.bf16.msra.mxu0 0
        %4582 = vmatprep.subr.bf16.mxu0 0
        %4583 = vmatpush2.bf16.msra.mxu0 0
        %4584 = vmatprep.subr.bf16.mxu0 0
        %4585 = vmatpush2.bf16.msra.mxu0 0
        %4586 = vmatprep.mubr.bf16.mxu0 0
        %4587 = vmatmul.mubr.bf16.gmra.mxu0 %v4549
        %v4588 = vpop.f32.mrf.mxu0
        %v4589 = vadd.f32 0.0, %v4588
        %v4590 = vpop.f32.mrf.mxu0
        %v4591 = vpop.f32.mrf.mxu0
        %v4592 = vpop.f32.mrf.mxu0
        %4593 = vdwg.mxu0
        %v4594 = vadd.f32 %v4513, %v4589
        %4595 = vrot.lane.b32.xlu0 %v4043, 120
        %v4596 = vpop.permute.xlu0 %4595
        %4597 = vrot.lane.b32.xlu0 %v4044, 120
        %v4598 = vpop.permute.xlu0 %4597
        %4599 = vrot.lane.b32.xlu0 %v4045, 120
        %v4600 = vpop.permute.xlu0 %4599
        %4601 = vrot.lane.b32.xlu0 %v4043, 56
        %v4602 = vpop.permute.xlu0 %4601
        %4603 = vrot.lane.b32.xlu0 %v4044, 56
        %v4604 = vpop.permute.xlu0 %4603
        %4605 = vrot.lane.b32.xlu0 %v4045, 56
        %v4606 = vpop.permute.xlu0 %4605
        %vm4607 = vcmask 457728
        %v4610 = vsel %vm4607, %v4596, %v4602
        %v4614 = vsel %vm4607, %v4598, %v4604
        %v4618 = vsel %vm4607, %v4600, %v4606
        %v4620 = vlaneseq
        %v4621 = vshrl.u32 %v4620, 7
        %v4622 = vsub.s32 3, %v4621
        %v4623 = vrot.slane %v4112, %v4622
        %v4624 = vmul.bf16 %v4610, %v4623
        %v4625 = vmul.bf16 %v4614, %v4623
        %v4626 = vmul.bf16 %v4618, %v4623
        %s4627 = scalar_lea.vmem %s10, 28
        %v4628 = vld [vmem:[%s4627] sm:$0xf]
        %v4630 = vsel %vm4123, %v4628, 0
        %v4633 = vsel %vm547, %v4626, 0
        %4635 = vmatprep.subr.bf16.mxu0 0
        %4636 = vmatpush1.bf16.msra.mxu0 0
        %4637 = vmatprep.subr.bf16.mxu0 0
        %4638 = vmatpush1.bf16.msra.mxu0 0
        %4639 = vmatprep.subr.bf16.mxu0 0
        %4640 = vmatpush1.bf16.msra.mxu0 0
        %4641 = vmatprep.subr.bf16.mxu0 0
        %4642 = vmatpush1.bf16.msra.mxu0 0
        %4643 = vmatprep.subr.bf16.mxu0 0
        %4644 = vmatpush1.bf16.msra.mxu0 0
        %4645 = vmatprep.subr.bf16.mxu0 0
        %4646 = vmatpush1.bf16.msra.mxu0 %v4633
        %4647 = vmatprep.subr.bf16.mxu0 0
        %4648 = vmatpush1.bf16.msra.mxu0 %v4625
        %4649 = vmatprep.subr.bf16.mxu0 0
        %4650 = vmatpush1.bf16.msra.mxu0 %v4624
        %4651 = vmatprep.subr.bf16.mxu0 0
        %4652 = vmatpush2.bf16.msra.mxu0 0
        %4653 = vmatprep.subr.bf16.mxu0 0
        %4654 = vmatpush2.bf16.msra.mxu0 0
        %4655 = vmatprep.subr.bf16.mxu0 0
        %4656 = vmatpush2.bf16.msra.mxu0 0
        %4657 = vmatprep.subr.bf16.mxu0 0
        %4658 = vmatpush2.bf16.msra.mxu0 0
        %4659 = vmatprep.subr.bf16.mxu0 0
        %4660 = vmatpush2.bf16.msra.mxu0 0
        %4661 = vmatprep.subr.bf16.mxu0 0
        %4662 = vmatpush2.bf16.msra.mxu0 0
        %4663 = vmatprep.subr.bf16.mxu0 0
        %4664 = vmatpush2.bf16.msra.mxu0 0
        %4665 = vmatprep.subr.bf16.mxu0 0
        %4666 = vmatpush2.bf16.msra.mxu0 0
        %4667 = vmatprep.mubr.bf16.mxu0 0
        %4668 = vmatmul.mubr.bf16.gmra.mxu0 %v4630
        %v4669 = vpop.f32.mrf.mxu0
        %v4670 = vadd.f32 0.0, %v4669
        %v4671 = vpop.f32.mrf.mxu0
        %v4672 = vpop.f32.mrf.mxu0
        %v4673 = vpop.f32.mrf.mxu0
        %4674 = vdwg.mxu0
        %v4675 = vadd.f32 %v4594, %v4670
        %4676 = vrot.lane.b32.xlu0 %v4043, 119
        %v4677 = vpop.permute.xlu0 %4676
        %4678 = vrot.lane.b32.xlu0 %v4044, 119
        %v4679 = vpop.permute.xlu0 %4678
        %4680 = vrot.lane.b32.xlu0 %v4045, 119
        %v4681 = vpop.permute.xlu0 %4680
        %4682 = vrot.lane.b32.xlu0 %v4043, 55
        %v4683 = vpop.permute.xlu0 %4682
        %4684 = vrot.lane.b32.xlu0 %v4044, 55
        %v4685 = vpop.permute.xlu0 %4684
        %4686 = vrot.lane.b32.xlu0 %v4045, 55
        %v4687 = vpop.permute.xlu0 %4686
        %vm4688 = vcmask 449536
        %v4691 = vsel %vm4688, %v4677, %v4683
        %v4695 = vsel %vm4688, %v4679, %v4685
        %v4699 = vsel %vm4688, %v4681, %v4687
        %v4702 = vpack.i.b16 %v4047, %v4047
        %v4704 = vlaneseq
        %v4705 = vshrl.u32 %v4704, 7
        %v4706 = vsub.s32 0, %v4705
        %v4707 = vrot.slane %v4702, %v4706
        %v4708 = vmul.bf16 %v4691, %v4707
        %v4709 = vmul.bf16 %v4695, %v4707
        %v4710 = vmul.bf16 %v4699, %v4707
        %s4711 = scalar_lea.vmem %s10, 32
        %v4712 = vld [vmem:[%s4711] sm:$0xf]
        %v4714 = vsel %vm4123, %v4712, 0
        %v4717 = vsel %vm547, %v4710, 0
        %4719 = vmatprep.subr.bf16.mxu0 0
        %4720 = vmatpush1.bf16.msra.mxu0 0
        %4721 = vmatprep.subr.bf16.mxu0 0
        %4722 = vmatpush1.bf16.msra.mxu0 0
        %4723 = vmatprep.subr.bf16.mxu0 0
        %4724 = vmatpush1.bf16.msra.mxu0 0
        %4725 = vmatprep.subr.bf16.mxu0 0
        %4726 = vmatpush1.bf16.msra.mxu0 0
        %4727 = vmatprep.subr.bf16.mxu0 0
        %4728 = vmatpush1.bf16.msra.mxu0 0
        %4729 = vmatprep.subr.bf16.mxu0 0
        %4730 = vmatpush1.bf16.msra.mxu0 %v4717
        %4731 = vmatprep.subr.bf16.mxu0 0
        %4732 = vmatpush1.bf16.msra.mxu0 %v4709
        %4733 = vmatprep.subr.bf16.mxu0 0
        %4734 = vmatpush1.bf16.msra.mxu0 %v4708
        %4735 = vmatprep.subr.bf16.mxu0 0
        %4736 = vmatpush2.bf16.msra.mxu0 0
        %4737 = vmatprep.subr.bf16.mxu0 0
        %4738 = vmatpush2.bf16.msra.mxu0 0
        %4739 = vmatprep.subr.bf16.mxu0 0
        %4740 = vmatpush2.bf16.msra.mxu0 0
        %4741 = vmatprep.subr.bf16.mxu0 0
        %4742 = vmatpush2.bf16.msra.mxu0 0
        %4743 = vmatprep.subr.bf16.mxu0 0
        %4744 = vmatpush2.bf16.msra.mxu0 0
        %4745 = vmatprep.subr.bf16.mxu0 0
        %4746 = vmatpush2.bf16.msra.mxu0 0
        %4747 = vmatprep.subr.bf16.mxu0 0
        %4748 = vmatpush2.bf16.msra.mxu0 0
        %4749 = vmatprep.subr.bf16.mxu0 0
        %4750 = vmatpush2.bf16.msra.mxu0 0
        %4751 = vmatprep.mubr.bf16.mxu0 0
        %4752 = vmatmul.mubr.bf16.gmra.mxu0 %v4714
        %v4753 = vpop.f32.mrf.mxu0
        %v4754 = vadd.f32 0.0, %v4753
        %v4755 = vpop.f32.mrf.mxu0
        %v4756 = vpop.f32.mrf.mxu0
        %v4757 = vpop.f32.mrf.mxu0
        %4758 = vdwg.mxu0
        %v4759 = vadd.f32 %v4675, %v4754
        %v4760 = vld [vmem:[%s11] sm:$0xff]
        %4762 = vset.pattern.permute.xlu0 0
        %4763 = vperm.xlu0 %4762, %v4760
        %v4764 = vpop.permute.xlu0 %4763
        %v4766 = vadd.f32 %v4759, %v4764
        %v4767 = vmul.f32 %v4766, 0.01
        %v4768 = vmax.f32 %v4766, %v4767
        %v4769 = vpack.c.bf16 %v4768, %v4768
        %v4770 = vld [vmem:[%s12] sm:$0xff]
        %v4771 = vld [vmem:[%s12 + $0x8] sm:$0xff]
        %v4772 = vld [vmem:[%s12 + $0x10] sm:$0xff]
        %v4773 = vld [vmem:[%s12 + $0x18] sm:$0xff]
        %v4774 = vld [vmem:[%s12 + $0x20] sm:$0xff]
        %v4775 = vld [vmem:[%s12 + $0x28] sm:$0xff]
        %v4776 = vld [vmem:[%s12 + $0x30] sm:$0xff]
        %v4777 = vld [vmem:[%s12 + $0x38] sm:$0xff]
        %v4778 = vld [vmem:[%s12 + $0x40] sm:$0xff]
        %v4779 = vld [vmem:[%s12 + $0x48] sm:$0xff]
        %v4780 = vld [vmem:[%s12 + $0x50] sm:$0xff]
        %v4781 = vld [vmem:[%s12 + $0x58] sm:$0xff]
        %v4782 = vld [vmem:[%s12 + $0x60] sm:$0xff]
        %v4783 = vld [vmem:[%s12 + $0x68] sm:$0xff]
        %v4784 = vld [vmem:[%s12 + $0x70] sm:$0xff]
        %v4785 = vld [vmem:[%s12 + $0x78] sm:$0xff]
        %v4787 = vshrl.u32 %v4769, 16
        %v4797 = vunpack.c.l.b16 %v4778
        %v4798 = vunpack.c.h.b16 %v4778
        %v4799 = vunpack.c.l.b16 %v4779
        %v4800 = vunpack.c.h.b16 %v4779
        %v4801 = vunpack.c.l.b16 %v4780
        %v4802 = vunpack.c.h.b16 %v4780
        %v4803 = vunpack.c.l.b16 %v4781
        %v4804 = vunpack.c.h.b16 %v4781
        %v4805 = vunpack.c.l.b16 %v4782
        %v4806 = vunpack.c.h.b16 %v4782
        %v4807 = vunpack.c.l.b16 %v4783
        %v4808 = vunpack.c.h.b16 %v4783
        %v4809 = vunpack.c.l.b16 %v4784
        %v4810 = vunpack.c.h.b16 %v4784
        %v4811 = vunpack.c.l.b16 %v4785
        %v4812 = vunpack.c.h.b16 %v4785
        %v4813 = vpack.c.b16 %v4799, %v4797
        %v4814 = vpack.c.b16 %v4800, %v4798
        %v4815 = vpack.c.b16 %v4803, %v4801
        %v4816 = vpack.c.b16 %v4804, %v4802
        %v4817 = vpack.c.b16 %v4807, %v4805
        %v4818 = vpack.c.b16 %v4808, %v4806
        %v4819 = vpack.c.b16 %v4811, %v4809
        %v4820 = vpack.c.b16 %v4812, %v4810
        %vm4829 = vcmask 523264
        %v4831 = vsel %vm4829, %v4787, 0
        %4833 = vmatprep.subr.bf16.mxu0 0
        %4834 = vmatpush1.bf16.msra.mxu0 0
        %4835 = vmatprep.subr.bf16.mxu0 0
        %4836 = vmatpush1.bf16.msra.mxu0 0
        %4837 = vmatprep.subr.bf16.mxu0 0
        %4838 = vmatpush1.bf16.msra.mxu0 0
        %4839 = vmatprep.subr.bf16.mxu0 0
        %4840 = vmatpush1.bf16.msra.mxu0 0
        %4841 = vmatprep.subr.bf16.mxu0 %v4820
        %4842 = vmatpush1.bf16.msra.mxu0 %v4819
        %4843 = vmatprep.subr.bf16.mxu0 %v4818
        %4844 = vmatpush1.bf16.msra.mxu0 %v4817
        %4845 = vmatprep.subr.bf16.mxu0 %v4816
        %4846 = vmatpush1.bf16.msra.mxu0 %v4815
        %4847 = vmatprep.subr.bf16.mxu0 %v4814
        %4848 = vmatpush1.bf16.msra.mxu0 %v4813
        %4849 = vmatprep.subr.bf16.mxu0 0
        %4850 = vmatpush2.bf16.msra.mxu0 0
        %4851 = vmatprep.subr.bf16.mxu0 0
        %4852 = vmatpush2.bf16.msra.mxu0 0
        %4853 = vmatprep.subr.bf16.mxu0 0
        %4854 = vmatpush2.bf16.msra.mxu0 0
        %4855 = vmatprep.subr.bf16.mxu0 0
        %4856 = vmatpush2.bf16.msra.mxu0 0
        %4857 = vmatprep.subr.bf16.mxu0 0
        %4858 = vmatpush2.bf16.msra.mxu0 0
        %4859 = vmatprep.subr.bf16.mxu0 0
        %4860 = vmatpush2.bf16.msra.mxu0 0
        %4861 = vmatprep.subr.bf16.mxu0 0
        %4862 = vmatpush2.bf16.msra.mxu0 0
        %4863 = vmatprep.subr.bf16.mxu0 0
        %4864 = vmatpush2.bf16.msra.mxu0 0
        %4865 = vmatprep.mubr.bf16.mxu0 0
        %4866 = vmatmul.mubr.bf16.gmra.mxu0 %v4831
        %v4867 = vpop.f32.mrf.mxu0
        %v4868 = vadd.f32 0.0, %v4867
        %v4869 = vpop.f32.mrf.mxu0
        %v4870 = vadd.f32 0.0, %v4869
        %v4871 = vpop.f32.mrf.mxu0
        %v4872 = vpop.f32.mrf.mxu0
        %4873 = vdwg.mxu0
        %v4882 = vunpack.c.l.b16 %v4770
        %v4883 = vunpack.c.h.b16 %v4770
        %v4884 = vunpack.c.l.b16 %v4771
        %v4885 = vunpack.c.h.b16 %v4771
        %v4886 = vunpack.c.l.b16 %v4772
        %v4887 = vunpack.c.h.b16 %v4772
        %v4888 = vunpack.c.l.b16 %v4773
        %v4889 = vunpack.c.h.b16 %v4773
        %v4890 = vunpack.c.l.b16 %v4774
        %v4891 = vunpack.c.h.b16 %v4774
        %v4892 = vunpack.c.l.b16 %v4775
        %v4893 = vunpack.c.h.b16 %v4775
        %v4894 = vunpack.c.l.b16 %v4776
        %v4895 = vunpack.c.h.b16 %v4776
        %v4896 = vunpack.c.l.b16 %v4777
        %v4897 = vunpack.c.h.b16 %v4777
        %v4898 = vpack.c.b16 %v4884, %v4882
        %v4899 = vpack.c.b16 %v4885, %v4883
        %v4900 = vpack.c.b16 %v4888, %v4886
        %v4901 = vpack.c.b16 %v4889, %v4887
        %v4902 = vpack.c.b16 %v4892, %v4890
        %v4903 = vpack.c.b16 %v4893, %v4891
        %v4904 = vpack.c.b16 %v4896, %v4894
        %v4905 = vpack.c.b16 %v4897, %v4895
        %v4914 = vsel %vm4829, %v4769, 0
        %4916 = vmatprep.subr.bf16.mxu0 0
        %4917 = vmatpush1.bf16.msra.mxu0 0
        %4918 = vmatprep.subr.bf16.mxu0 0
        %4919 = vmatpush1.bf16.msra.mxu0 0
        %4920 = vmatprep.subr.bf16.mxu0 0
        %4921 = vmatpush1.bf16.msra.mxu0 0
        %4922 = vmatprep.subr.bf16.mxu0 0
        %4923 = vmatpush1.bf16.msra.mxu0 0
        %4924 = vmatprep.subr.bf16.mxu0 %v4905
        %4925 = vmatpush1.bf16.msra.mxu0 %v4904
        %4926 = vmatprep.subr.bf16.mxu0 %v4903
        %4927 = vmatpush1.bf16.msra.mxu0 %v4902
        %4928 = vmatprep.subr.bf16.mxu0 %v4901
        %4929 = vmatpush1.bf16.msra.mxu0 %v4900
        %4930 = vmatprep.subr.bf16.mxu0 %v4899
        %4931 = vmatpush1.bf16.msra.mxu0 %v4898
        %4932 = vmatprep.subr.bf16.mxu0 0
        %4933 = vmatpush2.bf16.msra.mxu0 0
        %4934 = vmatprep.subr.bf16.mxu0 0
        %4935 = vmatpush2.bf16.msra.mxu0 0
        %4936 = vmatprep.subr.bf16.mxu0 0
        %4937 = vmatpush2.bf16.msra.mxu0 0
        %4938 = vmatprep.subr.bf16.mxu0 0
        %4939 = vmatpush2.bf16.msra.mxu0 0
        %4940 = vmatprep.subr.bf16.mxu0 0
        %4941 = vmatpush2.bf16.msra.mxu0 0
        %4942 = vmatprep.subr.bf16.mxu0 0
        %4943 = vmatpush2.bf16.msra.mxu0 0
        %4944 = vmatprep.subr.bf16.mxu0 0
        %4945 = vmatpush2.bf16.msra.mxu0 0
        %4946 = vmatprep.subr.bf16.mxu0 0
        %4947 = vmatpush2.bf16.msra.mxu0 0
        %4948 = vmatprep.mubr.bf16.mxu0 0
        %4949 = vmatmul.mubr.bf16.gmra.mxu0 %v4914
        %v4950 = vpop.f32.mrf.mxu0
        %v4951 = vadd.f32 %v4868, %v4950
        %v4952 = vpop.f32.mrf.mxu0
        %v4953 = vadd.f32 %v4870, %v4952
        %v4954 = vpop.f32.mrf.mxu0
        %v4955 = vpop.f32.mrf.mxu0
        %4956 = vdwg.mxu0
        %v4957 = vld [vmem:[%s13] sm:$0x3]
        %v4959 = vlaneseq
        %v4960 = vshrl.u32 %v4959, 7
        %v4961 = vsub.s32 0, %v4960
        %v4962 = vrot.slane %v4957, %v4961
        %v4963 = vlaneseq
        %v4964 = vshrl.u32 %v4963, 7
        %v4965 = vsub.s32 1, %v4964
        %v4966 = vrot.slane %v4957, %v4965
        %v4969 = vadd.f32 %v4951, %v4962
        %v4970 = vadd.f32 %v4953, %v4966
        %v4971 = vmul.f32 %v4969, 0.01
        %v4972 = vmul.f32 %v4970, 0.01
        %v4973 = vmax.f32 %v4969, %v4971
        %v4974 = vmax.f32 %v4970, %v4972
        %v4975 = vpack.c.bf16 %v4973, %v4973
        %v4976 = vpack.c.bf16 %v4974, %v4974
        %v4977 = vld [vmem:[%s14] sm:$0xf]
        %v4978 = vld [vmem:[%s14 + $0x4] sm:$0xf]
        %v4979 = vld [vmem:[%s14 + $0x8] sm:$0xf]
        %v4980 = vld [vmem:[%s14 + $0xc] sm:$0xf]
        %v4981 = vld [vmem:[%s14 + $0x10] sm:$0xf]
        %v4982 = vld [vmem:[%s14 + $0x14] sm:$0xf]
        %v4983 = vld [vmem:[%s14 + $0x18] sm:$0xf]
        %v4984 = vld [vmem:[%s14 + $0x1c] sm:$0xf]
        %v4985 = vld [vmem:[%s14 + $0x20] sm:$0xf]
        %v4986 = vld [vmem:[%s14 + $0x24] sm:$0xf]
        %v4987 = vld [vmem:[%s14 + $0x28] sm:$0xf]
        %v4988 = vld [vmem:[%s14 + $0x2c] sm:$0xf]
        %v4989 = vld [vmem:[%s14 + $0x30] sm:$0xf]
        %v4990 = vld [vmem:[%s14 + $0x34] sm:$0xf]
        %v4991 = vld [vmem:[%s14 + $0x38] sm:$0xf]
        %v4992 = vld [vmem:[%s14 + $0x3c] sm:$0xf]
        %v4993 = vld [vmem:[%s14 + $0x40] sm:$0xf]
        %v4994 = vld [vmem:[%s14 + $0x44] sm:$0xf]
        %v4995 = vld [vmem:[%s14 + $0x48] sm:$0x7]
        %v4996 = vld [vmem:[%s15] sm:$0x1]
        %v5016 = vunpack.c.l.b16 %v4977
        %v5017 = vunpack.c.l.b16 %v4978
        %v5018 = vunpack.c.l.b16 %v4979
        %v5019 = vunpack.c.l.b16 %v4980
        %v5020 = vunpack.c.l.b16 %v4981
        %v5021 = vunpack.c.l.b16 %v4982
        %v5022 = vunpack.c.l.b16 %v4983
        %v5023 = vunpack.c.l.b16 %v4984
        %v5024 = vunpack.c.l.b16 %v4985
        %v5025 = vunpack.c.l.b16 %v4986
        %v5026 = vunpack.c.l.b16 %v4987
        %v5027 = vunpack.c.l.b16 %v4988
        %v5028 = vunpack.c.l.b16 %v4989
        %v5029 = vunpack.c.l.b16 %v4990
        %v5030 = vunpack.c.l.b16 %v4991
        %v5031 = vunpack.c.l.b16 %v4992
        %v5032 = vunpack.c.l.b16 %v4993
        %v5033 = vunpack.c.l.b16 %v4994
        %v5034 = vunpack.c.l.b16 %v4995
        %v5035 = vpack.c.b16 %v5017, %v5016
        %v5036 = vpack.c.b16 %v5019, %v5018
        %v5037 = vpack.c.b16 %v5021, %v5020
        %v5038 = vpack.c.b16 %v5023, %v5022
        %v5039 = vpack.c.b16 %v5025, %v5024
        %v5040 = vpack.c.b16 %v5027, %v5026
        %v5041 = vpack.c.b16 %v5029, %v5028
        %v5042 = vpack.c.b16 %v5031, %v5030
        %v5043 = vpack.c.b16 %v5033, %v5032
        %v5044 = vpack.c.b16 %v5034, %v5034
        %vm5054 = vcmask 179200
        %v5056 = vsel %vm5054, %v4976, 0
        %vm5058 = vcmask 1042432
        %v5060 = vsel %vm5058, %v5044, 0
        %5062 = vmatprep.subr.bf16.mxu0 0
        %5063 = vmatpush1.bf16.msra.mxu0 %v5042
        %5064 = vmatprep.subr.bf16.mxu0 0
        %5065 = vmatpush1.bf16.msra.mxu0 %v5041
        %5066 = vmatprep.subr.bf16.mxu0 0
        %5067 = vmatpush1.bf16.msra.mxu0 %v5040
        %5068 = vmatprep.subr.bf16.mxu0 0
        %5069 = vmatpush1.bf16.msra.mxu0 %v5039
        %5070 = vmatprep.subr.bf16.mxu0 0
        %5071 = vmatpush1.bf16.msra.mxu0 %v5038
        %5072 = vmatprep.subr.bf16.mxu0 0
        %5073 = vmatpush1.bf16.msra.mxu0 %v5037
        %5074 = vmatprep.subr.bf16.mxu0 0
        %5075 = vmatpush1.bf16.msra.mxu0 %v5036
        %5076 = vmatprep.subr.bf16.mxu0 0
        %5077 = vmatpush1.bf16.msra.mxu0 %v5035
        %5078 = vmatprep.subr.bf16.mxu0 0
        %5079 = vmatpush2.bf16.msra.mxu0 0
        %5080 = vmatprep.subr.bf16.mxu0 0
        %5081 = vmatpush2.bf16.msra.mxu0 0
        %5082 = vmatprep.subr.bf16.mxu0 0
        %5083 = vmatpush2.bf16.msra.mxu0 0
        %5084 = vmatprep.subr.bf16.mxu0 0
        %5085 = vmatpush2.bf16.msra.mxu0 0
        %5086 = vmatprep.subr.bf16.mxu0 0
        %5087 = vmatpush2.bf16.msra.mxu0 0
        %5088 = vmatprep.subr.bf16.mxu0 0
        %5089 = vmatpush2.bf16.msra.mxu0 0
        %5090 = vmatprep.subr.bf16.mxu0 0
        %5091 = vmatpush2.bf16.msra.mxu0 %v5060
        %5092 = vmatprep.subr.bf16.mxu0 0
        %5093 = vmatpush2.bf16.msra.mxu0 %v5043
        %5094 = vmatprep.mubr.bf16.mxu0 %v5056
        %5095 = vmatmul.mubr.bf16.gmra.mxu0 %v4975
        %v5096 = vpop.f32.mrf.mxu0
        %v5097 = vadd.f32 %v4996, %v5096
        %v5098 = vpop.f32.mrf.mxu0
        %v5099 = vpop.f32.mrf.mxu0
        %v5100 = vpop.f32.mrf.mxu0
        %5101 = vdwg.mxu0
        %vm5102 = vcmask 57344
        %5103 = vst.msk [vmem:[%s513] sm:$0x1] %vm5102, %v5097
        %s5104 = sand.u32 %s379, 1
        %s5105 = scalar_lea.sflag [#allocation3], %s5104
        %s5106 = sand.u32 %s379, 1
        %s5107 = scalar_lea.vmem [#allocation2], %s5106
        // Predicated region
        $region85: #{forward_pallas.1} parent=83 // pred_check
          %p5108 = pneg %p389
        $region86: #{forward_pallas.1} parent=83 // pred_check_branch
          %5110 = sbr.rel (%p5108) target = $region88
        $region87: #{forward_pallas.1} parent=83 // pred_region
          %s5112 = ssub.s32 16, 16
          %5113 = vsyncadd %s5105, %s5112
          %s5114 = smul.addr %s30, 16
          %s5115 = scalar_lea.hbm %s16, %s5114
          %s5117 = sshll.u32 %s5107, 4
          %s5118 = int_to_ptr.vmem [resolvable:$true] %s5117
          %5120 = dma.vmem_to_hbm [thread:$0]  %s5118, 16, %s5115, %s5105
        $region88: #{forward_pallas.1} parent=83 // pred_fallthru
          _
      $region84: #{forward_pallas.1} parent=5 // pred_fallthru
        _
      %p5121 = scmp.le.s32.totalorder 2, %s25
      // Predicated region
      $region89: #{forward_pallas.1} parent=5 // pred_check
        %p5122 = pneg %p5121
      $region90: #{forward_pallas.1} parent=5 // pred_check_branch
        %5124 = sbr.rel (%p5122) target = $region92
      $region91: #{forward_pallas.1} parent=5 // pred_region
        %s5125 = ssub.s32 %s25, 2
        // Predicated region
        $region93: #{forward_pallas.1} parent=91 // pred_check
          %p5126 = pneg %p395
        $region94: #{forward_pallas.1} parent=91 // pred_check_branch
          %5128 = sbr.rel (%p5126) target = $region96
        $region95: #{forward_pallas.1} parent=91 // pred_region
          %s5129 = sand.u32 %s380, 1
          %s5130 = scalar_lea.sflag [#allocation3], %s5129
          %s5131 = sand.u32 %s380, 1
          %s5132 = scalar_lea.vmem [#allocation2], %s5131
          %5133 = dma.done %s5130, 16
        $region96: #{forward_pallas.1} parent=91 // pred_fallthru
          _
      $region92: #{forward_pallas.1} parent=5 // pred_fallthru
        _
    $region6: #{forward_pallas.1} parent=1 // loop_footer
      %s29 = sadd.s32 1, %s25
    $region7: #{forward_pallas.1} parent=1 // loop_footer_branch
      %24 = sbr.rel target = $region3
    $region8: #{forward_pallas.1} parent=1 // loop_exit
      _
    %5134 = vsyncpa [#allocation3], 1
    %s5135 = scalar_lea.sflag [#allocation3], 1
    %5136 = vsyncpa %s5135, 1

</llo_original>
